<compile_context>
chip_gen: v7x
topology: tpu7x:2x2x1
jax: 0.10.0
libtpu: 0.0.40
codegen_flags: <defaults>
</compile_context>

<pallas_src>
import jax
import jax.numpy as jnp
from jax.experimental import pallas as pl
from jax.experimental.pallas import tpu as pltpu


# ------------------------------ fused kernel --------------------------------

def _cnn_fused_kernel(lhs1_ref, w1_ref, b1_ref, w2_ref, b2_ref,
                      w1fc_ref, b1fc_ref, w2fc_ref, b2fc_ref, out_ref):
    f32 = jnp.float32
    bf16 = jnp.bfloat16
    B = out_ref.shape[0]                                   # images per grid step

    # ---- conv1 (1->32, 5x5 valid): single matmul.  lhs rows = u*(12B)+b*B+img
    # (u = output-row parity, b = pooled row, img = image); lanes = ki*28 + col.
    # weight lanes = col_parity*384 + pooled_col*32 + channel.
    h1 = jnp.dot(lhs1_ref[...], w1_ref[...], preferred_element_type=f32)   # (24B, 768)

    # ---- 2x2 max pool #1 (bias/ReLU commute with max): rows via the parity
    # halves along sublanes, columns via the two 384-lane halves.
    hrow = jnp.maximum(h1[:12 * B, :], h1[12 * B:, :])                     # (12B, 768)
    p1 = jnp.maximum(hrow[:, :384], hrow[:, 384:])                         # (12B, 384)
    p1 = jnp.maximum(p1 + b1_ref[...], 0.0)                                # f32 epilogue

    # ---- conv2 (32->64, 5x5 valid): 5 banded row taps.  With m = row*B + img
    # the tap-ki lhs is the contiguous, 8-aligned window p1[ki*B : (ki+8)*B].
    h2 = jnp.dot(p1[:8 * B, :].astype(bf16), w2_ref[0],
                 preferred_element_type=f32)                               # (8B, 512)
    for ki in range(1, 5):
        h2 = h2 + jnp.dot(p1[ki * B:(ki + 8) * B, :].astype(bf16), w2_ref[ki],
                          preferred_element_type=f32)

    # ---- 2x2 max pool #2 + bias + ReLU; build the (B, 1024) fc1 lhs by lane
    # concatenation over pooled rows e (lanes = e*256 + pooled_col*64 + channel).
    chunks = []
    for e in range(4):
        rmax = jnp.maximum(h2[(2 * e) * B:(2 * e + 1) * B, :],
                           h2[(2 * e + 1) * B:(2 * e + 2) * B, :])         # (B, 512)
        cmax = jnp.maximum(rmax[:, :256], rmax[:, 256:])                   # (B, 256)
        chunks.append(jnp.maximum(cmax + b2_ref[...], 0.0))
    fc1_in = jnp.concatenate(chunks, axis=1).astype(bf16)                  # (B, 1024)

    # ---- fc1 + ReLU, fc2 (zero-padded to 128 output lanes) + ReLU, dense store.
    f1 = jnp.maximum(jnp.dot(fc1_in, w1fc_ref[...], preferred_element_type=f32)
                     + b1fc_ref[...], 0.0)                                 # (B, 128)
    f2 = jnp.dot(f1.astype(bf16), w2fc_ref[...],
                 preferred_element_type=f32) + b2fc_ref[...]
    out_ref[...] = jnp.maximum(f2, 0.0)                                    # (B, 128)


# ------------------------------ wrapper --------------------------------------

def _build_conv1_lhs(x, block_b):
    """(N,28,28) f32 -> (G*24*B, 140) bf16 tap/parity-stacked conv1 lhs.

    Row layout inside each grid block: u*(12B) + b*B + img, where the conv1
    output row is 2b + u; lane layout: ki*28 + input column (matches w1cat).
    """
    n = x.shape[0]
    g = n // block_b
    u = jnp.arange(2)[:, None, None]
    b = jnp.arange(12)[None, :, None]
    ki = jnp.arange(5)[None, None, :]
    rows = 2 * b + u + ki                                   # (2, 12, 5), values in [0, 28)
    lhs = x[:, rows, :]                                     # (N, 2, 12, 5, 28)
    lhs = lhs.reshape(g, block_b, 2, 12, 5, 28)
    lhs = lhs.transpose(0, 2, 3, 1, 4, 5)                   # (G, 2, 12, B, 5, 28)
    return lhs.reshape(g * 24 * block_b, 140).astype(jnp.bfloat16)


def cnn_net1_forward(x_nchw, kparams, block_b=8):
    assert block_b % 8 == 0, "block_b must be a multiple of 8 (dense sublane store)"
    n = x_nchw.shape[0]
    g = pl.cdiv(n, block_b)
    n_pad = g * block_b
    x = x_nchw.reshape(n, 28, 28)                           # Cin = 1
    if n_pad != n:
        x = jnp.concatenate([x, jnp.zeros((n_pad - n, 28, 28), x.dtype)], axis=0)
    lhs = _build_conv1_lhs(x, block_b)

    # Advisory cost estimate (banded-matmul flops actually executed).
    flops = 2 * n_pad * (24 * 140 * 768 + 5 * 8 * 384 * 512 + 1024 * 128 + 128 * 128)
    weight_bytes = sum(int(v.size) * v.dtype.itemsize for v in kparams.values())
    bytes_accessed = int(lhs.size) * lhs.dtype.itemsize + n_pad * 128 * 4 + weight_bytes

    out = pl.pallas_call(
        _cnn_fused_kernel,
        out_shape=jax.ShapeDtypeStruct((n_pad, 128), jnp.float32),
        grid_spec=pltpu.PrefetchScalarGridSpec(
            num_scalar_prefetch=0,
            grid=(g,),
            in_specs=[
                pl.BlockSpec((24 * block_b, 140), lambda i: (i, 0)),  # conv1 lhs (per block)
                pl.BlockSpec((140, 768), lambda i: (0, 0)),           # conv1 tap-fused weights
                pl.BlockSpec((1, 384), lambda i: (0, 0)),             # conv1 bias (tiled)
                pl.BlockSpec((5, 384, 512), lambda i: (0, 0, 0)),     # conv2 banded weights
                pl.BlockSpec((1, 256), lambda i: (0, 0)),             # conv2 bias (tiled)
                pl.BlockSpec((1024, 128), lambda i: (0, 0)),          # fc1 weights (fused)
                pl.BlockSpec((1, 128), lambda i: (0, 0)),             # fc1 bias
                pl.BlockSpec((128, 128), lambda i: (0, 0)),           # fc2 weights (padded)
                pl.BlockSpec((1, 128), lambda i: (0, 0)),             # fc2 bias (padded)
            ],
            out_specs=pl.BlockSpec((block_b, 128), lambda i: (i, 0)),
        ),
        compiler_params=pltpu.CompilerParams(
            dimension_semantics=("parallel",),
            vmem_limit_bytes=32 * 1024 * 1024,
        ),
        cost_estimate=pl.CostEstimate(flops=flops, transcendentals=0,
                                      bytes_accessed=int(bytes_accessed)),
    )(lhs, kparams["w1cat"], kparams["b1t"], kparams["w2t"], kparams["b2t"],
      kparams["w1fc"], kparams["b1fc"], kparams["w2fc"], kparams["b2fc"])

    return out[:n, :10]


# --------------------- weight prep (hoisted to init) -------------------------

def prepare_params(pt):
    """PyTorch-layout params -> kernel-layout params (one-time re-layout)."""
    w1, b1 = pt["conv1_w"], pt["conv1_b"]             # (32,1,5,5), (32,)
    w2, b2 = pt["conv2_w"], pt["conv2_b"]             # (64,32,5,5), (64,)
    fc1_w, fc1_b = pt["fc1_w"], pt["fc1_b"]           # (128,1024), (128,)
    fc2_w, fc2_b = pt["fc2_w"], pt["fc2_b"]           # (10,128), (10,)

    # conv1 banded + tap-fused: rows = ki*28 + input col (140),
    # cols = col_parity*384 + pooled_col*32 + channel (768).
    w1k = jnp.transpose(w1[:, 0, :, :], (1, 2, 0))            # (ki, kj, c)
    jin = jnp.arange(28)[:, None]
    jout = jnp.arange(24)[None, :]
    d1 = jin - jout
    m1 = (d1 >= 0) & (d1 <= 4)
    w1t = jnp.where(m1[None, :, :, None], w1k[:, jnp.clip(d1, 0, 4), :], 0.0)  # (5,28,24,32)
    w1t = w1t.reshape(5, 28, 12, 2, 32)                       # jout -> (pooled_col, parity)
    w1t = jnp.transpose(w1t, (0, 1, 3, 2, 4)).reshape(5, 28, 768)
    w1cat = w1t.reshape(140, 768).astype(jnp.bfloat16)

    # conv2 banded: (384 = pooled_col*32 + ci) x (512 = col_parity*256 + f*64 + co)
    w2k = jnp.transpose(w2, (2, 3, 1, 0))                     # (ki, kj, ci, co)
    bi = jnp.arange(12)[:, None]
    ni = jnp.arange(8)[None, :]
    d2 = bi - ni
    m2 = (d2 >= 0) & (d2 <= 4)
    w2t = jnp.where(m2[None, :, :, None, None],
                    w2k[:, jnp.clip(d2, 0, 4), :, :], 0.0)    # (5,12,8,32,64) = (ki,b,n,ci,co)
    w2t = jnp.transpose(w2t, (0, 1, 3, 2, 4))                 # (ki, b, ci, n, co)
    w2t = w2t.reshape(5, 12, 32, 4, 2, 64)                    # n -> (f, parity)
    w2t = jnp.transpose(w2t, (0, 1, 2, 4, 3, 5)).reshape(5, 384, 512).astype(jnp.bfloat16)

    # fc1: rows from PyTorch NCHW flatten (c*16 + e*4 + f) -> kernel order e*256 + f*64 + c
    w1fc = jnp.transpose(fc1_w.reshape(128, 64, 4, 4), (2, 3, 1, 0))  # (e, f, c, o)
    w1fc = w1fc.reshape(1024, 128).astype(jnp.bfloat16)

    # fc2 zero-padded to 128 output lanes (lane-dense final store)
    w2fc = jnp.zeros((128, 128), jnp.float32).at[:, :10].set(fc2_w.T).astype(jnp.bfloat16)
    b2fc = jnp.zeros((1, 128), jnp.float32).at[0, :10].set(fc2_b)

    return dict(
        w1cat=w1cat, b1t=jnp.tile(b1, 12).reshape(1, 384),
        w2t=w2t, b2t=jnp.tile(b2, 4).reshape(1, 256),
        w1fc=w1fc, b1fc=fc1_b.reshape(1, 128),
        w2fc=w2fc, b2fc=b2fc,
    )


def init_pytorch_style_params(key):
    ks = jax.random.split(key, 8)

    def u(k, shape, fan_in):
        bound = 1.0 / jnp.sqrt(jnp.float32(fan_in))
        return jax.random.uniform(k, shape, jnp.float32, -bound, bound)

    return {
        "conv1_w": u(ks[0], (32, 1, 5, 5), 25),
        "conv1_b": u(ks[1], (32,), 25),
        "conv2_w": u(ks[2], (64, 32, 5, 5), 32 * 25),
        "conv2_b": u(ks[3], (64,), 32 * 25),
        "fc1_w": u(ks[4], (128, 1024), 1024),
        "fc1_b": u(ks[5], (128,), 1024),
        "fc2_w": u(ks[6], (10, 128), 128),
        "fc2_b": u(ks[7], (10,), 128),
    }


# --------------------------- pure-JAX reference ------------------------------

def reference_forward(x_nchw, pt):
    x = jnp.transpose(x_nchw, (0, 2, 3, 1))                   # NHWC

    def conv(h, w, b):
        o = jax.lax.conv_general_dilated(
            h, jnp.transpose(w, (2, 3, 1, 0)), window_strides=(1, 1),
            padding="VALID", dimension_numbers=("NHWC", "HWIO", "NHWC"))
        return o + b

    def pool(h):
        return jax.lax.reduce_window(h, -jnp.inf, jax.lax.max,
                                     (1, 2, 2, 1), (1, 2, 2, 1), "VALID")

    h = pool(jnp.maximum(conv(x, pt["conv1_w"], pt["conv1_b"]), 0.0))
    h = pool(jnp.maximum(conv(h, pt["conv2_w"], pt["conv2_b"]), 0.0))
    n = h.shape[0]
    h = jnp.transpose(h, (0, 3, 1, 2)).reshape(n, -1)         # NCHW flatten (PyTorch order)
    h = jnp.maximum(h @ pt["fc1_w"].T + pt["fc1_b"], 0.0)
    return jnp.maximum(h @ pt["fc2_w"].T + pt["fc2_b"], 0.0)


# --------------------------------- main ---------------------------------------

if __name__ == "__main__":
    key = jax.random.PRNGKey(0)
    k_params, k_x = jax.random.split(key)
    pt_params = init_pytorch_style_params(k_params)
    kparams = prepare_params(pt_params)

    fwd = jax.jit(cnn_net1_forward, static_argnames=("block_b",))

    # fc1 expects 64*4*4 features -> MNIST-like (N, 1, 28, 28) input.
    x = jax.random.normal(k_x, (2, 1, 28, 28), dtype=jnp.float32)
    out = jax.block_until_ready(fwd(x, kparams, block_b=8))
    assert out.shape == (2, 10), out.shape
    ref = reference_forward(x, pt_params)
    err = float(jnp.max(jnp.abs(out - ref)))
    # bf16 MXU operands (f32 accumulation) -> ~1e-3-level deviation expected.
    assert err < 3e-2, f"kernel/reference mismatch: max abs err = {err}"

    # Also exercise the multi-grid-step (batched) path: 12 images -> 2 blocks of 8.
    x2 = jax.random.normal(jax.random.PRNGKey(1), (12, 1, 28, 28), dtype=jnp.float32)
    out2 = jax.block_until_ready(fwd(x2, kparams, block_b=8))
    ref2 = reference_forward(x2, pt_params)
    err2 = float(jnp.max(jnp.abs(out2 - ref2)))
    assert err2 < 3e-2, f"multi-block kernel/reference mismatch: max abs err = {err2}"

    print("KERNEL_OK")
</pallas_src>

<mosaic_0001>
module attributes {stable_mosaic.version = 11 : i64} {
  func.func @_cnn_fused_kernel(%arg0: i32, %arg1: memref<192x140xbf16, #tpu.memory_space<vmem>>, %arg2: memref<140x768xbf16, #tpu.memory_space<vmem>>, %arg3: memref<1x384xf32, #tpu.memory_space<vmem>>, %arg4: memref<5x384x512xbf16, #tpu.memory_space<vmem>>, %arg5: memref<1x256xf32, #tpu.memory_space<vmem>>, %arg6: memref<1024x128xbf16, #tpu.memory_space<vmem>>, %arg7: memref<1x128xf32, #tpu.memory_space<vmem>>, %arg8: memref<128x128xbf16, #tpu.memory_space<vmem>>, %arg9: memref<1x128xf32, #tpu.memory_space<vmem>>, %arg10: memref<8x128xf32, #tpu.memory_space<vmem>>) attributes {dimension_semantics = [#tpu.dimension_semantics<parallel>], iteration_bounds = array<i64: 1>, scalar_prefetch = 0 : i64, scratch_operands = 0 : i64, tpu.core_type = #tpu.core_type<tc>, window_params = [{transform_indices = @transform_0, window_bounds = array<i64: 192, 140>}, {pipeline_mode = #tpu.pipeline_mode<synchronous>, transform_indices = @transform_1, window_bounds = array<i64: 140, 768>}, {pipeline_mode = #tpu.pipeline_mode<synchronous>, transform_indices = @transform_2, window_bounds = array<i64: 1, 384>}, {pipeline_mode = #tpu.pipeline_mode<synchronous>, transform_indices = @transform_3, window_bounds = array<i64: 5, 384, 512>}, {pipeline_mode = #tpu.pipeline_mode<synchronous>, transform_indices = @transform_4, window_bounds = array<i64: 1, 256>}, {pipeline_mode = #tpu.pipeline_mode<synchronous>, transform_indices = @transform_5, window_bounds = array<i64: 1024, 128>}, {pipeline_mode = #tpu.pipeline_mode<synchronous>, transform_indices = @transform_6, window_bounds = array<i64: 1, 128>}, {pipeline_mode = #tpu.pipeline_mode<synchronous>, transform_indices = @transform_7, window_bounds = array<i64: 128, 128>}, {pipeline_mode = #tpu.pipeline_mode<synchronous>, transform_indices = @transform_8, window_bounds = array<i64: 1, 128>}, {transform_indices = @transform_9, window_bounds = array<i64: 8, 128>}]} {
    %c0 = arith.constant 0 : index
    %c0_0 = arith.constant 0 : index
    %0 = vector.load %arg1[%c0, %c0_0] : memref<192x140xbf16, #tpu.memory_space<vmem>>, vector<192x140xbf16>
    %c0_1 = arith.constant 0 : index
    %c0_2 = arith.constant 0 : index
    %1 = vector.load %arg2[%c0_1, %c0_2] : memref<140x768xbf16, #tpu.memory_space<vmem>>, vector<140x768xbf16>
    %cst = arith.constant dense<0.000000e+00> : vector<192x768xf32>
    %2 = tpu.matmul %0, %1, %cst {dimension_numbers = #tpu.dot_dimension_numbers<[1], [0], [0], [1], [0, 0, 1, 1], [], []>} : vector<192x140xbf16>, vector<140x768xbf16>, vector<192x768xf32> -> vector<192x768xf32>
    %3 = vector.extract_strided_slice %2 {offsets = [0, 0], sizes = [96, 768], strides = [1, 1]} : vector<192x768xf32> to vector<96x768xf32>
    %4 = vector.extract_strided_slice %2 {offsets = [96, 0], sizes = [96, 768], strides = [1, 1]} : vector<192x768xf32> to vector<96x768xf32>
    %5 = arith.maximumf %3, %4 : vector<96x768xf32>
    %6 = vector.extract_strided_slice %5 {offsets = [0, 0], sizes = [96, 384], strides = [1, 1]} : vector<96x768xf32> to vector<96x384xf32>
    %7 = vector.extract_strided_slice %5 {offsets = [0, 384], sizes = [96, 384], strides = [1, 1]} : vector<96x768xf32> to vector<96x384xf32>
    %8 = arith.maximumf %6, %7 : vector<96x384xf32>
    %c0_3 = arith.constant 0 : index
    %c0_4 = arith.constant 0 : index
    %9 = vector.load %arg3[%c0_3, %c0_4] : memref<1x384xf32, #tpu.memory_space<vmem>>, vector<1x384xf32>
    %10 = vector.broadcast %9 : vector<1x384xf32> to vector<96x384xf32>
    %11 = arith.addf %8, %10 : vector<96x384xf32>
    %cst_5 = arith.constant 0.000000e+00 : f32
    %12 = vector.broadcast %cst_5 : f32 to vector<96x384xf32>
    %13 = arith.maximumf %11, %12 : vector<96x384xf32>
    %14 = vector.extract_strided_slice %13 {offsets = [0, 0], sizes = [64, 384], strides = [1, 1]} : vector<96x384xf32> to vector<64x384xf32>
    %15 = arith.truncf %14 : vector<64x384xf32> to vector<64x384xbf16>
    %c0_6 = arith.constant 0 : index
    %c0_7 = arith.constant 0 : index
    %c0_8 = arith.constant 0 : index
    %16 = vector.load %arg4[%c0_6, %c0_7, %c0_8] : memref<5x384x512xbf16, #tpu.memory_space<vmem>>, vector<1x384x512xbf16>
    %17 = vector.shape_cast %16 : vector<1x384x512xbf16> to vector<384x512xbf16>
    %cst_9 = arith.constant dense<0.000000e+00> : vector<64x512xf32>
    %18 = tpu.matmul %15, %17, %cst_9 {dimension_numbers = #tpu.dot_dimension_numbers<[1], [0], [0], [1], [0, 0, 1, 1], [], []>} : vector<64x384xbf16>, vector<384x512xbf16>, vector<64x512xf32> -> vector<64x512xf32>
    %19 = vector.extract_strided_slice %13 {offsets = [8, 0], sizes = [64, 384], strides = [1, 1]} : vector<96x384xf32> to vector<64x384xf32>
    %20 = arith.truncf %19 : vector<64x384xf32> to vector<64x384xbf16>
    %c1 = arith.constant 1 : index
    %c0_10 = arith.constant 0 : index
    %c0_11 = arith.constant 0 : index
    %21 = vector.load %arg4[%c1, %c0_10, %c0_11] : memref<5x384x512xbf16, #tpu.memory_space<vmem>>, vector<1x384x512xbf16>
    %22 = vector.shape_cast %21 : vector<1x384x512xbf16> to vector<384x512xbf16>
    %cst_12 = arith.constant dense<0.000000e+00> : vector<64x512xf32>
    %23 = tpu.matmul %20, %22, %cst_12 {dimension_numbers = #tpu.dot_dimension_numbers<[1], [0], [0], [1], [0, 0, 1, 1], [], []>} : vector<64x384xbf16>, vector<384x512xbf16>, vector<64x512xf32> -> vector<64x512xf32>
    %24 = arith.addf %18, %23 : vector<64x512xf32>
    %25 = vector.extract_strided_slice %13 {offsets = [16, 0], sizes = [64, 384], strides = [1, 1]} : vector<96x384xf32> to vector<64x384xf32>
    %26 = arith.truncf %25 : vector<64x384xf32> to vector<64x384xbf16>
    %c2 = arith.constant 2 : index
    %c0_13 = arith.constant 0 : index
    %c0_14 = arith.constant 0 : index
    %27 = vector.load %arg4[%c2, %c0_13, %c0_14] : memref<5x384x512xbf16, #tpu.memory_space<vmem>>, vector<1x384x512xbf16>
    %28 = vector.shape_cast %27 : vector<1x384x512xbf16> to vector<384x512xbf16>
    %cst_15 = arith.constant dense<0.000000e+00> : vector<64x512xf32>
    %29 = tpu.matmul %26, %28, %cst_15 {dimension_numbers = #tpu.dot_dimension_numbers<[1], [0], [0], [1], [0, 0, 1, 1], [], []>} : vector<64x384xbf16>, vector<384x512xbf16>, vector<64x512xf32> -> vector<64x512xf32>
    %30 = arith.addf %24, %29 : vector<64x512xf32>
    %31 = vector.extract_strided_slice %13 {offsets = [24, 0], sizes = [64, 384], strides = [1, 1]} : vector<96x384xf32> to vector<64x384xf32>
    %32 = arith.truncf %31 : vector<64x384xf32> to vector<64x384xbf16>
    %c3 = arith.constant 3 : index
    %c0_16 = arith.constant 0 : index
    %c0_17 = arith.constant 0 : index
    %33 = vector.load %arg4[%c3, %c0_16, %c0_17] : memref<5x384x512xbf16, #tpu.memory_space<vmem>>, vector<1x384x512xbf16>
    %34 = vector.shape_cast %33 : vector<1x384x512xbf16> to vector<384x512xbf16>
    %cst_18 = arith.constant dense<0.000000e+00> : vector<64x512xf32>
    %35 = tpu.matmul %32, %34, %cst_18 {dimension_numbers = #tpu.dot_dimension_numbers<[1], [0], [0], [1], [0, 0, 1, 1], [], []>} : vector<64x384xbf16>, vector<384x512xbf16>, vector<64x512xf32> -> vector<64x512xf32>
    %36 = arith.addf %30, %35 : vector<64x512xf32>
    %37 = vector.extract_strided_slice %13 {offsets = [32, 0], sizes = [64, 384], strides = [1, 1]} : vector<96x384xf32> to vector<64x384xf32>
    %38 = arith.truncf %37 : vector<64x384xf32> to vector<64x384xbf16>
    %c4 = arith.constant 4 : index
    %c0_19 = arith.constant 0 : index
    %c0_20 = arith.constant 0 : index
    %39 = vector.load %arg4[%c4, %c0_19, %c0_20] : memref<5x384x512xbf16, #tpu.memory_space<vmem>>, vector<1x384x512xbf16>
    %40 = vector.shape_cast %39 : vector<1x384x512xbf16> to vector<384x512xbf16>
    %cst_21 = arith.constant dense<0.000000e+00> : vector<64x512xf32>
    %41 = tpu.matmul %38, %40, %cst_21 {dimension_numbers = #tpu.dot_dimension_numbers<[1], [0], [0], [1], [0, 0, 1, 1], [], []>} : vector<64x384xbf16>, vector<384x512xbf16>, vector<64x512xf32> -> vector<64x512xf32>
    %42 = arith.addf %36, %41 : vector<64x512xf32>
    %43 = vector.extract_strided_slice %42 {offsets = [0, 0], sizes = [8, 512], strides = [1, 1]} : vector<64x512xf32> to vector<8x512xf32>
    %44 = vector.extract_strided_slice %42 {offsets = [8, 0], sizes = [8, 512], strides = [1, 1]} : vector<64x512xf32> to vector<8x512xf32>
    %45 = arith.maximumf %43, %44 : vector<8x512xf32>
    %46 = vector.extract_strided_slice %45 {offsets = [0, 0], sizes = [8, 256], strides = [1, 1]} : vector<8x512xf32> to vector<8x256xf32>
    %47 = vector.extract_strided_slice %45 {offsets = [0, 256], sizes = [8, 256], strides = [1, 1]} : vector<8x512xf32> to vector<8x256xf32>
    %48 = arith.maximumf %46, %47 : vector<8x256xf32>
    %c0_22 = arith.constant 0 : index
    %c0_23 = arith.constant 0 : index
    %49 = vector.load %arg5[%c0_22, %c0_23] : memref<1x256xf32, #tpu.memory_space<vmem>>, vector<1x256xf32>
    %50 = vector.broadcast %49 : vector<1x256xf32> to vector<8x256xf32>
    %51 = arith.addf %48, %50 : vector<8x256xf32>
    %cst_24 = arith.constant 0.000000e+00 : f32
    %52 = vector.broadcast %cst_24 : f32 to vector<8x256xf32>
    %53 = arith.maximumf %51, %52 : vector<8x256xf32>
    %54 = vector.extract_strided_slice %42 {offsets = [16, 0], sizes = [8, 512], strides = [1, 1]} : vector<64x512xf32> to vector<8x512xf32>
    %55 = vector.extract_strided_slice %42 {offsets = [24, 0], sizes = [8, 512], strides = [1, 1]} : vector<64x512xf32> to vector<8x512xf32>
    %56 = arith.maximumf %54, %55 : vector<8x512xf32>
    %57 = vector.extract_strided_slice %56 {offsets = [0, 0], sizes = [8, 256], strides = [1, 1]} : vector<8x512xf32> to vector<8x256xf32>
    %58 = vector.extract_strided_slice %56 {offsets = [0, 256], sizes = [8, 256], strides = [1, 1]} : vector<8x512xf32> to vector<8x256xf32>
    %59 = arith.maximumf %57, %58 : vector<8x256xf32>
    %c0_25 = arith.constant 0 : index
    %c0_26 = arith.constant 0 : index
    %60 = vector.load %arg5[%c0_25, %c0_26] : memref<1x256xf32, #tpu.memory_space<vmem>>, vector<1x256xf32>
    %61 = vector.broadcast %60 : vector<1x256xf32> to vector<8x256xf32>
    %62 = arith.addf %59, %61 : vector<8x256xf32>
    %cst_27 = arith.constant 0.000000e+00 : f32
    %63 = vector.broadcast %cst_27 : f32 to vector<8x256xf32>
    %64 = arith.maximumf %62, %63 : vector<8x256xf32>
    %65 = vector.extract_strided_slice %42 {offsets = [32, 0], sizes = [8, 512], strides = [1, 1]} : vector<64x512xf32> to vector<8x512xf32>
    %66 = vector.extract_strided_slice %42 {offsets = [40, 0], sizes = [8, 512], strides = [1, 1]} : vector<64x512xf32> to vector<8x512xf32>
    %67 = arith.maximumf %65, %66 : vector<8x512xf32>
    %68 = vector.extract_strided_slice %67 {offsets = [0, 0], sizes = [8, 256], strides = [1, 1]} : vector<8x512xf32> to vector<8x256xf32>
    %69 = vector.extract_strided_slice %67 {offsets = [0, 256], sizes = [8, 256], strides = [1, 1]} : vector<8x512xf32> to vector<8x256xf32>
    %70 = arith.maximumf %68, %69 : vector<8x256xf32>
    %c0_28 = arith.constant 0 : index
    %c0_29 = arith.constant 0 : index
    %71 = vector.load %arg5[%c0_28, %c0_29] : memref<1x256xf32, #tpu.memory_space<vmem>>, vector<1x256xf32>
    %72 = vector.broadcast %71 : vector<1x256xf32> to vector<8x256xf32>
    %73 = arith.addf %70, %72 : vector<8x256xf32>
    %cst_30 = arith.constant 0.000000e+00 : f32
    %74 = vector.broadcast %cst_30 : f32 to vector<8x256xf32>
    %75 = arith.maximumf %73, %74 : vector<8x256xf32>
    %76 = vector.extract_strided_slice %42 {offsets = [48, 0], sizes = [8, 512], strides = [1, 1]} : vector<64x512xf32> to vector<8x512xf32>
    %77 = vector.extract_strided_slice %42 {offsets = [56, 0], sizes = [8, 512], strides = [1, 1]} : vector<64x512xf32> to vector<8x512xf32>
    %78 = arith.maximumf %76, %77 : vector<8x512xf32>
    %79 = vector.extract_strided_slice %78 {offsets = [0, 0], sizes = [8, 256], strides = [1, 1]} : vector<8x512xf32> to vector<8x256xf32>
    %80 = vector.extract_strided_slice %78 {offsets = [0, 256], sizes = [8, 256], strides = [1, 1]} : vector<8x512xf32> to vector<8x256xf32>
    %81 = arith.maximumf %79, %80 : vector<8x256xf32>
    %c0_31 = arith.constant 0 : index
    %c0_32 = arith.constant 0 : index
    %82 = vector.load %arg5[%c0_31, %c0_32] : memref<1x256xf32, #tpu.memory_space<vmem>>, vector<1x256xf32>
    %83 = vector.broadcast %82 : vector<1x256xf32> to vector<8x256xf32>
    %84 = arith.addf %81, %83 : vector<8x256xf32>
    %cst_33 = arith.constant 0.000000e+00 : f32
    %85 = vector.broadcast %cst_33 : f32 to vector<8x256xf32>
    %86 = arith.maximumf %84, %85 : vector<8x256xf32>
    %87 = tpu.concatenate %53, %64, %75, %86 in 1 : vector<8x256xf32>, vector<8x256xf32>, vector<8x256xf32>, vector<8x256xf32> -> vector<8x1024xf32>
    %88 = arith.truncf %87 : vector<8x1024xf32> to vector<8x1024xbf16>
    %c0_34 = arith.constant 0 : index
    %c0_35 = arith.constant 0 : index
    %89 = vector.load %arg6[%c0_34, %c0_35] : memref<1024x128xbf16, #tpu.memory_space<vmem>>, vector<1024x128xbf16>
    %cst_36 = arith.constant dense<0.000000e+00> : vector<8x128xf32>
    %90 = tpu.matmul %88, %89, %cst_36 {dimension_numbers = #tpu.dot_dimension_numbers<[1], [0], [0], [1], [0, 0, 1, 1], [], []>} : vector<8x1024xbf16>, vector<1024x128xbf16>, vector<8x128xf32> -> vector<8x128xf32>
    %c0_37 = arith.constant 0 : index
    %c0_38 = arith.constant 0 : index
    %91 = vector.load %arg7[%c0_37, %c0_38] : memref<1x128xf32, #tpu.memory_space<vmem>>, vector<1x128xf32>
    %92 = vector.broadcast %91 : vector<1x128xf32> to vector<8x128xf32>
    %93 = arith.addf %90, %92 : vector<8x128xf32>
    %cst_39 = arith.constant 0.000000e+00 : f32
    %94 = vector.broadcast %cst_39 : f32 to vector<8x128xf32>
    %95 = arith.maximumf %93, %94 : vector<8x128xf32>
    %96 = arith.truncf %95 : vector<8x128xf32> to vector<8x128xbf16>
    %c0_40 = arith.constant 0 : index
    %c0_41 = arith.constant 0 : index
    %97 = vector.load %arg8[%c0_40, %c0_41] : memref<128x128xbf16, #tpu.memory_space<vmem>>, vector<128x128xbf16>
    %cst_42 = arith.constant dense<0.000000e+00> : vector<8x128xf32>
    %98 = tpu.matmul %96, %97, %cst_42 {dimension_numbers = #tpu.dot_dimension_numbers<[1], [0], [0], [1], [0, 0, 1, 1], [], []>} : vector<8x128xbf16>, vector<128x128xbf16>, vector<8x128xf32> -> vector<8x128xf32>
    %c0_43 = arith.constant 0 : index
    %c0_44 = arith.constant 0 : index
    %99 = vector.load %arg9[%c0_43, %c0_44] : memref<1x128xf32, #tpu.memory_space<vmem>>, vector<1x128xf32>
    %100 = vector.broadcast %99 : vector<1x128xf32> to vector<8x128xf32>
    %101 = arith.addf %98, %100 : vector<8x128xf32>
    %cst_45 = arith.constant 0.000000e+00 : f32
    %102 = vector.broadcast %cst_45 : f32 to vector<8x128xf32>
    %103 = arith.maximumf %101, %102 : vector<8x128xf32>
    %c0_46 = arith.constant 0 : index
    %c0_47 = arith.constant 0 : index
    %104 = vector.load %arg10[%c0_46, %c0_47] : memref<8x128xf32, #tpu.memory_space<vmem>>, vector<8x128xf32>
    tpu.vector_store %arg10[%c0_46, %c0_47], %103 {strides = array<i32>} : memref<8x128xf32, #tpu.memory_space<vmem>>, vector<8x128xf32>,
    return
  }
  func.func @transform_0(%arg0: i32) -> (i32, i32) {
    %c0_i32 = arith.constant 0 : i32
    %c0_i32_0 = arith.constant 0 : i32
    return %arg0, %c0_i32 : i32, i32
  }
  func.func @transform_1(%arg0: i32) -> (i32, i32) {
    %c0_i32 = arith.constant 0 : i32
    %c0_i32_0 = arith.constant 0 : i32
    %c0_i32_1 = arith.constant 0 : i32
    return %c0_i32, %c0_i32_0 : i32, i32
  }
  func.func @transform_2(%arg0: i32) -> (i32, i32) {
    %c0_i32 = arith.constant 0 : i32
    %c0_i32_0 = arith.constant 0 : i32
    %c0_i32_1 = arith.constant 0 : i32
    return %c0_i32, %c0_i32_0 : i32, i32
  }
  func.func @transform_3(%arg0: i32) -> (i32, i32, i32) {
    %c0_i32 = arith.constant 0 : i32
    %c0_i32_0 = arith.constant 0 : i32
    %c0_i32_1 = arith.constant 0 : i32
    %c0_i32_2 = arith.constant 0 : i32
    return %c0_i32, %c0_i32_0, %c0_i32_1 : i32, i32, i32
  }
  func.func @transform_4(%arg0: i32) -> (i32, i32) {
    %c0_i32 = arith.constant 0 : i32
    %c0_i32_0 = arith.constant 0 : i32
    %c0_i32_1 = arith.constant 0 : i32
    return %c0_i32, %c0_i32_0 : i32, i32
  }
  func.func @transform_5(%arg0: i32) -> (i32, i32) {
    %c0_i32 = arith.constant 0 : i32
    %c0_i32_0 = arith.constant 0 : i32
    %c0_i32_1 = arith.constant 0 : i32
    return %c0_i32, %c0_i32_0 : i32, i32
  }
  func.func @transform_6(%arg0: i32) -> (i32, i32) {
    %c0_i32 = arith.constant 0 : i32
    %c0_i32_0 = arith.constant 0 : i32
    %c0_i32_1 = arith.constant 0 : i32
    return %c0_i32, %c0_i32_0 : i32, i32
  }
  func.func @transform_7(%arg0: i32) -> (i32, i32) {
    %c0_i32 = arith.constant 0 : i32
    %c0_i32_0 = arith.constant 0 : i32
    %c0_i32_1 = arith.constant 0 : i32
    return %c0_i32, %c0_i32_0 : i32, i32
  }
  func.func @transform_8(%arg0: i32) -> (i32, i32) {
    %c0_i32 = arith.constant 0 : i32
    %c0_i32_0 = arith.constant 0 : i32
    %c0_i32_1 = arith.constant 0 : i32
    return %c0_i32, %c0_i32_0 : i32, i32
  }
  func.func @transform_9(%arg0: i32) -> (i32, i32) {
    %c0_i32 = arith.constant 0 : i32
    %c0_i32_0 = arith.constant 0 : i32
    return %arg0, %c0_i32 : i32, i32
  }
}

</mosaic_0001>

<llo_original>
// kernel: cnn_net1_forward.1
$region0: #{cnn_net1_forward.1}
  #allocation0 [shape = 'u32[]', space=smem, size = 0x4, offset = 0x4, fixed_abs, tag = 'smem constant byte address 0x4 - core index']
  #allocation1 [shape = 'u32[144,128]{1,0:T(1,128)}', space=vmem, size = 0x12000, scoped, tag = 'internal scratch']
  %s0 = inlined_call_operand.vmem [shape: bf16[192,140], index: 0, kind: input, shape index: {}]
  %s1 = inlined_call_operand.hbm [shape: bf16[140,768], index: 1, kind: input, shape index: {}]
  %s2 = inlined_call_operand.hbm [shape: f32[1,384], index: 2, kind: input, shape index: {}]
  %s3 = inlined_call_operand.hbm [shape: bf16[5,384,512], index: 3, kind: input, shape index: {}]
  %s4 = inlined_call_operand.hbm [shape: f32[1,256], index: 4, kind: input, shape index: {}]
  %s5 = inlined_call_operand.hbm [shape: bf16[1024,128], index: 5, kind: input, shape index: {}]
  %s6 = inlined_call_operand.hbm [shape: f32[1,128], index: 6, kind: input, shape index: {}]
  %s7 = inlined_call_operand.hbm [shape: bf16[128,128], index: 7, kind: input, shape index: {}]
  %s8 = inlined_call_operand.hbm [shape: f32[1,128], index: 8, kind: input, shape index: {}]
  %s9 = inlined_call_operand.vmem [shape: f32[8,128], index: 9, kind: output, shape index: {}]
  %s10 = sld [smem:[#allocation0]]
  $region78: #{cnn_net1_forward.1} parent=0
    _
  %s12 = ssub.s32 1, %s10
  %s13 = scalar_select 0, %s12, %s10
  $region1: #{cnn_net1_forward.1} parent=0
    #allocation2 [shape = 'u8[221184]{0}', space=vmem, size = 0x36000, scoped, tag = 'input window, operand 1, single buffered']
    #allocation3 [shape = 's32[1]{0}', space=sflag, size = 0x4, scoped, tag = 'scoped memory for cnn_net1_forward.1']
    #allocation4 [shape = 'u8[1536]{0}', space=vmem, size = 0x800, scoped, tag = 'input window, operand 2, single buffered']
    #allocation5 [shape = 's32[1]{0}', space=sflag, size = 0x4, scoped, tag = 'scoped memory for cnn_net1_forward.1']
    #allocation6 [shape = 'u8[1966080]{0}', space=vmem, size = 0x1e0000, scoped, tag = 'input window, operand 3, single buffered']
    #allocation7 [shape = 'u8[1024]{0}', space=vmem, size = 0x400, scoped, tag = 'input window, operand 4, single buffered']
    #allocation8 [shape = 's32[1]{0}', space=sflag, size = 0x4, scoped, tag = 'scoped memory for cnn_net1_forward.1']
    #allocation9 [shape = 'u8[262144]{0}', space=vmem, size = 0x40000, scoped, tag = 'input window, operand 5, single buffered']
    #allocation10 [shape = 'u8[512]{0}', space=vmem, size = 0x400, scoped, tag = 'input window, operand 6, single buffered']
    #allocation11 [shape = 's32[1]{0}', space=sflag, size = 0x4, scoped, tag = 'scoped memory for cnn_net1_forward.1']
    #allocation12 [shape = 'u8[32768]{0}', space=vmem, size = 0x8000, scoped, tag = 'input window, operand 7, single buffered']
    #allocation13 [shape = 'u8[512]{0}', space=vmem, size = 0x400, scoped, tag = 'input window, operand 8, single buffered']
    #allocation14 [shape = 's32[1]{0}', space=sflag, size = 0x4, scoped, tag = 'scoped memory for cnn_net1_forward.1']
    %14 = vsyncpa [#allocation3], 0
    %15 = vsyncpa [#allocation5], 0
    %16 = vsyncpa [#allocation8], 0
    %17 = vsyncpa [#allocation11], 0
    %18 = vsyncpa [#allocation14], 0
    // Predicated region
    $region2: #{cnn_net1_forward.1} parent=1 // pred_check
      _
    $region3: #{cnn_net1_forward.1} parent=1 // pred_check_branch
      %20 = sbr.rel (0) target = $region5
    $region4: #{cnn_net1_forward.1} parent=1 // pred_region
      _
    $region5: #{cnn_net1_forward.1} parent=1 // pred_fallthru
      _
    // Predicated region
    $region6: #{cnn_net1_forward.1} parent=1 // pred_check
      _
    $region7: #{cnn_net1_forward.1} parent=1 // pred_check_branch
      %22 = sbr.rel (0) target = $region9
    $region8: #{cnn_net1_forward.1} parent=1 // pred_region
      %s24 = ssub.s32 6912, 6912
      %25 = vsyncadd [#allocation3], %s24
      %s26 = sshll.u32 [#allocation2], 4
      %s27 = int_to_ptr.vmem [resolvable:$true] %s26
      %32 = dma.hbm_to_vmem [thread:$0]  %s1, 6912, %s27, [#allocation3], 384, 384, 24
    $region9: #{cnn_net1_forward.1} parent=1 // pred_fallthru
      _
    // Predicated region
    $region10: #{cnn_net1_forward.1} parent=1 // pred_check
      _
    $region11: #{cnn_net1_forward.1} parent=1 // pred_check_branch
      %34 = sbr.rel (0) target = $region13
    $region12: #{cnn_net1_forward.1} parent=1 // pred_region
      %s36 = ssub.s32 48, 48
      %37 = vsyncadd [#allocation5], %s36
      %s39 = sshll.u32 [#allocation4], 4
      %s40 = int_to_ptr.vmem [resolvable:$true] %s39
      %42 = dma.hbm_to_vmem [thread:$0]  %s2, 48, %s40, [#allocation5]
    $region13: #{cnn_net1_forward.1} parent=1 // pred_fallthru
      _
    // Predicated region
    $region14: #{cnn_net1_forward.1} parent=1 // pred_check
      _
    $region15: #{cnn_net1_forward.1} parent=1 // pred_check_branch
      %44 = sbr.rel (0) target = $region17
    $region16: #{cnn_net1_forward.1} parent=1 // pred_region
      %s46 = ssub.s32 61440, 61440
      %47 = vsyncadd [#allocation5], %s46
      %s48 = sshll.u32 [#allocation6], 4
      %s49 = int_to_ptr.vmem [resolvable:$true] %s48
      %54 = dma.hbm_to_vmem [thread:$0]  %s3, 61440, %s49, [#allocation5], 256, 256, 16
    $region17: #{cnn_net1_forward.1} parent=1 // pred_fallthru
      _
    // Predicated region
    $region18: #{cnn_net1_forward.1} parent=1 // pred_check
      _
    $region19: #{cnn_net1_forward.1} parent=1 // pred_check_branch
      %56 = sbr.rel (0) target = $region21
    $region20: #{cnn_net1_forward.1} parent=1 // pred_region
      %s58 = ssub.s32 32, 32
      %59 = vsyncadd [#allocation8], %s58
      %s61 = sshll.u32 [#allocation7], 4
      %s62 = int_to_ptr.vmem [resolvable:$true] %s61
      %64 = dma.hbm_to_vmem [thread:$0]  %s4, 32, %s62, [#allocation8]
    $region21: #{cnn_net1_forward.1} parent=1 // pred_fallthru
      _
    // Predicated region
    $region22: #{cnn_net1_forward.1} parent=1 // pred_check
      _
    $region23: #{cnn_net1_forward.1} parent=1 // pred_check_branch
      %66 = sbr.rel (0) target = $region25
    $region24: #{cnn_net1_forward.1} parent=1 // pred_region
      %s68 = ssub.s32 8192, 8192
      %69 = vsyncadd [#allocation8], %s68
      %s70 = sshll.u32 [#allocation9], 4
      %s71 = int_to_ptr.vmem [resolvable:$true] %s70
      %76 = dma.hbm_to_vmem [thread:$0]  %s5, 8192, %s71, [#allocation8], 64, 64, 4
    $region25: #{cnn_net1_forward.1} parent=1 // pred_fallthru
      _
    // Predicated region
    $region26: #{cnn_net1_forward.1} parent=1 // pred_check
      _
    $region27: #{cnn_net1_forward.1} parent=1 // pred_check_branch
      %78 = sbr.rel (0) target = $region29
    $region28: #{cnn_net1_forward.1} parent=1 // pred_region
      %s80 = ssub.s32 16, 16
      %81 = vsyncadd [#allocation11], %s80
      %s83 = sshll.u32 [#allocation10], 4
      %s84 = int_to_ptr.vmem [resolvable:$true] %s83
      %86 = dma.hbm_to_vmem [thread:$0]  %s6, 16, %s84, [#allocation11]
    $region29: #{cnn_net1_forward.1} parent=1 // pred_fallthru
      _
    // Predicated region
    $region30: #{cnn_net1_forward.1} parent=1 // pred_check
      _
    $region31: #{cnn_net1_forward.1} parent=1 // pred_check_branch
      %88 = sbr.rel (0) target = $region33
    $region32: #{cnn_net1_forward.1} parent=1 // pred_region
      %s90 = ssub.s32 1024, 1024
      %91 = vsyncadd [#allocation11], %s90
      %s92 = sshll.u32 [#allocation12], 4
      %s93 = int_to_ptr.vmem [resolvable:$true] %s92
      %98 = dma.hbm_to_vmem [thread:$0]  %s7, 1024, %s93, [#allocation11], 64, 64, 4
    $region33: #{cnn_net1_forward.1} parent=1 // pred_fallthru
      _
    // Predicated region
    $region34: #{cnn_net1_forward.1} parent=1 // pred_check
      _
    $region35: #{cnn_net1_forward.1} parent=1 // pred_check_branch
      %100 = sbr.rel (0) target = $region37
    $region36: #{cnn_net1_forward.1} parent=1 // pred_region
      %s102 = ssub.s32 16, 16
      %103 = vsyncadd [#allocation14], %s102
      %s105 = sshll.u32 [#allocation13], 4
      %s106 = int_to_ptr.vmem [resolvable:$true] %s105
      %108 = dma.hbm_to_vmem [thread:$0]  %s8, 16, %s106, [#allocation14]
    $region37: #{cnn_net1_forward.1} parent=1 // pred_fallthru
      _
    // Predicated region
    $region38: #{cnn_net1_forward.1} parent=1 // pred_check
      _
    $region39: #{cnn_net1_forward.1} parent=1 // pred_check_branch
      %110 = sbr.rel (0) target = $region41
    $region40: #{cnn_net1_forward.1} parent=1 // pred_region
      %111 = dma.done [#allocation3], 6912
    $region41: #{cnn_net1_forward.1} parent=1 // pred_fallthru
      _
    // Predicated region
    $region42: #{cnn_net1_forward.1} parent=1 // pred_check
      _
    $region43: #{cnn_net1_forward.1} parent=1 // pred_check_branch
      %113 = sbr.rel (0) target = $region45
    $region44: #{cnn_net1_forward.1} parent=1 // pred_region
      %114 = dma.done [#allocation5], 48
    $region45: #{cnn_net1_forward.1} parent=1 // pred_fallthru
      _
    // Predicated region
    $region46: #{cnn_net1_forward.1} parent=1 // pred_check
      _
    $region47: #{cnn_net1_forward.1} parent=1 // pred_check_branch
      %116 = sbr.rel (0) target = $region49
    $region48: #{cnn_net1_forward.1} parent=1 // pred_region
      %117 = dma.done [#allocation5], 61440
    $region49: #{cnn_net1_forward.1} parent=1 // pred_fallthru
      _
    // Predicated region
    $region50: #{cnn_net1_forward.1} parent=1 // pred_check
      _
    $region51: #{cnn_net1_forward.1} parent=1 // pred_check_branch
      %119 = sbr.rel (0) target = $region53
    $region52: #{cnn_net1_forward.1} parent=1 // pred_region
      %120 = dma.done [#allocation8], 32
    $region53: #{cnn_net1_forward.1} parent=1 // pred_fallthru
      _
    // Predicated region
    $region54: #{cnn_net1_forward.1} parent=1 // pred_check
      _
    $region55: #{cnn_net1_forward.1} parent=1 // pred_check_branch
      %122 = sbr.rel (0) target = $region57
    $region56: #{cnn_net1_forward.1} parent=1 // pred_region
      %123 = dma.done [#allocation8], 8192
    $region57: #{cnn_net1_forward.1} parent=1 // pred_fallthru
      _
    // Predicated region
    $region58: #{cnn_net1_forward.1} parent=1 // pred_check
      _
    $region59: #{cnn_net1_forward.1} parent=1 // pred_check_branch
      %125 = sbr.rel (0) target = $region61
    $region60: #{cnn_net1_forward.1} parent=1 // pred_region
      %126 = dma.done [#allocation11], 16
    $region61: #{cnn_net1_forward.1} parent=1 // pred_fallthru
      _
    // Predicated region
    $region62: #{cnn_net1_forward.1} parent=1 // pred_check
      _
    $region63: #{cnn_net1_forward.1} parent=1 // pred_check_branch
      %128 = sbr.rel (0) target = $region65
    $region64: #{cnn_net1_forward.1} parent=1 // pred_region
      %129 = dma.done [#allocation11], 1024
    $region65: #{cnn_net1_forward.1} parent=1 // pred_fallthru
      _
    // Predicated region
    $region66: #{cnn_net1_forward.1} parent=1 // pred_check
      _
    $region67: #{cnn_net1_forward.1} parent=1 // pred_check_branch
      %131 = sbr.rel (0) target = $region69
    $region68: #{cnn_net1_forward.1} parent=1 // pred_region
      %132 = dma.done [#allocation14], 16
    $region69: #{cnn_net1_forward.1} parent=1 // pred_fallthru
      _
    %v134 = vld [vmem:[%s0] sm:$0xff]
    %v135 = vld [vmem:[%s0 + $0x8] sm:$0xff]
    %v136 = vld [vmem:[%s0 + $0x10] sm:$0xff]
    %v137 = vld [vmem:[%s0 + $0x18] sm:$0xff]
    %v138 = vld [vmem:[%s0 + $0x20] sm:$0xff]
    %v139 = vld [vmem:[%s0 + $0x28] sm:$0xff]
    %v140 = vld [vmem:[%s0 + $0x30] sm:$0xff]
    %v141 = vld [vmem:[%s0 + $0x38] sm:$0xff]
    %v142 = vld [vmem:[%s0 + $0x40] sm:$0xff]
    %v143 = vld [vmem:[%s0 + $0x48] sm:$0xff]
    %v144 = vld [vmem:[%s0 + $0x50] sm:$0xff]
    %v145 = vld [vmem:[%s0 + $0x58] sm:$0xff]
    %v146 = vld [vmem:[%s0 + $0x60] sm:$0xff]
    %v147 = vld [vmem:[%s0 + $0x68] sm:$0xff]
    %v148 = vld [vmem:[%s0 + $0x70] sm:$0xff]
    %v149 = vld [vmem:[%s0 + $0x78] sm:$0xff]
    %v150 = vld [vmem:[%s0 + $0x80] sm:$0xff]
    %v151 = vld [vmem:[%s0 + $0x88] sm:$0xff]
    %v152 = vld [vmem:[%s0 + $0x90] sm:$0xff]
    %v153 = vld [vmem:[%s0 + $0x98] sm:$0xff]
    %v154 = vld [vmem:[%s0 + $0xa0] sm:$0xff]
    %v155 = vld [vmem:[%s0 + $0xa8] sm:$0xff]
    %v156 = vld [vmem:[%s0 + $0xb0] sm:$0xff]
    %v157 = vld [vmem:[%s0 + $0xb8] sm:$0xff]
    %v158 = vld [vmem:[#allocation2] sm:$0xff]
    %v159 = vld [vmem:[#allocation2 + $0x8] sm:$0xff]
    %v160 = vld [vmem:[#allocation2 + $0x10] sm:$0xff]
    %v161 = vld [vmem:[#allocation2 + $0x18] sm:$0xff]
    %v162 = vld [vmem:[#allocation2 + $0x20] sm:$0xff]
    %v163 = vld [vmem:[#allocation2 + $0x28] sm:$0xff]
    %v164 = vld [vmem:[#allocation2 + $0x30] sm:$0xff]
    %v165 = vld [vmem:[#allocation2 + $0x38] sm:$0xff]
    %v166 = vld [vmem:[#allocation2 + $0x40] sm:$0xff]
    %v167 = vld [vmem:[#allocation2 + $0x48] sm:$0xff]
    %v168 = vld [vmem:[#allocation2 + $0x50] sm:$0xff]
    %v169 = vld [vmem:[#allocation2 + $0x58] sm:$0xff]
    %v170 = vld [vmem:[#allocation2 + $0x60] sm:$0xff]
    %v171 = vld [vmem:[#allocation2 + $0x68] sm:$0xff]
    %v172 = vld [vmem:[#allocation2 + $0x70] sm:$0xff]
    %v173 = vld [vmem:[#allocation2 + $0x78] sm:$0xff]
    %v174 = vld [vmem:[#allocation2 + $0x80] sm:$0xff]
    %v175 = vld [vmem:[#allocation2 + $0x88] sm:$0xff]
    %v176 = vld [vmem:[#allocation2 + $0x90] sm:$0xff]
    %v177 = vld [vmem:[#allocation2 + $0x98] sm:$0xff]
    %v178 = vld [vmem:[#allocation2 + $0xa0] sm:$0xff]
    %v179 = vld [vmem:[#allocation2 + $0xa8] sm:$0xff]
    %v180 = vld [vmem:[#allocation2 + $0xb0] sm:$0xff]
    %v181 = vld [vmem:[#allocation2 + $0xb8] sm:$0xff]
    %v182 = vld [vmem:[#allocation2 + $0xc0] sm:$0xff]
    %v183 = vld [vmem:[#allocation2 + $0xc8] sm:$0xff]
    %v184 = vld [vmem:[#allocation2 + $0xd0] sm:$0xff]
    %v185 = vld [vmem:[#allocation2 + $0xd8] sm:$0xff]
    %v186 = vld [vmem:[#allocation2 + $0xe0] sm:$0xff]
    %v187 = vld [vmem:[#allocation2 + $0xe8] sm:$0xff]
    %v188 = vld [vmem:[#allocation2 + $0xf0] sm:$0xff]
    %v189 = vld [vmem:[#allocation2 + $0xf8] sm:$0xff]
    %v190 = vld [vmem:[#allocation2 + $0x100] sm:$0xff]
    %v191 = vld [vmem:[#allocation2 + $0x108] sm:$0xff]
    %v192 = vld [vmem:[#allocation2 + $0x110] sm:$0xff]
    %v193 = vld [vmem:[#allocation2 + $0x118] sm:$0xff]
    %v194 = vld [vmem:[#allocation2 + $0x120] sm:$0xff]
    %v195 = vld [vmem:[#allocation2 + $0x128] sm:$0xff]
    %v196 = vld [vmem:[#allocation2 + $0x130] sm:$0xff]
    %v197 = vld [vmem:[#allocation2 + $0x138] sm:$0xff]
    %v198 = vld [vmem:[#allocation2 + $0x140] sm:$0xff]
    %v199 = vld [vmem:[#allocation2 + $0x148] sm:$0xff]
    %v200 = vld [vmem:[#allocation2 + $0x150] sm:$0xff]
    %v201 = vld [vmem:[#allocation2 + $0x158] sm:$0xff]
    %v202 = vld [vmem:[#allocation2 + $0x160] sm:$0xff]
    %v203 = vld [vmem:[#allocation2 + $0x168] sm:$0xff]
    %v204 = vld [vmem:[#allocation2 + $0x170] sm:$0xff]
    %v205 = vld [vmem:[#allocation2 + $0x178] sm:$0xff]
    %v206 = vld [vmem:[#allocation2 + $0x180] sm:$0xff]
    %v207 = vld [vmem:[#allocation2 + $0x188] sm:$0xff]
    %v208 = vld [vmem:[#allocation2 + $0x190] sm:$0xff]
    %v209 = vld [vmem:[#allocation2 + $0x198] sm:$0x33]
    %v210 = vld [vmem:[#allocation2 + $0x1a0] sm:$0x33]
    %v211 = vld [vmem:[#allocation2 + $0x1a8] sm:$0x33]
    %v236 = vunpack.c.l.b16 %v134
    %v237 = vunpack.c.h.b16 %v134
    %v238 = vunpack.c.l.b16 %v135
    %v239 = vunpack.c.h.b16 %v135
    %v240 = vunpack.c.l.b16 %v136
    %v241 = vunpack.c.h.b16 %v136
    %v242 = vunpack.c.l.b16 %v137
    %v243 = vunpack.c.h.b16 %v137
    %v244 = vunpack.c.l.b16 %v138
    %v245 = vunpack.c.h.b16 %v138
    %v246 = vunpack.c.l.b16 %v139
    %v247 = vunpack.c.h.b16 %v139
    %v248 = vunpack.c.l.b16 %v140
    %v249 = vunpack.c.h.b16 %v140
    %v250 = vunpack.c.l.b16 %v141
    %v251 = vunpack.c.h.b16 %v141
    %v252 = vunpack.c.l.b16 %v142
    %v253 = vunpack.c.h.b16 %v142
    %v254 = vunpack.c.l.b16 %v143
    %v255 = vunpack.c.h.b16 %v143
    %v256 = vunpack.c.l.b16 %v144
    %v257 = vunpack.c.h.b16 %v144
    %v258 = vunpack.c.l.b16 %v145
    %v259 = vunpack.c.h.b16 %v145
    %v260 = vunpack.c.l.b16 %v146
    %v261 = vunpack.c.h.b16 %v146
    %v262 = vunpack.c.l.b16 %v147
    %v263 = vunpack.c.h.b16 %v147
    %v264 = vunpack.c.l.b16 %v148
    %v265 = vunpack.c.h.b16 %v148
    %v266 = vunpack.c.l.b16 %v149
    %v267 = vunpack.c.h.b16 %v149
    %v268 = vunpack.c.l.b16 %v150
    %v269 = vunpack.c.h.b16 %v150
    %v270 = vunpack.c.l.b16 %v151
    %v271 = vunpack.c.h.b16 %v151
    %v272 = vunpack.c.l.b16 %v152
    %v273 = vunpack.c.h.b16 %v152
    %v274 = vunpack.c.l.b16 %v153
    %v275 = vunpack.c.h.b16 %v153
    %v276 = vunpack.c.l.b16 %v154
    %v277 = vunpack.c.h.b16 %v154
    %v278 = vunpack.c.l.b16 %v155
    %v279 = vunpack.c.h.b16 %v155
    %v280 = vunpack.c.l.b16 %v156
    %v281 = vunpack.c.h.b16 %v156
    %v282 = vunpack.c.l.b16 %v157
    %v283 = vunpack.c.h.b16 %v157
    %v284 = vpack.c.b16 %v238, %v236
    %v285 = vpack.c.b16 %v239, %v237
    %v286 = vpack.c.b16 %v242, %v240
    %v287 = vpack.c.b16 %v243, %v241
    %v288 = vpack.c.b16 %v246, %v244
    %v289 = vpack.c.b16 %v247, %v245
    %v290 = vpack.c.b16 %v250, %v248
    %v291 = vpack.c.b16 %v251, %v249
    %v292 = vpack.c.b16 %v254, %v252
    %v293 = vpack.c.b16 %v255, %v253
    %v294 = vpack.c.b16 %v258, %v256
    %v295 = vpack.c.b16 %v259, %v257
    %v296 = vpack.c.b16 %v262, %v260
    %v297 = vpack.c.b16 %v263, %v261
    %v298 = vpack.c.b16 %v266, %v264
    %v299 = vpack.c.b16 %v267, %v265
    %v300 = vpack.c.b16 %v270, %v268
    %v301 = vpack.c.b16 %v271, %v269
    %v302 = vpack.c.b16 %v274, %v272
    %v303 = vpack.c.b16 %v275, %v273
    %v304 = vpack.c.b16 %v278, %v276
    %v305 = vpack.c.b16 %v279, %v277
    %v306 = vpack.c.b16 %v282, %v280
    %v307 = vpack.c.b16 %v283, %v281
    %v374 = vunpack.c.l.b16 %v158
    %v375 = vunpack.c.h.b16 %v158
    %v376 = vunpack.c.l.b16 %v159
    %v377 = vunpack.c.h.b16 %v159
    %v378 = vunpack.c.l.b16 %v160
    %v379 = vunpack.c.h.b16 %v160
    %v380 = vunpack.c.l.b16 %v161
    %v381 = vunpack.c.h.b16 %v161
    %v382 = vunpack.c.l.b16 %v162
    %v383 = vunpack.c.h.b16 %v162
    %v384 = vunpack.c.l.b16 %v163
    %v385 = vunpack.c.h.b16 %v163
    %v386 = vunpack.c.l.b16 %v164
    %v387 = vunpack.c.h.b16 %v164
    %v388 = vunpack.c.l.b16 %v165
    %v389 = vunpack.c.h.b16 %v165
    %v390 = vunpack.c.l.b16 %v166
    %v391 = vunpack.c.h.b16 %v166
    %v392 = vunpack.c.l.b16 %v167
    %v393 = vunpack.c.h.b16 %v167
    %v394 = vunpack.c.l.b16 %v168
    %v395 = vunpack.c.h.b16 %v168
    %v396 = vunpack.c.l.b16 %v169
    %v397 = vunpack.c.h.b16 %v169
    %v398 = vunpack.c.l.b16 %v170
    %v399 = vunpack.c.h.b16 %v170
    %v400 = vunpack.c.l.b16 %v171
    %v401 = vunpack.c.h.b16 %v171
    %v402 = vunpack.c.l.b16 %v172
    %v403 = vunpack.c.h.b16 %v172
    %v404 = vunpack.c.l.b16 %v173
    %v405 = vunpack.c.h.b16 %v173
    %v406 = vunpack.c.l.b16 %v174
    %v407 = vunpack.c.h.b16 %v174
    %v408 = vunpack.c.l.b16 %v175
    %v409 = vunpack.c.h.b16 %v175
    %v410 = vunpack.c.l.b16 %v176
    %v411 = vunpack.c.h.b16 %v176
    %v412 = vunpack.c.l.b16 %v177
    %v413 = vunpack.c.h.b16 %v177
    %v414 = vunpack.c.l.b16 %v178
    %v415 = vunpack.c.h.b16 %v178
    %v416 = vunpack.c.l.b16 %v179
    %v417 = vunpack.c.h.b16 %v179
    %v418 = vunpack.c.l.b16 %v180
    %v419 = vunpack.c.h.b16 %v180
    %v420 = vunpack.c.l.b16 %v181
    %v421 = vunpack.c.h.b16 %v181
    %v422 = vunpack.c.l.b16 %v182
    %v423 = vunpack.c.h.b16 %v182
    %v424 = vunpack.c.l.b16 %v183
    %v425 = vunpack.c.h.b16 %v183
    %v426 = vunpack.c.l.b16 %v184
    %v427 = vunpack.c.h.b16 %v184
    %v428 = vunpack.c.l.b16 %v185
    %v429 = vunpack.c.h.b16 %v185
    %v430 = vunpack.c.l.b16 %v186
    %v431 = vunpack.c.h.b16 %v186
    %v432 = vunpack.c.l.b16 %v187
    %v433 = vunpack.c.h.b16 %v187
    %v434 = vunpack.c.l.b16 %v188
    %v435 = vunpack.c.h.b16 %v188
    %v436 = vunpack.c.l.b16 %v189
    %v437 = vunpack.c.h.b16 %v189
    %v438 = vunpack.c.l.b16 %v190
    %v439 = vunpack.c.h.b16 %v190
    %v440 = vunpack.c.l.b16 %v191
    %v441 = vunpack.c.h.b16 %v191
    %v442 = vunpack.c.l.b16 %v192
    %v443 = vunpack.c.h.b16 %v192
    %v444 = vunpack.c.l.b16 %v193
    %v445 = vunpack.c.h.b16 %v193
    %v446 = vunpack.c.l.b16 %v194
    %v447 = vunpack.c.h.b16 %v194
    %v448 = vunpack.c.l.b16 %v195
    %v449 = vunpack.c.h.b16 %v195
    %v450 = vunpack.c.l.b16 %v196
    %v451 = vunpack.c.h.b16 %v196
    %v452 = vunpack.c.l.b16 %v197
    %v453 = vunpack.c.h.b16 %v197
    %v454 = vunpack.c.l.b16 %v198
    %v455 = vunpack.c.h.b16 %v198
    %v456 = vunpack.c.l.b16 %v199
    %v457 = vunpack.c.h.b16 %v199
    %v458 = vunpack.c.l.b16 %v200
    %v459 = vunpack.c.h.b16 %v200
    %v460 = vunpack.c.l.b16 %v201
    %v461 = vunpack.c.h.b16 %v201
    %v462 = vunpack.c.l.b16 %v202
    %v463 = vunpack.c.h.b16 %v202
    %v464 = vunpack.c.l.b16 %v203
    %v465 = vunpack.c.h.b16 %v203
    %v466 = vunpack.c.l.b16 %v204
    %v467 = vunpack.c.h.b16 %v204
    %v468 = vunpack.c.l.b16 %v205
    %v469 = vunpack.c.h.b16 %v205
    %v470 = vunpack.c.l.b16 %v206
    %v471 = vunpack.c.h.b16 %v206
    %v472 = vunpack.c.l.b16 %v207
    %v473 = vunpack.c.h.b16 %v207
    %v474 = vunpack.c.l.b16 %v208
    %v475 = vunpack.c.h.b16 %v208
    %v476 = vunpack.c.l.b16 %v209
    %v477 = vunpack.c.h.b16 %v209
    %v478 = vunpack.c.l.b16 %v210
    %v479 = vunpack.c.h.b16 %v210
    %v480 = vunpack.c.l.b16 %v211
    %v481 = vunpack.c.h.b16 %v211
    %v482 = vpack.c.b16 %v380, %v374
    %v483 = vpack.c.b16 %v381, %v375
    %v484 = vpack.c.b16 %v382, %v376
    %v485 = vpack.c.b16 %v383, %v377
    %v486 = vpack.c.b16 %v384, %v378
    %v487 = vpack.c.b16 %v385, %v379
    %v488 = vpack.c.b16 %v392, %v386
    %v489 = vpack.c.b16 %v393, %v387
    %v490 = vpack.c.b16 %v394, %v388
    %v491 = vpack.c.b16 %v395, %v389
    %v492 = vpack.c.b16 %v396, %v390
    %v493 = vpack.c.b16 %v397, %v391
    %v494 = vpack.c.b16 %v404, %v398
    %v495 = vpack.c.b16 %v405, %v399
    %v496 = vpack.c.b16 %v406, %v400
    %v497 = vpack.c.b16 %v407, %v401
    %v498 = vpack.c.b16 %v408, %v402
    %v499 = vpack.c.b16 %v409, %v403
    %v500 = vpack.c.b16 %v416, %v410
    %v501 = vpack.c.b16 %v417, %v411
    %v502 = vpack.c.b16 %v418, %v412
    %v503 = vpack.c.b16 %v419, %v413
    %v504 = vpack.c.b16 %v420, %v414
    %v505 = vpack.c.b16 %v421, %v415
    %v506 = vpack.c.b16 %v428, %v422
    %v507 = vpack.c.b16 %v429, %v423
    %v508 = vpack.c.b16 %v430, %v424
    %v509 = vpack.c.b16 %v431, %v425
    %v510 = vpack.c.b16 %v432, %v426
    %v511 = vpack.c.b16 %v433, %v427
    %v512 = vpack.c.b16 %v440, %v434
    %v513 = vpack.c.b16 %v441, %v435
    %v514 = vpack.c.b16 %v442, %v436
    %v515 = vpack.c.b16 %v443, %v437
    %v516 = vpack.c.b16 %v444, %v438
    %v517 = vpack.c.b16 %v445, %v439
    %v518 = vpack.c.b16 %v452, %v446
    %v519 = vpack.c.b16 %v453, %v447
    %v520 = vpack.c.b16 %v454, %v448
    %v521 = vpack.c.b16 %v455, %v449
    %v522 = vpack.c.b16 %v456, %v450
    %v523 = vpack.c.b16 %v457, %v451
    %v524 = vpack.c.b16 %v464, %v458
    %v525 = vpack.c.b16 %v465, %v459
    %v526 = vpack.c.b16 %v466, %v460
    %v527 = vpack.c.b16 %v467, %v461
    %v528 = vpack.c.b16 %v468, %v462
    %v529 = vpack.c.b16 %v469, %v463
    %v530 = vpack.c.b16 %v476, %v470
    %v531 = vpack.c.b16 %v477, %v471
    %v532 = vpack.c.b16 %v478, %v472
    %v533 = vpack.c.b16 %v479, %v473
    %v534 = vpack.c.b16 %v480, %v474
    %v535 = vpack.c.b16 %v481, %v475
    %vm584 = vcmask 97280
    %v586 = vsel %vm584, %v285, 0
    %v589 = vsel %vm584, %v287, 0
    %v592 = vsel %vm584, %v289, 0
    %v595 = vsel %vm584, %v291, 0
    %v598 = vsel %vm584, %v293, 0
    %v601 = vsel %vm584, %v295, 0
    %v604 = vsel %vm584, %v297, 0
    %v607 = vsel %vm584, %v299, 0
    %v610 = vsel %vm584, %v301, 0
    %v613 = vsel %vm584, %v303, 0
    %v616 = vsel %vm584, %v305, 0
    %v619 = vsel %vm584, %v307, 0
    %vm621 = vcmask 1045504
    %v623 = vsel %vm621, %v530, 0
    %v626 = vsel %vm621, %v531, 0
    %v629 = vsel %vm621, %v532, 0
    %v632 = vsel %vm621, %v533, 0
    %v635 = vsel %vm621, %v534, 0
    %v638 = vsel %vm621, %v535, 0
    %640 = vmatprep.subr.bf16.mxu0 %v483
    %641 = vmatpush1.bf16.msra.mxu0 %v482
    %642 = vmatprep.subr.bf16.mxu0 %v489
    %643 = vmatpush1.bf16.msra.mxu0 %v488
    %644 = vmatprep.subr.bf16.mxu0 %v495
    %645 = vmatpush1.bf16.msra.mxu0 %v494
    %646 = vmatprep.subr.bf16.mxu0 %v501
    %647 = vmatpush1.bf16.msra.mxu0 %v500
    %648 = vmatprep.subr.bf16.mxu0 %v507
    %649 = vmatpush1.bf16.msra.mxu0 %v506
    %650 = vmatprep.subr.bf16.mxu0 %v513
    %651 = vmatpush1.bf16.msra.mxu0 %v512
    %652 = vmatprep.subr.bf16.mxu0 %v519
    %653 = vmatpush1.bf16.msra.mxu0 %v518
    %654 = vmatprep.subr.bf16.mxu0 %v525
    %655 = vmatpush1.bf16.msra.mxu0 %v524
    %656 = vmatprep.subr.bf16.mxu0 %v626
    %657 = vmatpush1.bf16.msra.mxu0 %v623
    %658 = vmatprep.subr.bf16.mxu0 0
    %659 = vmatpush1.bf16.msra.mxu0 0
    %660 = vmatprep.subr.bf16.mxu0 0
    %661 = vmatpush1.bf16.msra.mxu0 0
    %662 = vmatprep.subr.bf16.mxu0 0
    %663 = vmatpush1.bf16.msra.mxu0 0
    %664 = vmatprep.subr.bf16.mxu0 0
    %665 = vmatpush1.bf16.msra.mxu0 0
    %666 = vmatprep.subr.bf16.mxu0 0
    %667 = vmatpush1.bf16.msra.mxu0 0
    %668 = vmatprep.subr.bf16.mxu0 0
    %669 = vmatpush1.bf16.msra.mxu0 0
    %670 = vmatprep.subr.bf16.mxu0 0
    %671 = vmatpush1.bf16.msra.mxu0 0
    %672 = vmatprep.mubr.bf16.mxu0 %v586
    %673 = vmatmul.mubr.bf16.gmra.mrb[0].mxu0 %v284
    %v674 = vpop.f32.mrb[0].mxu0
    %v675 = vadd.f32 0.0, %v674
    %v676 = vpop.f32.mrb[0].mxu0
    %v677 = vadd.f32 0.0, %v676
    %v678 = vpop.f32.mrb[0].mxu0
    %v679 = vadd.f32 0.0, %v678
    %v680 = vpop.f32.mrb[0].mxu0
    %v681 = vadd.f32 0.0, %v680
    %682 = vmatprep.mubr.bf16.mxu0 %v589
    %683 = vmatmul.mubr.bf16.gmra.mrb[0].mxu0 %v286
    %v684 = vpop.f32.mrb[0].mxu0
    %v685 = vadd.f32 0.0, %v684
    %v686 = vpop.f32.mrb[0].mxu0
    %v687 = vadd.f32 0.0, %v686
    %v688 = vpop.f32.mrb[0].mxu0
    %v689 = vadd.f32 0.0, %v688
    %v690 = vpop.f32.mrb[0].mxu0
    %v691 = vadd.f32 0.0, %v690
    %692 = vmatprep.mubr.bf16.mxu0 %v592
    %693 = vmatmul.mubr.bf16.gmra.mrb[0].mxu0 %v288
    %v694 = vpop.f32.mrb[0].mxu0
    %v695 = vadd.f32 0.0, %v694
    %v696 = vpop.f32.mrb[0].mxu0
    %v697 = vadd.f32 0.0, %v696
    %v698 = vpop.f32.mrb[0].mxu0
    %v699 = vadd.f32 0.0, %v698
    %v700 = vpop.f32.mrb[0].mxu0
    %v701 = vadd.f32 0.0, %v700
    %702 = vmatprep.mubr.bf16.mxu0 %v595
    %703 = vmatmul.mubr.bf16.gmra.mrb[0].mxu0 %v290
    %v704 = vpop.f32.mrb[0].mxu0
    %v705 = vadd.f32 0.0, %v704
    %v706 = vpop.f32.mrb[0].mxu0
    %v707 = vadd.f32 0.0, %v706
    %v708 = vpop.f32.mrb[0].mxu0
    %v709 = vadd.f32 0.0, %v708
    %v710 = vpop.f32.mrb[0].mxu0
    %v711 = vadd.f32 0.0, %v710
    %712 = vmatprep.mubr.bf16.mxu0 %v598
    %713 = vmatmul.mubr.bf16.gmra.mrb[0].mxu0 %v292
    %v714 = vpop.f32.mrb[0].mxu0
    %v715 = vadd.f32 0.0, %v714
    %v716 = vpop.f32.mrb[0].mxu0
    %v717 = vadd.f32 0.0, %v716
    %v718 = vpop.f32.mrb[0].mxu0
    %v719 = vadd.f32 0.0, %v718
    %v720 = vpop.f32.mrb[0].mxu0
    %v721 = vadd.f32 0.0, %v720
    %722 = vmatprep.mubr.bf16.mxu0 %v601
    %723 = vmatmul.mubr.bf16.gmra.mrb[0].mxu0 %v294
    %v724 = vpop.f32.mrb[0].mxu0
    %v725 = vadd.f32 0.0, %v724
    %v726 = vpop.f32.mrb[0].mxu0
    %v727 = vadd.f32 0.0, %v726
    %v728 = vpop.f32.mrb[0].mxu0
    %v729 = vadd.f32 0.0, %v728
    %v730 = vpop.f32.mrb[0].mxu0
    %v731 = vadd.f32 0.0, %v730
    %732 = vmatprep.mubr.bf16.mxu0 %v604
    %733 = vmatmul.mubr.bf16.gmra.mrb[0].mxu0 %v296
    %v734 = vpop.f32.mrb[0].mxu0
    %v735 = vadd.f32 0.0, %v734
    %v736 = vpop.f32.mrb[0].mxu0
    %v737 = vadd.f32 0.0, %v736
    %v738 = vpop.f32.mrb[0].mxu0
    %v739 = vadd.f32 0.0, %v738
    %v740 = vpop.f32.mrb[0].mxu0
    %v741 = vadd.f32 0.0, %v740
    %742 = vmatprep.mubr.bf16.mxu0 %v607
    %743 = vmatmul.mubr.bf16.gmra.mrb[0].mxu0 %v298
    %v744 = vpop.f32.mrb[0].mxu0
    %v745 = vadd.f32 0.0, %v744
    %v746 = vpop.f32.mrb[0].mxu0
    %v747 = vadd.f32 0.0, %v746
    %v748 = vpop.f32.mrb[0].mxu0
    %v749 = vadd.f32 0.0, %v748
    %v750 = vpop.f32.mrb[0].mxu0
    %v751 = vadd.f32 0.0, %v750
    %752 = vmatprep.mubr.bf16.mxu0 %v610
    %753 = vmatmul.mubr.bf16.gmra.mrb[0].mxu0 %v300
    %v754 = vpop.f32.mrb[0].mxu0
    %v755 = vadd.f32 0.0, %v754
    %v756 = vpop.f32.mrb[0].mxu0
    %v757 = vadd.f32 0.0, %v756
    %v758 = vpop.f32.mrb[0].mxu0
    %v759 = vadd.f32 0.0, %v758
    %v760 = vpop.f32.mrb[0].mxu0
    %v761 = vadd.f32 0.0, %v760
    %762 = vmatprep.mubr.bf16.mxu0 %v613
    %763 = vmatmul.mubr.bf16.gmra.mrb[0].mxu0 %v302
    %v764 = vpop.f32.mrb[0].mxu0
    %v765 = vadd.f32 0.0, %v764
    %v766 = vpop.f32.mrb[0].mxu0
    %v767 = vadd.f32 0.0, %v766
    %v768 = vpop.f32.mrb[0].mxu0
    %v769 = vadd.f32 0.0, %v768
    %v770 = vpop.f32.mrb[0].mxu0
    %v771 = vadd.f32 0.0, %v770
    %772 = vmatprep.mubr.bf16.mxu0 %v616
    %773 = vmatmul.mubr.bf16.gmra.mrb[0].mxu0 %v304
    %v774 = vpop.f32.mrb[0].mxu0
    %v775 = vadd.f32 0.0, %v774
    %v776 = vpop.f32.mrb[0].mxu0
    %v777 = vadd.f32 0.0, %v776
    %v778 = vpop.f32.mrb[0].mxu0
    %v779 = vadd.f32 0.0, %v778
    %v780 = vpop.f32.mrb[0].mxu0
    %v781 = vadd.f32 0.0, %v780
    %782 = vmatprep.mubr.bf16.mxu0 %v619
    %783 = vmatmul.mubr.bf16.gmra.mrb[0].mxu0 %v306
    %v784 = vpop.f32.mrb[0].mxu0
    %v785 = vadd.f32 0.0, %v784
    %v786 = vpop.f32.mrb[0].mxu0
    %v787 = vadd.f32 0.0, %v786
    %v788 = vpop.f32.mrb[0].mxu0
    %v789 = vadd.f32 0.0, %v788
    %v790 = vpop.f32.mrb[0].mxu0
    %v791 = vadd.f32 0.0, %v790
    %792 = vdwg.mxu0
    %793 = vmatprep.subr.bf16.mxu0 %v485
    %794 = vmatpush1.bf16.msra.mxu0 %v484
    %795 = vmatprep.subr.bf16.mxu0 %v491
    %796 = vmatpush1.bf16.msra.mxu0 %v490
    %797 = vmatprep.subr.bf16.mxu0 %v497
    %798 = vmatpush1.bf16.msra.mxu0 %v496
    %799 = vmatprep.subr.bf16.mxu0 %v503
    %800 = vmatpush1.bf16.msra.mxu0 %v502
    %801 = vmatprep.subr.bf16.mxu0 %v509
    %802 = vmatpush1.bf16.msra.mxu0 %v508
    %803 = vmatprep.subr.bf16.mxu0 %v515
    %804 = vmatpush1.bf16.msra.mxu0 %v514
    %805 = vmatprep.subr.bf16.mxu0 %v521
    %806 = vmatpush1.bf16.msra.mxu0 %v520
    %807 = vmatprep.subr.bf16.mxu0 %v527
    %808 = vmatpush1.bf16.msra.mxu0 %v526
    %809 = vmatprep.subr.bf16.mxu0 %v632
    %810 = vmatpush1.bf16.msra.mxu0 %v629
    %811 = vmatprep.subr.bf16.mxu0 0
    %812 = vmatpush1.bf16.msra.mxu0 0
    %813 = vmatprep.subr.bf16.mxu0 0
    %814 = vmatpush1.bf16.msra.mxu0 0
    %815 = vmatprep.subr.bf16.mxu0 0
    %816 = vmatpush1.bf16.msra.mxu0 0
    %817 = vmatprep.subr.bf16.mxu0 0
    %818 = vmatpush1.bf16.msra.mxu0 0
    %819 = vmatprep.subr.bf16.mxu0 0
    %820 = vmatpush1.bf16.msra.mxu0 0
    %821 = vmatprep.subr.bf16.mxu0 0
    %822 = vmatpush1.bf16.msra.mxu0 0
    %823 = vmatprep.subr.bf16.mxu0 0
    %824 = vmatpush1.bf16.msra.mxu0 0
    %825 = vmatprep.mubr.bf16.mxu0 %v586
    %826 = vmatmul.mubr.bf16.gmra.mrb[0].mxu0 %v284
    %v827 = vpop.f32.mrb[0].mxu0
    %v828 = vadd.f32 0.0, %v827
    %v829 = vpop.f32.mrb[0].mxu0
    %v830 = vadd.f32 0.0, %v829
    %v831 = vpop.f32.mrb[0].mxu0
    %v832 = vadd.f32 0.0, %v831
    %v833 = vpop.f32.mrb[0].mxu0
    %v834 = vadd.f32 0.0, %v833
    %835 = vmatprep.mubr.bf16.mxu0 %v589
    %836 = vmatmul.mubr.bf16.gmra.mrb[0].mxu0 %v286
    %v837 = vpop.f32.mrb[0].mxu0
    %v838 = vadd.f32 0.0, %v837
    %v839 = vpop.f32.mrb[0].mxu0
    %v840 = vadd.f32 0.0, %v839
    %v841 = vpop.f32.mrb[0].mxu0
    %v842 = vadd.f32 0.0, %v841
    %v843 = vpop.f32.mrb[0].mxu0
    %v844 = vadd.f32 0.0, %v843
    %845 = vmatprep.mubr.bf16.mxu0 %v592
    %846 = vmatmul.mubr.bf16.gmra.mrb[0].mxu0 %v288
    %v847 = vpop.f32.mrb[0].mxu0
    %v848 = vadd.f32 0.0, %v847
    %v849 = vpop.f32.mrb[0].mxu0
    %v850 = vadd.f32 0.0, %v849
    %v851 = vpop.f32.mrb[0].mxu0
    %v852 = vadd.f32 0.0, %v851
    %v853 = vpop.f32.mrb[0].mxu0
    %v854 = vadd.f32 0.0, %v853
    %855 = vmatprep.mubr.bf16.mxu0 %v595
    %856 = vmatmul.mubr.bf16.gmra.mrb[0].mxu0 %v290
    %v857 = vpop.f32.mrb[0].mxu0
    %v858 = vadd.f32 0.0, %v857
    %v859 = vpop.f32.mrb[0].mxu0
    %v860 = vadd.f32 0.0, %v859
    %v861 = vpop.f32.mrb[0].mxu0
    %v862 = vadd.f32 0.0, %v861
    %v863 = vpop.f32.mrb[0].mxu0
    %v864 = vadd.f32 0.0, %v863
    %865 = vmatprep.mubr.bf16.mxu0 %v598
    %866 = vmatmul.mubr.bf16.gmra.mrb[0].mxu0 %v292
    %v867 = vpop.f32.mrb[0].mxu0
    %v868 = vadd.f32 0.0, %v867
    %v869 = vpop.f32.mrb[0].mxu0
    %v870 = vadd.f32 0.0, %v869
    %v871 = vpop.f32.mrb[0].mxu0
    %v872 = vadd.f32 0.0, %v871
    %v873 = vpop.f32.mrb[0].mxu0
    %v874 = vadd.f32 0.0, %v873
    %875 = vmatprep.mubr.bf16.mxu0 %v601
    %876 = vmatmul.mubr.bf16.gmra.mrb[0].mxu0 %v294
    %v877 = vpop.f32.mrb[0].mxu0
    %v878 = vadd.f32 0.0, %v877
    %v879 = vpop.f32.mrb[0].mxu0
    %v880 = vadd.f32 0.0, %v879
    %v881 = vpop.f32.mrb[0].mxu0
    %v882 = vadd.f32 0.0, %v881
    %v883 = vpop.f32.mrb[0].mxu0
    %v884 = vadd.f32 0.0, %v883
    %885 = vmatprep.mubr.bf16.mxu0 %v604
    %886 = vmatmul.mubr.bf16.gmra.mrb[0].mxu0 %v296
    %v887 = vpop.f32.mrb[0].mxu0
    %v888 = vadd.f32 0.0, %v887
    %v889 = vpop.f32.mrb[0].mxu0
    %v890 = vadd.f32 0.0, %v889
    %v891 = vpop.f32.mrb[0].mxu0
    %v892 = vadd.f32 0.0, %v891
    %v893 = vpop.f32.mrb[0].mxu0
    %v894 = vadd.f32 0.0, %v893
    %895 = vmatprep.mubr.bf16.mxu0 %v607
    %896 = vmatmul.mubr.bf16.gmra.mrb[0].mxu0 %v298
    %v897 = vpop.f32.mrb[0].mxu0
    %v898 = vadd.f32 0.0, %v897
    %v899 = vpop.f32.mrb[0].mxu0
    %v900 = vadd.f32 0.0, %v899
    %v901 = vpop.f32.mrb[0].mxu0
    %v902 = vadd.f32 0.0, %v901
    %v903 = vpop.f32.mrb[0].mxu0
    %v904 = vadd.f32 0.0, %v903
    %905 = vmatprep.mubr.bf16.mxu0 %v610
    %906 = vmatmul.mubr.bf16.gmra.mrb[0].mxu0 %v300
    %v907 = vpop.f32.mrb[0].mxu0
    %v908 = vadd.f32 0.0, %v907
    %v909 = vpop.f32.mrb[0].mxu0
    %v910 = vadd.f32 0.0, %v909
    %v911 = vpop.f32.mrb[0].mxu0
    %v912 = vadd.f32 0.0, %v911
    %v913 = vpop.f32.mrb[0].mxu0
    %v914 = vadd.f32 0.0, %v913
    %915 = vmatprep.mubr.bf16.mxu0 %v613
    %916 = vmatmul.mubr.bf16.gmra.mrb[0].mxu0 %v302
    %v917 = vpop.f32.mrb[0].mxu0
    %v918 = vadd.f32 0.0, %v917
    %v919 = vpop.f32.mrb[0].mxu0
    %v920 = vadd.f32 0.0, %v919
    %v921 = vpop.f32.mrb[0].mxu0
    %v922 = vadd.f32 0.0, %v921
    %v923 = vpop.f32.mrb[0].mxu0
    %v924 = vadd.f32 0.0, %v923
    %925 = vmatprep.mubr.bf16.mxu0 %v616
    %926 = vmatmul.mubr.bf16.gmra.mrb[0].mxu0 %v304
    %v927 = vpop.f32.mrb[0].mxu0
    %v928 = vadd.f32 0.0, %v927
    %v929 = vpop.f32.mrb[0].mxu0
    %v930 = vadd.f32 0.0, %v929
    %v931 = vpop.f32.mrb[0].mxu0
    %v932 = vadd.f32 0.0, %v931
    %v933 = vpop.f32.mrb[0].mxu0
    %v934 = vadd.f32 0.0, %v933
    %935 = vmatprep.mubr.bf16.mxu0 %v619
    %936 = vmatmul.mubr.bf16.gmra.mrb[0].mxu0 %v306
    %v937 = vpop.f32.mrb[0].mxu0
    %v938 = vadd.f32 0.0, %v937
    %v939 = vpop.f32.mrb[0].mxu0
    %v940 = vadd.f32 0.0, %v939
    %v941 = vpop.f32.mrb[0].mxu0
    %v942 = vadd.f32 0.0, %v941
    %v943 = vpop.f32.mrb[0].mxu0
    %v944 = vadd.f32 0.0, %v943
    %945 = vdwg.mxu0
    %946 = vmatprep.subr.bf16.mxu0 %v487
    %947 = vmatpush1.bf16.msra.mxu0 %v486
    %948 = vmatprep.subr.bf16.mxu0 %v493
    %949 = vmatpush1.bf16.msra.mxu0 %v492
    %950 = vmatprep.subr.bf16.mxu0 %v499
    %951 = vmatpush1.bf16.msra.mxu0 %v498
    %952 = vmatprep.subr.bf16.mxu0 %v505
    %953 = vmatpush1.bf16.msra.mxu0 %v504
    %954 = vmatprep.subr.bf16.mxu0 %v511
    %955 = vmatpush1.bf16.msra.mxu0 %v510
    %956 = vmatprep.subr.bf16.mxu0 %v517
    %957 = vmatpush1.bf16.msra.mxu0 %v516
    %958 = vmatprep.subr.bf16.mxu0 %v523
    %959 = vmatpush1.bf16.msra.mxu0 %v522
    %960 = vmatprep.subr.bf16.mxu0 %v529
    %961 = vmatpush1.bf16.msra.mxu0 %v528
    %962 = vmatprep.subr.bf16.mxu0 %v638
    %963 = vmatpush1.bf16.msra.mxu0 %v635
    %964 = vmatprep.subr.bf16.mxu0 0
    %965 = vmatpush1.bf16.msra.mxu0 0
    %966 = vmatprep.subr.bf16.mxu0 0
    %967 = vmatpush1.bf16.msra.mxu0 0
    %968 = vmatprep.subr.bf16.mxu0 0
    %969 = vmatpush1.bf16.msra.mxu0 0
    %970 = vmatprep.subr.bf16.mxu0 0
    %971 = vmatpush1.bf16.msra.mxu0 0
    %972 = vmatprep.subr.bf16.mxu0 0
    %973 = vmatpush1.bf16.msra.mxu0 0
    %974 = vmatprep.subr.bf16.mxu0 0
    %975 = vmatpush1.bf16.msra.mxu0 0
    %976 = vmatprep.subr.bf16.mxu0 0
    %977 = vmatpush1.bf16.msra.mxu0 0
    %978 = vmatprep.mubr.bf16.mxu0 %v586
    %979 = vmatmul.mubr.bf16.gmra.mrb[0].mxu0 %v284
    %v980 = vpop.f32.mrb[0].mxu0
    %v981 = vadd.f32 0.0, %v980
    %v982 = vpop.f32.mrb[0].mxu0
    %v983 = vadd.f32 0.0, %v982
    %v984 = vpop.f32.mrb[0].mxu0
    %v985 = vadd.f32 0.0, %v984
    %v986 = vpop.f32.mrb[0].mxu0
    %v987 = vadd.f32 0.0, %v986
    %988 = vmatprep.mubr.bf16.mxu0 %v589
    %989 = vmatmul.mubr.bf16.gmra.mrb[0].mxu0 %v286
    %v990 = vpop.f32.mrb[0].mxu0
    %v991 = vadd.f32 0.0, %v990
    %v992 = vpop.f32.mrb[0].mxu0
    %v993 = vadd.f32 0.0, %v992
    %v994 = vpop.f32.mrb[0].mxu0
    %v995 = vadd.f32 0.0, %v994
    %v996 = vpop.f32.mrb[0].mxu0
    %v997 = vadd.f32 0.0, %v996
    %998 = vmatprep.mubr.bf16.mxu0 %v592
    %999 = vmatmul.mubr.bf16.gmra.mrb[0].mxu0 %v288
    %v1000 = vpop.f32.mrb[0].mxu0
    %v1001 = vadd.f32 0.0, %v1000
    %v1002 = vpop.f32.mrb[0].mxu0
    %v1003 = vadd.f32 0.0, %v1002
    %v1004 = vpop.f32.mrb[0].mxu0
    %v1005 = vadd.f32 0.0, %v1004
    %v1006 = vpop.f32.mrb[0].mxu0
    %v1007 = vadd.f32 0.0, %v1006
    %1008 = vmatprep.mubr.bf16.mxu0 %v595
    %1009 = vmatmul.mubr.bf16.gmra.mrb[0].mxu0 %v290
    %v1010 = vpop.f32.mrb[0].mxu0
    %v1011 = vadd.f32 0.0, %v1010
    %v1012 = vpop.f32.mrb[0].mxu0
    %v1013 = vadd.f32 0.0, %v1012
    %v1014 = vpop.f32.mrb[0].mxu0
    %v1015 = vadd.f32 0.0, %v1014
    %v1016 = vpop.f32.mrb[0].mxu0
    %v1017 = vadd.f32 0.0, %v1016
    %1018 = vmatprep.mubr.bf16.mxu0 %v598
    %1019 = vmatmul.mubr.bf16.gmra.mrb[0].mxu0 %v292
    %v1020 = vpop.f32.mrb[0].mxu0
    %v1021 = vadd.f32 0.0, %v1020
    %v1022 = vpop.f32.mrb[0].mxu0
    %v1023 = vadd.f32 0.0, %v1022
    %v1024 = vpop.f32.mrb[0].mxu0
    %v1025 = vadd.f32 0.0, %v1024
    %v1026 = vpop.f32.mrb[0].mxu0
    %v1027 = vadd.f32 0.0, %v1026
    %1028 = vmatprep.mubr.bf16.mxu0 %v601
    %1029 = vmatmul.mubr.bf16.gmra.mrb[0].mxu0 %v294
    %v1030 = vpop.f32.mrb[0].mxu0
    %v1031 = vadd.f32 0.0, %v1030
    %v1032 = vpop.f32.mrb[0].mxu0
    %v1033 = vadd.f32 0.0, %v1032
    %v1034 = vpop.f32.mrb[0].mxu0
    %v1035 = vadd.f32 0.0, %v1034
    %v1036 = vpop.f32.mrb[0].mxu0
    %v1037 = vadd.f32 0.0, %v1036
    %1038 = vmatprep.mubr.bf16.mxu0 %v604
    %1039 = vmatmul.mubr.bf16.gmra.mrb[0].mxu0 %v296
    %v1040 = vpop.f32.mrb[0].mxu0
    %v1041 = vadd.f32 0.0, %v1040
    %v1042 = vpop.f32.mrb[0].mxu0
    %v1043 = vadd.f32 0.0, %v1042
    %v1044 = vpop.f32.mrb[0].mxu0
    %v1045 = vadd.f32 0.0, %v1044
    %v1046 = vpop.f32.mrb[0].mxu0
    %v1047 = vadd.f32 0.0, %v1046
    %1048 = vmatprep.mubr.bf16.mxu0 %v607
    %1049 = vmatmul.mubr.bf16.gmra.mrb[0].mxu0 %v298
    %v1050 = vpop.f32.mrb[0].mxu0
    %v1051 = vadd.f32 0.0, %v1050
    %v1052 = vpop.f32.mrb[0].mxu0
    %v1053 = vadd.f32 0.0, %v1052
    %v1054 = vpop.f32.mrb[0].mxu0
    %v1055 = vadd.f32 0.0, %v1054
    %v1056 = vpop.f32.mrb[0].mxu0
    %v1057 = vadd.f32 0.0, %v1056
    %1058 = vmatprep.mubr.bf16.mxu0 %v610
    %1059 = vmatmul.mubr.bf16.gmra.mrb[0].mxu0 %v300
    %v1060 = vpop.f32.mrb[0].mxu0
    %v1061 = vadd.f32 0.0, %v1060
    %v1062 = vpop.f32.mrb[0].mxu0
    %v1063 = vadd.f32 0.0, %v1062
    %v1064 = vpop.f32.mrb[0].mxu0
    %v1065 = vadd.f32 0.0, %v1064
    %v1066 = vpop.f32.mrb[0].mxu0
    %v1067 = vadd.f32 0.0, %v1066
    %1068 = vmatprep.mubr.bf16.mxu0 %v613
    %1069 = vmatmul.mubr.bf16.gmra.mrb[0].mxu0 %v302
    %v1070 = vpop.f32.mrb[0].mxu0
    %v1071 = vadd.f32 0.0, %v1070
    %v1072 = vpop.f32.mrb[0].mxu0
    %v1073 = vadd.f32 0.0, %v1072
    %v1074 = vpop.f32.mrb[0].mxu0
    %v1075 = vadd.f32 0.0, %v1074
    %v1076 = vpop.f32.mrb[0].mxu0
    %v1077 = vadd.f32 0.0, %v1076
    %1078 = vmatprep.mubr.bf16.mxu0 %v616
    %1079 = vmatmul.mubr.bf16.gmra.mrb[0].mxu0 %v304
    %v1080 = vpop.f32.mrb[0].mxu0
    %v1081 = vadd.f32 0.0, %v1080
    %v1082 = vpop.f32.mrb[0].mxu0
    %v1083 = vadd.f32 0.0, %v1082
    %v1084 = vpop.f32.mrb[0].mxu0
    %v1085 = vadd.f32 0.0, %v1084
    %v1086 = vpop.f32.mrb[0].mxu0
    %v1087 = vadd.f32 0.0, %v1086
    %1088 = vmatprep.mubr.bf16.mxu0 %v619
    %1089 = vmatmul.mubr.bf16.gmra.mrb[0].mxu0 %v306
    %v1090 = vpop.f32.mrb[0].mxu0
    %v1091 = vadd.f32 0.0, %v1090
    %v1092 = vpop.f32.mrb[0].mxu0
    %v1093 = vadd.f32 0.0, %v1092
    %v1094 = vpop.f32.mrb[0].mxu0
    %v1095 = vadd.f32 0.0, %v1094
    %v1096 = vpop.f32.mrb[0].mxu0
    %v1097 = vadd.f32 0.0, %v1096
    %1098 = vdwg.mxu0
    %v1099 = vmax.f32 %v675, %v735
    %v1100 = vmax.f32 %v677, %v737
    %v1101 = vmax.f32 %v828, %v888
    %v1102 = vmax.f32 %v830, %v890
    %v1103 = vmax.f32 %v981, %v1041
    %v1104 = vmax.f32 %v983, %v1043
    %v1105 = vmax.f32 %v679, %v739
    %v1106 = vmax.f32 %v681, %v741
    %v1107 = vmax.f32 %v832, %v892
    %v1108 = vmax.f32 %v834, %v894
    %v1109 = vmax.f32 %v985, %v1045
    %v1110 = vmax.f32 %v987, %v1047
    %v1111 = vmax.f32 %v685, %v745
    %v1112 = vmax.f32 %v687, %v747
    %v1113 = vmax.f32 %v838, %v898
    %v1114 = vmax.f32 %v840, %v900
    %v1115 = vmax.f32 %v991, %v1051
    %v1116 = vmax.f32 %v993, %v1053
    %v1117 = vmax.f32 %v689, %v749
    %v1118 = vmax.f32 %v691, %v751
    %v1119 = vmax.f32 %v842, %v902
    %v1120 = vmax.f32 %v844, %v904
    %v1121 = vmax.f32 %v995, %v1055
    %v1122 = vmax.f32 %v997, %v1057
    %v1123 = vmax.f32 %v695, %v755
    %v1124 = vmax.f32 %v697, %v757
    %v1125 = vmax.f32 %v848, %v908
    %v1126 = vmax.f32 %v850, %v910
    %v1127 = vmax.f32 %v1001, %v1061
    %v1128 = vmax.f32 %v1003, %v1063
    %v1129 = vmax.f32 %v699, %v759
    %v1130 = vmax.f32 %v701, %v761
    %v1131 = vmax.f32 %v852, %v912
    %v1132 = vmax.f32 %v854, %v914
    %v1133 = vmax.f32 %v1005, %v1065
    %v1134 = vmax.f32 %v1007, %v1067
    %v1135 = vmax.f32 %v705, %v765
    %v1136 = vmax.f32 %v707, %v767
    %v1137 = vmax.f32 %v858, %v918
    %v1138 = vmax.f32 %v860, %v920
    %v1139 = vmax.f32 %v1011, %v1071
    %v1140 = vmax.f32 %v1013, %v1073
    %v1141 = vmax.f32 %v709, %v769
    %v1142 = vmax.f32 %v711, %v771
    %v1143 = vmax.f32 %v862, %v922
    %v1144 = vmax.f32 %v864, %v924
    %v1145 = vmax.f32 %v1015, %v1075
    %v1146 = vmax.f32 %v1017, %v1077
    %v1147 = vmax.f32 %v715, %v775
    %v1148 = vmax.f32 %v717, %v777
    %v1149 = vmax.f32 %v868, %v928
    %v1150 = vmax.f32 %v870, %v930
    %v1151 = vmax.f32 %v1021, %v1081
    %v1152 = vmax.f32 %v1023, %v1083
    %v1153 = vmax.f32 %v719, %v779
    %v1154 = vmax.f32 %v721, %v781
    %v1155 = vmax.f32 %v872, %v932
    %v1156 = vmax.f32 %v874, %v934
    %v1157 = vmax.f32 %v1025, %v1085
    %v1158 = vmax.f32 %v1027, %v1087
    %v1159 = vmax.f32 %v725, %v785
    %v1160 = vmax.f32 %v727, %v787
    %v1161 = vmax.f32 %v878, %v938
    %v1162 = vmax.f32 %v880, %v940
    %v1163 = vmax.f32 %v1031, %v1091
    %v1164 = vmax.f32 %v1033, %v1093
    %v1165 = vmax.f32 %v729, %v789
    %v1166 = vmax.f32 %v731, %v791
    %v1167 = vmax.f32 %v882, %v942
    %v1168 = vmax.f32 %v884, %v944
    %v1169 = vmax.f32 %v1035, %v1095
    %v1170 = vmax.f32 %v1037, %v1097
    %v1171 = vmax.f32 %v1099, %v1102
    %v1172 = vmax.f32 %v1100, %v1103
    %v1173 = vmax.f32 %v1101, %v1104
    %v1174 = vmax.f32 %v1105, %v1108
    %v1175 = vmax.f32 %v1106, %v1109
    %v1176 = vmax.f32 %v1107, %v1110
    %v1177 = vmax.f32 %v1111, %v1114
    %v1178 = vmax.f32 %v1112, %v1115
    %v1179 = vmax.f32 %v1113, %v1116
    %v1180 = vmax.f32 %v1117, %v1120
    %v1181 = vmax.f32 %v1118, %v1121
    %v1182 = vmax.f32 %v1119, %v1122
    %v1183 = vmax.f32 %v1123, %v1126
    %v1184 = vmax.f32 %v1124, %v1127
    %v1185 = vmax.f32 %v1125, %v1128
    %v1186 = vmax.f32 %v1129, %v1132
    %v1187 = vmax.f32 %v1130, %v1133
    %v1188 = vmax.f32 %v1131, %v1134
    %v1189 = vmax.f32 %v1135, %v1138
    %v1190 = vmax.f32 %v1136, %v1139
    %v1191 = vmax.f32 %v1137, %v1140
    %v1192 = vmax.f32 %v1141, %v1144
    %v1193 = vmax.f32 %v1142, %v1145
    %v1194 = vmax.f32 %v1143, %v1146
    %v1195 = vmax.f32 %v1147, %v1150
    %v1196 = vmax.f32 %v1148, %v1151
    %v1197 = vmax.f32 %v1149, %v1152
    %v1198 = vmax.f32 %v1153, %v1156
    %v1199 = vmax.f32 %v1154, %v1157
    %v1200 = vmax.f32 %v1155, %v1158
    %v1201 = vmax.f32 %v1159, %v1162
    %v1202 = vmax.f32 %v1160, %v1163
    %v1203 = vmax.f32 %v1161, %v1164
    %v1204 = vmax.f32 %v1165, %v1168
    %v1205 = vmax.f32 %v1166, %v1169
    %v1206 = vmax.f32 %v1167, %v1170
    %v1207 = vld [vmem:[#allocation4] sm:$0x7]
    %v1209 = vlaneseq
    %v1210 = vshrl.u32 %v1209, 7
    %v1211 = vsub.s32 0, %v1210
    %v1212 = vrot.slane %v1207, %v1211
    %v1213 = vlaneseq
    %v1214 = vshrl.u32 %v1213, 7
    %v1215 = vsub.s32 1, %v1214
    %v1216 = vrot.slane %v1207, %v1215
    %v1217 = vlaneseq
    %v1218 = vshrl.u32 %v1217, 7
    %v1219 = vsub.s32 2, %v1218
    %v1220 = vrot.slane %v1207, %v1219
    %v1224 = vadd.f32 %v1171, %v1212
    %v1225 = vadd.f32 %v1172, %v1216
    %v1226 = vadd.f32 %v1173, %v1220
    %v1227 = vadd.f32 %v1174, %v1212
    %v1228 = vadd.f32 %v1175, %v1216
    %v1229 = vadd.f32 %v1176, %v1220
    %v1230 = vadd.f32 %v1177, %v1212
    %v1231 = vadd.f32 %v1178, %v1216
    %v1232 = vadd.f32 %v1179, %v1220
    %v1233 = vadd.f32 %v1180, %v1212
    %v1234 = vadd.f32 %v1181, %v1216
    %v1235 = vadd.f32 %v1182, %v1220
    %v1236 = vadd.f32 %v1183, %v1212
    %v1237 = vadd.f32 %v1184, %v1216
    %v1238 = vadd.f32 %v1185, %v1220
    %v1239 = vadd.f32 %v1186, %v1212
    %v1240 = vadd.f32 %v1187, %v1216
    %v1241 = vadd.f32 %v1188, %v1220
    %v1242 = vadd.f32 %v1189, %v1212
    %v1243 = vadd.f32 %v1190, %v1216
    %v1244 = vadd.f32 %v1191, %v1220
    %v1245 = vadd.f32 %v1192, %v1212
    %v1246 = vadd.f32 %v1193, %v1216
    %v1247 = vadd.f32 %v1194, %v1220
    %v1248 = vadd.f32 %v1195, %v1212
    %v1249 = vadd.f32 %v1196, %v1216
    %v1250 = vadd.f32 %v1197, %v1220
    %v1251 = vadd.f32 %v1198, %v1212
    %v1252 = vadd.f32 %v1199, %v1216
    %v1253 = vadd.f32 %v1200, %v1220
    %v1254 = vadd.f32 %v1201, %v1212
    %v1255 = vadd.f32 %v1202, %v1216
    %v1256 = vadd.f32 %v1203, %v1220
    %v1257 = vadd.f32 %v1204, %v1212
    %v1258 = vadd.f32 %v1205, %v1216
    %v1259 = vadd.f32 %v1206, %v1220
    %v1260 = vmax.f32 %v1224, 0.0
    %v1261 = vmax.f32 %v1225, 0.0
    %v1262 = vmax.f32 %v1226, 0.0
    %v1263 = vmax.f32 %v1227, 0.0
    %v1264 = vmax.f32 %v1228, 0.0
    %v1265 = vmax.f32 %v1229, 0.0
    %v1266 = vmax.f32 %v1230, 0.0
    %v1267 = vmax.f32 %v1231, 0.0
    %v1268 = vmax.f32 %v1232, 0.0
    %v1269 = vmax.f32 %v1233, 0.0
    %v1270 = vmax.f32 %v1234, 0.0
    %v1271 = vmax.f32 %v1235, 0.0
    %v1272 = vmax.f32 %v1236, 0.0
    %v1273 = vmax.f32 %v1237, 0.0
    %v1274 = vmax.f32 %v1238, 0.0
    %v1275 = vmax.f32 %v1239, 0.0
    %v1276 = vmax.f32 %v1240, 0.0
    %v1277 = vmax.f32 %v1241, 0.0
    %v1278 = vmax.f32 %v1242, 0.0
    %v1279 = vmax.f32 %v1243, 0.0
    %v1280 = vmax.f32 %v1244, 0.0
    %v1281 = vmax.f32 %v1245, 0.0
    %v1282 = vmax.f32 %v1246, 0.0
    %v1283 = vmax.f32 %v1247, 0.0
    %v1284 = vmax.f32 %v1248, 0.0
    %v1285 = vmax.f32 %v1249, 0.0
    %v1286 = vmax.f32 %v1250, 0.0
    %v1287 = vmax.f32 %v1251, 0.0
    %v1288 = vmax.f32 %v1252, 0.0
    %v1289 = vmax.f32 %v1253, 0.0
    %v1290 = vmax.f32 %v1254, 0.0
    %v1291 = vmax.f32 %v1255, 0.0
    %v1292 = vmax.f32 %v1256, 0.0
    %v1293 = vmax.f32 %v1257, 0.0
    %v1294 = vmax.f32 %v1258, 0.0
    %v1295 = vmax.f32 %v1259, 0.0
    %v1296 = vpack.c.bf16 %v1263, %v1260
    %v1297 = vpack.c.bf16 %v1264, %v1261
    %v1298 = vpack.c.bf16 %v1265, %v1262
    %v1299 = vpack.c.bf16 %v1269, %v1266
    %v1300 = vpack.c.bf16 %v1270, %v1267
    %v1301 = vpack.c.bf16 %v1271, %v1268
    %v1302 = vpack.c.bf16 %v1275, %v1272
    %v1303 = vpack.c.bf16 %v1276, %v1273
    %v1304 = vpack.c.bf16 %v1277, %v1274
    %v1305 = vpack.c.bf16 %v1281, %v1278
    %v1306 = vpack.c.bf16 %v1282, %v1279
    %v1307 = vpack.c.bf16 %v1283, %v1280
    %v1308 = vld [vmem:[#allocation6] sm:$0xff]
    %v1309 = vld [vmem:[#allocation6 + $0x8] sm:$0xff]
    %v1310 = vld [vmem:[#allocation6 + $0x10] sm:$0xff]
    %v1311 = vld [vmem:[#allocation6 + $0x18] sm:$0xff]
    %v1312 = vld [vmem:[#allocation6 + $0x20] sm:$0xff]
    %v1313 = vld [vmem:[#allocation6 + $0x28] sm:$0xff]
    %v1314 = vld [vmem:[#allocation6 + $0x30] sm:$0xff]
    %v1315 = vld [vmem:[#allocation6 + $0x38] sm:$0xff]
    %v1316 = vld [vmem:[#allocation6 + $0x40] sm:$0xff]
    %v1317 = vld [vmem:[#allocation6 + $0x48] sm:$0xff]
    %v1318 = vld [vmem:[#allocation6 + $0x50] sm:$0xff]
    %v1319 = vld [vmem:[#allocation6 + $0x58] sm:$0xff]
    %v1320 = vld [vmem:[#allocation6 + $0x60] sm:$0xff]
    %v1321 = vld [vmem:[#allocation6 + $0x68] sm:$0xff]
    %v1322 = vld [vmem:[#allocation6 + $0x70] sm:$0xff]
    %v1323 = vld [vmem:[#allocation6 + $0x78] sm:$0xff]
    %v1324 = vld [vmem:[#allocation6 + $0x80] sm:$0xff]
    %v1325 = vld [vmem:[#allocation6 + $0x88] sm:$0xff]
    %v1326 = vld [vmem:[#allocation6 + $0x90] sm:$0xff]
    %v1327 = vld [vmem:[#allocation6 + $0x98] sm:$0xff]
    %v1328 = vld [vmem:[#allocation6 + $0xa0] sm:$0xff]
    %v1329 = vld [vmem:[#allocation6 + $0xa8] sm:$0xff]
    %v1330 = vld [vmem:[#allocation6 + $0xb0] sm:$0xff]
    %v1331 = vld [vmem:[#allocation6 + $0xb8] sm:$0xff]
    %v1332 = vld [vmem:[#allocation6 + $0xc0] sm:$0xff]
    %v1333 = vld [vmem:[#allocation6 + $0xc8] sm:$0xff]
    %v1334 = vld [vmem:[#allocation6 + $0xd0] sm:$0xff]
    %v1335 = vld [vmem:[#allocation6 + $0xd8] sm:$0xff]
    %v1336 = vld [vmem:[#allocation6 + $0xe0] sm:$0xff]
    %v1337 = vld [vmem:[#allocation6 + $0xe8] sm:$0xff]
    %v1338 = vld [vmem:[#allocation6 + $0xf0] sm:$0xff]
    %v1339 = vld [vmem:[#allocation6 + $0xf8] sm:$0xff]
    %v1340 = vld [vmem:[#allocation6 + $0x100] sm:$0xff]
    %v1341 = vld [vmem:[#allocation6 + $0x108] sm:$0xff]
    %v1342 = vld [vmem:[#allocation6 + $0x110] sm:$0xff]
    %v1343 = vld [vmem:[#allocation6 + $0x118] sm:$0xff]
    %v1344 = vld [vmem:[#allocation6 + $0x120] sm:$0xff]
    %v1345 = vld [vmem:[#allocation6 + $0x128] sm:$0xff]
    %v1346 = vld [vmem:[#allocation6 + $0x130] sm:$0xff]
    %v1347 = vld [vmem:[#allocation6 + $0x138] sm:$0xff]
    %v1348 = vld [vmem:[#allocation6 + $0x140] sm:$0xff]
    %v1349 = vld [vmem:[#allocation6 + $0x148] sm:$0xff]
    %v1350 = vld [vmem:[#allocation6 + $0x150] sm:$0xff]
    %v1351 = vld [vmem:[#allocation6 + $0x158] sm:$0xff]
    %v1352 = vld [vmem:[#allocation6 + $0x160] sm:$0xff]
    %v1353 = vld [vmem:[#allocation6 + $0x168] sm:$0xff]
    %v1354 = vld [vmem:[#allocation6 + $0x170] sm:$0xff]
    %v1355 = vld [vmem:[#allocation6 + $0x178] sm:$0xff]
    %v1356 = vld [vmem:[#allocation6 + $0x180] sm:$0xff]
    %v1357 = vld [vmem:[#allocation6 + $0x188] sm:$0xff]
    %v1358 = vld [vmem:[#allocation6 + $0x190] sm:$0xff]
    %v1359 = vld [vmem:[#allocation6 + $0x198] sm:$0xff]
    %v1360 = vld [vmem:[#allocation6 + $0x1a0] sm:$0xff]
    %v1361 = vld [vmem:[#allocation6 + $0x1a8] sm:$0xff]
    %v1362 = vld [vmem:[#allocation6 + $0x1b0] sm:$0xff]
    %v1363 = vld [vmem:[#allocation6 + $0x1b8] sm:$0xff]
    %v1364 = vld [vmem:[#allocation6 + $0x1c0] sm:$0xff]
    %v1365 = vld [vmem:[#allocation6 + $0x1c8] sm:$0xff]
    %v1366 = vld [vmem:[#allocation6 + $0x1d0] sm:$0xff]
    %v1367 = vld [vmem:[#allocation6 + $0x1d8] sm:$0xff]
    %v1368 = vld [vmem:[#allocation6 + $0x1e0] sm:$0xff]
    %v1369 = vld [vmem:[#allocation6 + $0x1e8] sm:$0xff]
    %v1370 = vld [vmem:[#allocation6 + $0x1f0] sm:$0xff]
    %v1371 = vld [vmem:[#allocation6 + $0x1f8] sm:$0xff]
    %v1372 = vld [vmem:[#allocation6 + $0x200] sm:$0xff]
    %v1373 = vld [vmem:[#allocation6 + $0x208] sm:$0xff]
    %v1374 = vld [vmem:[#allocation6 + $0x210] sm:$0xff]
    %v1375 = vld [vmem:[#allocation6 + $0x218] sm:$0xff]
    %v1376 = vld [vmem:[#allocation6 + $0x220] sm:$0xff]
    %v1377 = vld [vmem:[#allocation6 + $0x228] sm:$0xff]
    %v1378 = vld [vmem:[#allocation6 + $0x230] sm:$0xff]
    %v1379 = vld [vmem:[#allocation6 + $0x238] sm:$0xff]
    %v1380 = vld [vmem:[#allocation6 + $0x240] sm:$0xff]
    %v1381 = vld [vmem:[#allocation6 + $0x248] sm:$0xff]
    %v1382 = vld [vmem:[#allocation6 + $0x250] sm:$0xff]
    %v1383 = vld [vmem:[#allocation6 + $0x258] sm:$0xff]
    %v1384 = vld [vmem:[#allocation6 + $0x260] sm:$0xff]
    %v1385 = vld [vmem:[#allocation6 + $0x268] sm:$0xff]
    %v1386 = vld [vmem:[#allocation6 + $0x270] sm:$0xff]
    %v1387 = vld [vmem:[#allocation6 + $0x278] sm:$0xff]
    %v1388 = vld [vmem:[#allocation6 + $0x280] sm:$0xff]
    %v1389 = vld [vmem:[#allocation6 + $0x288] sm:$0xff]
    %v1390 = vld [vmem:[#allocation6 + $0x290] sm:$0xff]
    %v1391 = vld [vmem:[#allocation6 + $0x298] sm:$0xff]
    %v1392 = vld [vmem:[#allocation6 + $0x2a0] sm:$0xff]
    %v1393 = vld [vmem:[#allocation6 + $0x2a8] sm:$0xff]
    %v1394 = vld [vmem:[#allocation6 + $0x2b0] sm:$0xff]
    %v1395 = vld [vmem:[#allocation6 + $0x2b8] sm:$0xff]
    %v1396 = vld [vmem:[#allocation6 + $0x2c0] sm:$0xff]
    %v1397 = vld [vmem:[#allocation6 + $0x2c8] sm:$0xff]
    %v1398 = vld [vmem:[#allocation6 + $0x2d0] sm:$0xff]
    %v1399 = vld [vmem:[#allocation6 + $0x2d8] sm:$0xff]
    %v1400 = vld [vmem:[#allocation6 + $0x2e0] sm:$0xff]
    %v1401 = vld [vmem:[#allocation6 + $0x2e8] sm:$0xff]
    %v1402 = vld [vmem:[#allocation6 + $0x2f0] sm:$0xff]
    %v1403 = vld [vmem:[#allocation6 + $0x2f8] sm:$0xff]
    %v1404 = vpack.c.bf16 %v1266, %v1263
    %v1405 = vpack.c.bf16 %v1267, %v1264
    %v1406 = vpack.c.bf16 %v1268, %v1265
    %v1407 = vpack.c.bf16 %v1272, %v1269
    %v1408 = vpack.c.bf16 %v1273, %v1270
    %v1409 = vpack.c.bf16 %v1274, %v1271
    %v1410 = vpack.c.bf16 %v1278, %v1275
    %v1411 = vpack.c.bf16 %v1279, %v1276
    %v1412 = vpack.c.bf16 %v1280, %v1277
    %v1413 = vpack.c.bf16 %v1284, %v1281
    %v1414 = vpack.c.bf16 %v1285, %v1282
    %v1415 = vpack.c.bf16 %v1286, %v1283
    %s1416 = scalar_lea.vmem [#allocation6], 768
    %v1417 = vld [vmem:[%s1416] sm:$0xff]
    %v1418 = vld [vmem:[%s1416 + $0x8] sm:$0xff]
    %v1419 = vld [vmem:[%s1416 + $0x10] sm:$0xff]
    %v1420 = vld [vmem:[%s1416 + $0x18] sm:$0xff]
    %v1421 = vld [vmem:[%s1416 + $0x20] sm:$0xff]
    %v1422 = vld [vmem:[%s1416 + $0x28] sm:$0xff]
    %v1423 = vld [vmem:[%s1416 + $0x30] sm:$0xff]
    %v1424 = vld [vmem:[%s1416 + $0x38] sm:$0xff]
    %v1425 = vld [vmem:[%s1416 + $0x40] sm:$0xff]
    %v1426 = vld [vmem:[%s1416 + $0x48] sm:$0xff]
    %v1427 = vld [vmem:[%s1416 + $0x50] sm:$0xff]
    %v1428 = vld [vmem:[%s1416 + $0x58] sm:$0xff]
    %v1429 = vld [vmem:[%s1416 + $0x60] sm:$0xff]
    %v1430 = vld [vmem:[%s1416 + $0x68] sm:$0xff]
    %v1431 = vld [vmem:[%s1416 + $0x70] sm:$0xff]
    %v1432 = vld [vmem:[%s1416 + $0x78] sm:$0xff]
    %v1433 = vld [vmem:[%s1416 + $0x80] sm:$0xff]
    %v1434 = vld [vmem:[%s1416 + $0x88] sm:$0xff]
    %v1435 = vld [vmem:[%s1416 + $0x90] sm:$0xff]
    %v1436 = vld [vmem:[%s1416 + $0x98] sm:$0xff]
    %v1437 = vld [vmem:[%s1416 + $0xa0] sm:$0xff]
    %v1438 = vld [vmem:[%s1416 + $0xa8] sm:$0xff]
    %v1439 = vld [vmem:[%s1416 + $0xb0] sm:$0xff]
    %v1440 = vld [vmem:[%s1416 + $0xb8] sm:$0xff]
    %v1441 = vld [vmem:[%s1416 + $0xc0] sm:$0xff]
    %v1442 = vld [vmem:[%s1416 + $0xc8] sm:$0xff]
    %v1443 = vld [vmem:[%s1416 + $0xd0] sm:$0xff]
    %v1444 = vld [vmem:[%s1416 + $0xd8] sm:$0xff]
    %v1445 = vld [vmem:[%s1416 + $0xe0] sm:$0xff]
    %v1446 = vld [vmem:[%s1416 + $0xe8] sm:$0xff]
    %v1447 = vld [vmem:[%s1416 + $0xf0] sm:$0xff]
    %v1448 = vld [vmem:[%s1416 + $0xf8] sm:$0xff]
    %v1449 = vld [vmem:[%s1416 + $0x100] sm:$0xff]
    %v1450 = vld [vmem:[%s1416 + $0x108] sm:$0xff]
    %v1451 = vld [vmem:[%s1416 + $0x110] sm:$0xff]
    %v1452 = vld [vmem:[%s1416 + $0x118] sm:$0xff]
    %v1453 = vld [vmem:[%s1416 + $0x120] sm:$0xff]
    %v1454 = vld [vmem:[%s1416 + $0x128] sm:$0xff]
    %v1455 = vld [vmem:[%s1416 + $0x130] sm:$0xff]
    %v1456 = vld [vmem:[%s1416 + $0x138] sm:$0xff]
    %v1457 = vld [vmem:[%s1416 + $0x140] sm:$0xff]
    %v1458 = vld [vmem:[%s1416 + $0x148] sm:$0xff]
    %v1459 = vld [vmem:[%s1416 + $0x150] sm:$0xff]
    %v1460 = vld [vmem:[%s1416 + $0x158] sm:$0xff]
    %v1461 = vld [vmem:[%s1416 + $0x160] sm:$0xff]
    %v1462 = vld [vmem:[%s1416 + $0x168] sm:$0xff]
    %v1463 = vld [vmem:[%s1416 + $0x170] sm:$0xff]
    %v1464 = vld [vmem:[%s1416 + $0x178] sm:$0xff]
    %v1465 = vld [vmem:[%s1416 + $0x180] sm:$0xff]
    %v1466 = vld [vmem:[%s1416 + $0x188] sm:$0xff]
    %v1467 = vld [vmem:[%s1416 + $0x190] sm:$0xff]
    %v1468 = vld [vmem:[%s1416 + $0x198] sm:$0xff]
    %v1469 = vld [vmem:[%s1416 + $0x1a0] sm:$0xff]
    %v1470 = vld [vmem:[%s1416 + $0x1a8] sm:$0xff]
    %v1471 = vld [vmem:[%s1416 + $0x1b0] sm:$0xff]
    %v1472 = vld [vmem:[%s1416 + $0x1b8] sm:$0xff]
    %v1473 = vld [vmem:[%s1416 + $0x1c0] sm:$0xff]
    %v1474 = vld [vmem:[%s1416 + $0x1c8] sm:$0xff]
    %v1475 = vld [vmem:[%s1416 + $0x1d0] sm:$0xff]
    %v1476 = vld [vmem:[%s1416 + $0x1d8] sm:$0xff]
    %v1477 = vld [vmem:[%s1416 + $0x1e0] sm:$0xff]
    %v1478 = vld [vmem:[%s1416 + $0x1e8] sm:$0xff]
    %v1479 = vld [vmem:[%s1416 + $0x1f0] sm:$0xff]
    %v1480 = vld [vmem:[%s1416 + $0x1f8] sm:$0xff]
    %v1481 = vld [vmem:[%s1416 + $0x200] sm:$0xff]
    %v1482 = vld [vmem:[%s1416 + $0x208] sm:$0xff]
    %v1483 = vld [vmem:[%s1416 + $0x210] sm:$0xff]
    %v1484 = vld [vmem:[%s1416 + $0x218] sm:$0xff]
    %v1485 = vld [vmem:[%s1416 + $0x220] sm:$0xff]
    %v1486 = vld [vmem:[%s1416 + $0x228] sm:$0xff]
    %v1487 = vld [vmem:[%s1416 + $0x230] sm:$0xff]
    %v1488 = vld [vmem:[%s1416 + $0x238] sm:$0xff]
    %v1489 = vld [vmem:[%s1416 + $0x240] sm:$0xff]
    %v1490 = vld [vmem:[%s1416 + $0x248] sm:$0xff]
    %v1491 = vld [vmem:[%s1416 + $0x250] sm:$0xff]
    %v1492 = vld [vmem:[%s1416 + $0x258] sm:$0xff]
    %v1493 = vld [vmem:[%s1416 + $0x260] sm:$0xff]
    %v1494 = vld [vmem:[%s1416 + $0x268] sm:$0xff]
    %v1495 = vld [vmem:[%s1416 + $0x270] sm:$0xff]
    %v1496 = vld [vmem:[%s1416 + $0x278] sm:$0xff]
    %v1497 = vld [vmem:[%s1416 + $0x280] sm:$0xff]
    %v1498 = vld [vmem:[%s1416 + $0x288] sm:$0xff]
    %v1499 = vld [vmem:[%s1416 + $0x290] sm:$0xff]
    %v1500 = vld [vmem:[%s1416 + $0x298] sm:$0xff]
    %v1501 = vld [vmem:[%s1416 + $0x2a0] sm:$0xff]
    %v1502 = vld [vmem:[%s1416 + $0x2a8] sm:$0xff]
    %v1503 = vld [vmem:[%s1416 + $0x2b0] sm:$0xff]
    %v1504 = vld [vmem:[%s1416 + $0x2b8] sm:$0xff]
    %v1505 = vld [vmem:[%s1416 + $0x2c0] sm:$0xff]
    %v1506 = vld [vmem:[%s1416 + $0x2c8] sm:$0xff]
    %v1507 = vld [vmem:[%s1416 + $0x2d0] sm:$0xff]
    %v1508 = vld [vmem:[%s1416 + $0x2d8] sm:$0xff]
    %v1509 = vld [vmem:[%s1416 + $0x2e0] sm:$0xff]
    %v1510 = vld [vmem:[%s1416 + $0x2e8] sm:$0xff]
    %v1511 = vld [vmem:[%s1416 + $0x2f0] sm:$0xff]
    %v1512 = vld [vmem:[%s1416 + $0x2f8] sm:$0xff]
    %v1609 = vunpack.c.l.b16 %v1417
    %v1610 = vunpack.c.h.b16 %v1417
    %v1611 = vunpack.c.l.b16 %v1418
    %v1612 = vunpack.c.h.b16 %v1418
    %v1613 = vunpack.c.l.b16 %v1419
    %v1614 = vunpack.c.h.b16 %v1419
    %v1615 = vunpack.c.l.b16 %v1420
    %v1616 = vunpack.c.h.b16 %v1420
    %v1617 = vunpack.c.l.b16 %v1421
    %v1618 = vunpack.c.h.b16 %v1421
    %v1619 = vunpack.c.l.b16 %v1422
    %v1620 = vunpack.c.h.b16 %v1422
    %v1621 = vunpack.c.l.b16 %v1423
    %v1622 = vunpack.c.h.b16 %v1423
    %v1623 = vunpack.c.l.b16 %v1424
    %v1624 = vunpack.c.h.b16 %v1424
    %v1625 = vunpack.c.l.b16 %v1425
    %v1626 = vunpack.c.h.b16 %v1425
    %v1627 = vunpack.c.l.b16 %v1426
    %v1628 = vunpack.c.h.b16 %v1426
    %v1629 = vunpack.c.l.b16 %v1427
    %v1630 = vunpack.c.h.b16 %v1427
    %v1631 = vunpack.c.l.b16 %v1428
    %v1632 = vunpack.c.h.b16 %v1428
    %v1633 = vunpack.c.l.b16 %v1429
    %v1634 = vunpack.c.h.b16 %v1429
    %v1635 = vunpack.c.l.b16 %v1430
    %v1636 = vunpack.c.h.b16 %v1430
    %v1637 = vunpack.c.l.b16 %v1431
    %v1638 = vunpack.c.h.b16 %v1431
    %v1639 = vunpack.c.l.b16 %v1432
    %v1640 = vunpack.c.h.b16 %v1432
    %v1641 = vunpack.c.l.b16 %v1433
    %v1642 = vunpack.c.h.b16 %v1433
    %v1643 = vunpack.c.l.b16 %v1434
    %v1644 = vunpack.c.h.b16 %v1434
    %v1645 = vunpack.c.l.b16 %v1435
    %v1646 = vunpack.c.h.b16 %v1435
    %v1647 = vunpack.c.l.b16 %v1436
    %v1648 = vunpack.c.h.b16 %v1436
    %v1649 = vunpack.c.l.b16 %v1437
    %v1650 = vunpack.c.h.b16 %v1437
    %v1651 = vunpack.c.l.b16 %v1438
    %v1652 = vunpack.c.h.b16 %v1438
    %v1653 = vunpack.c.l.b16 %v1439
    %v1654 = vunpack.c.h.b16 %v1439
    %v1655 = vunpack.c.l.b16 %v1440
    %v1656 = vunpack.c.h.b16 %v1440
    %v1657 = vunpack.c.l.b16 %v1441
    %v1658 = vunpack.c.h.b16 %v1441
    %v1659 = vunpack.c.l.b16 %v1442
    %v1660 = vunpack.c.h.b16 %v1442
    %v1661 = vunpack.c.l.b16 %v1443
    %v1662 = vunpack.c.h.b16 %v1443
    %v1663 = vunpack.c.l.b16 %v1444
    %v1664 = vunpack.c.h.b16 %v1444
    %v1665 = vunpack.c.l.b16 %v1445
    %v1666 = vunpack.c.h.b16 %v1445
    %v1667 = vunpack.c.l.b16 %v1446
    %v1668 = vunpack.c.h.b16 %v1446
    %v1669 = vunpack.c.l.b16 %v1447
    %v1670 = vunpack.c.h.b16 %v1447
    %v1671 = vunpack.c.l.b16 %v1448
    %v1672 = vunpack.c.h.b16 %v1448
    %v1673 = vunpack.c.l.b16 %v1449
    %v1674 = vunpack.c.h.b16 %v1449
    %v1675 = vunpack.c.l.b16 %v1450
    %v1676 = vunpack.c.h.b16 %v1450
    %v1677 = vunpack.c.l.b16 %v1451
    %v1678 = vunpack.c.h.b16 %v1451
    %v1679 = vunpack.c.l.b16 %v1452
    %v1680 = vunpack.c.h.b16 %v1452
    %v1681 = vunpack.c.l.b16 %v1453
    %v1682 = vunpack.c.h.b16 %v1453
    %v1683 = vunpack.c.l.b16 %v1454
    %v1684 = vunpack.c.h.b16 %v1454
    %v1685 = vunpack.c.l.b16 %v1455
    %v1686 = vunpack.c.h.b16 %v1455
    %v1687 = vunpack.c.l.b16 %v1456
    %v1688 = vunpack.c.h.b16 %v1456
    %v1689 = vunpack.c.l.b16 %v1457
    %v1690 = vunpack.c.h.b16 %v1457
    %v1691 = vunpack.c.l.b16 %v1458
    %v1692 = vunpack.c.h.b16 %v1458
    %v1693 = vunpack.c.l.b16 %v1459
    %v1694 = vunpack.c.h.b16 %v1459
    %v1695 = vunpack.c.l.b16 %v1460
    %v1696 = vunpack.c.h.b16 %v1460
    %v1697 = vunpack.c.l.b16 %v1461
    %v1698 = vunpack.c.h.b16 %v1461
    %v1699 = vunpack.c.l.b16 %v1462
    %v1700 = vunpack.c.h.b16 %v1462
    %v1701 = vunpack.c.l.b16 %v1463
    %v1702 = vunpack.c.h.b16 %v1463
    %v1703 = vunpack.c.l.b16 %v1464
    %v1704 = vunpack.c.h.b16 %v1464
    %v1705 = vunpack.c.l.b16 %v1465
    %v1706 = vunpack.c.h.b16 %v1465
    %v1707 = vunpack.c.l.b16 %v1466
    %v1708 = vunpack.c.h.b16 %v1466
    %v1709 = vunpack.c.l.b16 %v1467
    %v1710 = vunpack.c.h.b16 %v1467
    %v1711 = vunpack.c.l.b16 %v1468
    %v1712 = vunpack.c.h.b16 %v1468
    %v1713 = vunpack.c.l.b16 %v1469
    %v1714 = vunpack.c.h.b16 %v1469
    %v1715 = vunpack.c.l.b16 %v1470
    %v1716 = vunpack.c.h.b16 %v1470
    %v1717 = vunpack.c.l.b16 %v1471
    %v1718 = vunpack.c.h.b16 %v1471
    %v1719 = vunpack.c.l.b16 %v1472
    %v1720 = vunpack.c.h.b16 %v1472
    %v1721 = vunpack.c.l.b16 %v1473
    %v1722 = vunpack.c.h.b16 %v1473
    %v1723 = vunpack.c.l.b16 %v1474
    %v1724 = vunpack.c.h.b16 %v1474
    %v1725 = vunpack.c.l.b16 %v1475
    %v1726 = vunpack.c.h.b16 %v1475
    %v1727 = vunpack.c.l.b16 %v1476
    %v1728 = vunpack.c.h.b16 %v1476
    %v1729 = vunpack.c.l.b16 %v1477
    %v1730 = vunpack.c.h.b16 %v1477
    %v1731 = vunpack.c.l.b16 %v1478
    %v1732 = vunpack.c.h.b16 %v1478
    %v1733 = vunpack.c.l.b16 %v1479
    %v1734 = vunpack.c.h.b16 %v1479
    %v1735 = vunpack.c.l.b16 %v1480
    %v1736 = vunpack.c.h.b16 %v1480
    %v1737 = vunpack.c.l.b16 %v1481
    %v1738 = vunpack.c.h.b16 %v1481
    %v1739 = vunpack.c.l.b16 %v1482
    %v1740 = vunpack.c.h.b16 %v1482
    %v1741 = vunpack.c.l.b16 %v1483
    %v1742 = vunpack.c.h.b16 %v1483
    %v1743 = vunpack.c.l.b16 %v1484
    %v1744 = vunpack.c.h.b16 %v1484
    %v1745 = vunpack.c.l.b16 %v1485
    %v1746 = vunpack.c.h.b16 %v1485
    %v1747 = vunpack.c.l.b16 %v1486
    %v1748 = vunpack.c.h.b16 %v1486
    %v1749 = vunpack.c.l.b16 %v1487
    %v1750 = vunpack.c.h.b16 %v1487
    %v1751 = vunpack.c.l.b16 %v1488
    %v1752 = vunpack.c.h.b16 %v1488
    %v1753 = vunpack.c.l.b16 %v1489
    %v1754 = vunpack.c.h.b16 %v1489
    %v1755 = vunpack.c.l.b16 %v1490
    %v1756 = vunpack.c.h.b16 %v1490
    %v1757 = vunpack.c.l.b16 %v1491
    %v1758 = vunpack.c.h.b16 %v1491
    %v1759 = vunpack.c.l.b16 %v1492
    %v1760 = vunpack.c.h.b16 %v1492
    %v1761 = vunpack.c.l.b16 %v1493
    %v1762 = vunpack.c.h.b16 %v1493
    %v1763 = vunpack.c.l.b16 %v1494
    %v1764 = vunpack.c.h.b16 %v1494
    %v1765 = vunpack.c.l.b16 %v1495
    %v1766 = vunpack.c.h.b16 %v1495
    %v1767 = vunpack.c.l.b16 %v1496
    %v1768 = vunpack.c.h.b16 %v1496
    %v1769 = vunpack.c.l.b16 %v1497
    %v1770 = vunpack.c.h.b16 %v1497
    %v1771 = vunpack.c.l.b16 %v1498
    %v1772 = vunpack.c.h.b16 %v1498
    %v1773 = vunpack.c.l.b16 %v1499
    %v1774 = vunpack.c.h.b16 %v1499
    %v1775 = vunpack.c.l.b16 %v1500
    %v1776 = vunpack.c.h.b16 %v1500
    %v1777 = vunpack.c.l.b16 %v1501
    %v1778 = vunpack.c.h.b16 %v1501
    %v1779 = vunpack.c.l.b16 %v1502
    %v1780 = vunpack.c.h.b16 %v1502
    %v1781 = vunpack.c.l.b16 %v1503
    %v1782 = vunpack.c.h.b16 %v1503
    %v1783 = vunpack.c.l.b16 %v1504
    %v1784 = vunpack.c.h.b16 %v1504
    %v1785 = vunpack.c.l.b16 %v1505
    %v1786 = vunpack.c.h.b16 %v1505
    %v1787 = vunpack.c.l.b16 %v1506
    %v1788 = vunpack.c.h.b16 %v1506
    %v1789 = vunpack.c.l.b16 %v1507
    %v1790 = vunpack.c.h.b16 %v1507
    %v1791 = vunpack.c.l.b16 %v1508
    %v1792 = vunpack.c.h.b16 %v1508
    %v1793 = vunpack.c.l.b16 %v1509
    %v1794 = vunpack.c.h.b16 %v1509
    %v1795 = vunpack.c.l.b16 %v1510
    %v1796 = vunpack.c.h.b16 %v1510
    %v1797 = vunpack.c.l.b16 %v1511
    %v1798 = vunpack.c.h.b16 %v1511
    %v1799 = vunpack.c.l.b16 %v1512
    %v1800 = vunpack.c.h.b16 %v1512
    %v1801 = vpack.c.b16 %v1613, %v1609
    %v1802 = vpack.c.b16 %v1614, %v1610
    %v1803 = vpack.c.b16 %v1615, %v1611
    %v1804 = vpack.c.b16 %v1616, %v1612
    %v1805 = vpack.c.b16 %v1621, %v1617
    %v1806 = vpack.c.b16 %v1622, %v1618
    %v1807 = vpack.c.b16 %v1623, %v1619
    %v1808 = vpack.c.b16 %v1624, %v1620
    %v1809 = vpack.c.b16 %v1629, %v1625
    %v1810 = vpack.c.b16 %v1630, %v1626
    %v1811 = vpack.c.b16 %v1631, %v1627
    %v1812 = vpack.c.b16 %v1632, %v1628
    %v1813 = vpack.c.b16 %v1637, %v1633
    %v1814 = vpack.c.b16 %v1638, %v1634
    %v1815 = vpack.c.b16 %v1639, %v1635
    %v1816 = vpack.c.b16 %v1640, %v1636
    %v1817 = vpack.c.b16 %v1645, %v1641
    %v1818 = vpack.c.b16 %v1646, %v1642
    %v1819 = vpack.c.b16 %v1647, %v1643
    %v1820 = vpack.c.b16 %v1648, %v1644
    %v1821 = vpack.c.b16 %v1653, %v1649
    %v1822 = vpack.c.b16 %v1654, %v1650
    %v1823 = vpack.c.b16 %v1655, %v1651
    %v1824 = vpack.c.b16 %v1656, %v1652
    %v1825 = vpack.c.b16 %v1661, %v1657
    %v1826 = vpack.c.b16 %v1662, %v1658
    %v1827 = vpack.c.b16 %v1663, %v1659
    %v1828 = vpack.c.b16 %v1664, %v1660
    %v1829 = vpack.c.b16 %v1669, %v1665
    %v1830 = vpack.c.b16 %v1670, %v1666
    %v1831 = vpack.c.b16 %v1671, %v1667
    %v1832 = vpack.c.b16 %v1672, %v1668
    %v1833 = vpack.c.b16 %v1677, %v1673
    %v1834 = vpack.c.b16 %v1678, %v1674
    %v1835 = vpack.c.b16 %v1679, %v1675
    %v1836 = vpack.c.b16 %v1680, %v1676
    %v1837 = vpack.c.b16 %v1685, %v1681
    %v1838 = vpack.c.b16 %v1686, %v1682
    %v1839 = vpack.c.b16 %v1687, %v1683
    %v1840 = vpack.c.b16 %v1688, %v1684
    %v1841 = vpack.c.b16 %v1693, %v1689
    %v1842 = vpack.c.b16 %v1694, %v1690
    %v1843 = vpack.c.b16 %v1695, %v1691
    %v1844 = vpack.c.b16 %v1696, %v1692
    %v1845 = vpack.c.b16 %v1701, %v1697
    %v1846 = vpack.c.b16 %v1702, %v1698
    %v1847 = vpack.c.b16 %v1703, %v1699
    %v1848 = vpack.c.b16 %v1704, %v1700
    %v1849 = vpack.c.b16 %v1709, %v1705
    %v1850 = vpack.c.b16 %v1710, %v1706
    %v1851 = vpack.c.b16 %v1711, %v1707
    %v1852 = vpack.c.b16 %v1712, %v1708
    %v1853 = vpack.c.b16 %v1717, %v1713
    %v1854 = vpack.c.b16 %v1718, %v1714
    %v1855 = vpack.c.b16 %v1719, %v1715
    %v1856 = vpack.c.b16 %v1720, %v1716
    %v1857 = vpack.c.b16 %v1725, %v1721
    %v1858 = vpack.c.b16 %v1726, %v1722
    %v1859 = vpack.c.b16 %v1727, %v1723
    %v1860 = vpack.c.b16 %v1728, %v1724
    %v1861 = vpack.c.b16 %v1733, %v1729
    %v1862 = vpack.c.b16 %v1734, %v1730
    %v1863 = vpack.c.b16 %v1735, %v1731
    %v1864 = vpack.c.b16 %v1736, %v1732
    %v1865 = vpack.c.b16 %v1741, %v1737
    %v1866 = vpack.c.b16 %v1742, %v1738
    %v1867 = vpack.c.b16 %v1743, %v1739
    %v1868 = vpack.c.b16 %v1744, %v1740
    %v1869 = vpack.c.b16 %v1749, %v1745
    %v1870 = vpack.c.b16 %v1750, %v1746
    %v1871 = vpack.c.b16 %v1751, %v1747
    %v1872 = vpack.c.b16 %v1752, %v1748
    %v1873 = vpack.c.b16 %v1757, %v1753
    %v1874 = vpack.c.b16 %v1758, %v1754
    %v1875 = vpack.c.b16 %v1759, %v1755
    %v1876 = vpack.c.b16 %v1760, %v1756
    %v1877 = vpack.c.b16 %v1765, %v1761
    %v1878 = vpack.c.b16 %v1766, %v1762
    %v1879 = vpack.c.b16 %v1767, %v1763
    %v1880 = vpack.c.b16 %v1768, %v1764
    %v1881 = vpack.c.b16 %v1773, %v1769
    %v1882 = vpack.c.b16 %v1774, %v1770
    %v1883 = vpack.c.b16 %v1775, %v1771
    %v1884 = vpack.c.b16 %v1776, %v1772
    %v1885 = vpack.c.b16 %v1781, %v1777
    %v1886 = vpack.c.b16 %v1782, %v1778
    %v1887 = vpack.c.b16 %v1783, %v1779
    %v1888 = vpack.c.b16 %v1784, %v1780
    %v1889 = vpack.c.b16 %v1789, %v1785
    %v1890 = vpack.c.b16 %v1790, %v1786
    %v1891 = vpack.c.b16 %v1791, %v1787
    %v1892 = vpack.c.b16 %v1792, %v1788
    %v1893 = vpack.c.b16 %v1797, %v1793
    %v1894 = vpack.c.b16 %v1798, %v1794
    %v1895 = vpack.c.b16 %v1799, %v1795
    %v1896 = vpack.c.b16 %v1800, %v1796
    %1993 = vmatprep.subr.bf16.mxu0 %v1802
    %1994 = vmatpush1.bf16.msra.mxu0 %v1801
    %1995 = vmatprep.subr.bf16.mxu0 %v1806
    %1996 = vmatpush1.bf16.msra.mxu0 %v1805
    %1997 = vmatprep.subr.bf16.mxu0 %v1810
    %1998 = vmatpush1.bf16.msra.mxu0 %v1809
    %1999 = vmatprep.subr.bf16.mxu0 %v1814
    %2000 = vmatpush1.bf16.msra.mxu0 %v1813
    %2001 = vmatprep.subr.bf16.mxu0 %v1818
    %2002 = vmatpush1.bf16.msra.mxu0 %v1817
    %2003 = vmatprep.subr.bf16.mxu0 %v1822
    %2004 = vmatpush1.bf16.msra.mxu0 %v1821
    %2005 = vmatprep.subr.bf16.mxu0 %v1826
    %2006 = vmatpush1.bf16.msra.mxu0 %v1825
    %2007 = vmatprep.subr.bf16.mxu0 %v1830
    %2008 = vmatpush1.bf16.msra.mxu0 %v1829
    %2009 = vmatprep.subr.bf16.mxu0 %v1834
    %2010 = vmatpush1.bf16.msra.mxu0 %v1833
    %2011 = vmatprep.subr.bf16.mxu0 %v1838
    %2012 = vmatpush1.bf16.msra.mxu0 %v1837
    %2013 = vmatprep.subr.bf16.mxu0 %v1842
    %2014 = vmatpush1.bf16.msra.mxu0 %v1841
    %2015 = vmatprep.subr.bf16.mxu0 %v1846
    %2016 = vmatpush1.bf16.msra.mxu0 %v1845
    %2017 = vmatprep.subr.bf16.mxu0 %v1850
    %2018 = vmatpush1.bf16.msra.mxu0 %v1849
    %2019 = vmatprep.subr.bf16.mxu0 %v1854
    %2020 = vmatpush1.bf16.msra.mxu0 %v1853
    %2021 = vmatprep.subr.bf16.mxu0 %v1858
    %2022 = vmatpush1.bf16.msra.mxu0 %v1857
    %2023 = vmatprep.subr.bf16.mxu0 %v1862
    %2024 = vmatpush1.bf16.msra.mxu0 %v1861
    %2025 = vmatprep.mubr.bf16.mxu0 %v1405
    %2026 = vmatmul.mubr.bf16.gmra.mrb[0].mxu0 %v1404
    %v2027 = vpop.f32.mrb[0].mxu0
    %v2028 = vadd.f32 0.0, %v2027
    %v2029 = vpop.f32.mrb[0].mxu0
    %v2030 = vadd.f32 0.0, %v2029
    %v2031 = vpop.f32.mrb[0].mxu0
    %v2032 = vadd.f32 0.0, %v2031
    %v2033 = vpop.f32.mrb[0].mxu0
    %v2034 = vadd.f32 0.0, %v2033
    %2035 = vmatprep.mubr.bf16.mxu0 %v1408
    %2036 = vmatmul.mubr.bf16.gmra.mrb[0].mxu0 %v1407
    %v2037 = vpop.f32.mrb[0].mxu0
    %v2038 = vadd.f32 0.0, %v2037
    %v2039 = vpop.f32.mrb[0].mxu0
    %v2040 = vadd.f32 0.0, %v2039
    %v2041 = vpop.f32.mrb[0].mxu0
    %v2042 = vadd.f32 0.0, %v2041
    %v2043 = vpop.f32.mrb[0].mxu0
    %v2044 = vadd.f32 0.0, %v2043
    %2045 = vmatprep.mubr.bf16.mxu0 %v1411
    %2046 = vmatmul.mubr.bf16.gmra.mrb[0].mxu0 %v1410
    %v2047 = vpop.f32.mrb[0].mxu0
    %v2048 = vadd.f32 0.0, %v2047
    %v2049 = vpop.f32.mrb[0].mxu0
    %v2050 = vadd.f32 0.0, %v2049
    %v2051 = vpop.f32.mrb[0].mxu0
    %v2052 = vadd.f32 0.0, %v2051
    %v2053 = vpop.f32.mrb[0].mxu0
    %v2054 = vadd.f32 0.0, %v2053
    %2055 = vmatprep.mubr.bf16.mxu0 %v1414
    %2056 = vmatmul.mubr.bf16.gmra.mrb[0].mxu0 %v1413
    %v2057 = vpop.f32.mrb[0].mxu0
    %v2058 = vadd.f32 0.0, %v2057
    %v2059 = vpop.f32.mrb[0].mxu0
    %v2060 = vadd.f32 0.0, %v2059
    %v2061 = vpop.f32.mrb[0].mxu0
    %v2062 = vadd.f32 0.0, %v2061
    %v2063 = vpop.f32.mrb[0].mxu0
    %v2064 = vadd.f32 0.0, %v2063
    %2065 = vdwg.mxu0
    %2066 = vmatprep.subr.bf16.mxu0 %v1866
    %2067 = vmatpush1.bf16.msra.mxu0 %v1865
    %2068 = vmatprep.subr.bf16.mxu0 %v1870
    %2069 = vmatpush1.bf16.msra.mxu0 %v1869
    %2070 = vmatprep.subr.bf16.mxu0 %v1874
    %2071 = vmatpush1.bf16.msra.mxu0 %v1873
    %2072 = vmatprep.subr.bf16.mxu0 %v1878
    %2073 = vmatpush1.bf16.msra.mxu0 %v1877
    %2074 = vmatprep.subr.bf16.mxu0 %v1882
    %2075 = vmatpush1.bf16.msra.mxu0 %v1881
    %2076 = vmatprep.subr.bf16.mxu0 %v1886
    %2077 = vmatpush1.bf16.msra.mxu0 %v1885
    %2078 = vmatprep.subr.bf16.mxu0 %v1890
    %2079 = vmatpush1.bf16.msra.mxu0 %v1889
    %2080 = vmatprep.subr.bf16.mxu0 %v1894
    %2081 = vmatpush1.bf16.msra.mxu0 %v1893
    %2082 = vmatprep.subr.bf16.mxu0 0
    %2083 = vmatpush1.bf16.msra.mxu0 0
    %2084 = vmatprep.subr.bf16.mxu0 0
    %2085 = vmatpush1.bf16.msra.mxu0 0
    %2086 = vmatprep.subr.bf16.mxu0 0
    %2087 = vmatpush1.bf16.msra.mxu0 0
    %2088 = vmatprep.subr.bf16.mxu0 0
    %2089 = vmatpush1.bf16.msra.mxu0 0
    %2090 = vmatprep.subr.bf16.mxu0 0
    %2091 = vmatpush1.bf16.msra.mxu0 0
    %2092 = vmatprep.subr.bf16.mxu0 0
    %2093 = vmatpush1.bf16.msra.mxu0 0
    %2094 = vmatprep.subr.bf16.mxu0 0
    %2095 = vmatpush1.bf16.msra.mxu0 0
    %2096 = vmatprep.subr.bf16.mxu0 0
    %2097 = vmatpush1.bf16.msra.mxu0 0
    %2098 = vmatprep.mubr.bf16.mxu0 0
    %2099 = vmatmul.mubr.bf16.gmra.mrb[0].mxu0 %v1406
    %v2100 = vpop.f32.mrb[0].mxu0
    %v2101 = vadd.f32 %v2028, %v2100
    %v2102 = vpop.f32.mrb[0].mxu0
    %v2103 = vadd.f32 %v2030, %v2102
    %v2104 = vpop.f32.mrb[0].mxu0
    %v2105 = vadd.f32 %v2032, %v2104
    %v2106 = vpop.f32.mrb[0].mxu0
    %v2107 = vadd.f32 %v2034, %v2106
    %2108 = vmatprep.mubr.bf16.mxu0 0
    %2109 = vmatmul.mubr.bf16.gmra.mrb[0].mxu0 %v1409
    %v2110 = vpop.f32.mrb[0].mxu0
    %v2111 = vadd.f32 %v2038, %v2110
    %v2112 = vpop.f32.mrb[0].mxu0
    %v2113 = vadd.f32 %v2040, %v2112
    %v2114 = vpop.f32.mrb[0].mxu0
    %v2115 = vadd.f32 %v2042, %v2114
    %v2116 = vpop.f32.mrb[0].mxu0
    %v2117 = vadd.f32 %v2044, %v2116
    %2118 = vmatprep.mubr.bf16.mxu0 0
    %2119 = vmatmul.mubr.bf16.gmra.mrb[0].mxu0 %v1412
    %v2120 = vpop.f32.mrb[0].mxu0
    %v2121 = vadd.f32 %v2048, %v2120
    %v2122 = vpop.f32.mrb[0].mxu0
    %v2123 = vadd.f32 %v2050, %v2122
    %v2124 = vpop.f32.mrb[0].mxu0
    %v2125 = vadd.f32 %v2052, %v2124
    %v2126 = vpop.f32.mrb[0].mxu0
    %v2127 = vadd.f32 %v2054, %v2126
    %2128 = vmatprep.mubr.bf16.mxu0 0
    %2129 = vmatmul.mubr.bf16.gmra.mrb[0].mxu0 %v1415
    %v2130 = vpop.f32.mrb[0].mxu0
    %v2131 = vadd.f32 %v2058, %v2130
    %v2132 = vpop.f32.mrb[0].mxu0
    %v2133 = vadd.f32 %v2060, %v2132
    %v2134 = vpop.f32.mrb[0].mxu0
    %v2135 = vadd.f32 %v2062, %v2134
    %v2136 = vpop.f32.mrb[0].mxu0
    %v2137 = vadd.f32 %v2064, %v2136
    %2138 = vdwg.mxu0
    %2139 = vmatprep.subr.bf16.mxu0 %v1804
    %2140 = vmatpush1.bf16.msra.mxu0 %v1803
    %2141 = vmatprep.subr.bf16.mxu0 %v1808
    %2142 = vmatpush1.bf16.msra.mxu0 %v1807
    %2143 = vmatprep.subr.bf16.mxu0 %v1812
    %2144 = vmatpush1.bf16.msra.mxu0 %v1811
    %2145 = vmatprep.subr.bf16.mxu0 %v1816
    %2146 = vmatpush1.bf16.msra.mxu0 %v1815
    %2147 = vmatprep.subr.bf16.mxu0 %v1820
    %2148 = vmatpush1.bf16.msra.mxu0 %v1819
    %2149 = vmatprep.subr.bf16.mxu0 %v1824
    %2150 = vmatpush1.bf16.msra.mxu0 %v1823
    %2151 = vmatprep.subr.bf16.mxu0 %v1828
    %2152 = vmatpush1.bf16.msra.mxu0 %v1827
    %2153 = vmatprep.subr.bf16.mxu0 %v1832
    %2154 = vmatpush1.bf16.msra.mxu0 %v1831
    %2155 = vmatprep.subr.bf16.mxu0 %v1836
    %2156 = vmatpush1.bf16.msra.mxu0 %v1835
    %2157 = vmatprep.subr.bf16.mxu0 %v1840
    %2158 = vmatpush1.bf16.msra.mxu0 %v1839
    %2159 = vmatprep.subr.bf16.mxu0 %v1844
    %2160 = vmatpush1.bf16.msra.mxu0 %v1843
    %2161 = vmatprep.subr.bf16.mxu0 %v1848
    %2162 = vmatpush1.bf16.msra.mxu0 %v1847
    %2163 = vmatprep.subr.bf16.mxu0 %v1852
    %2164 = vmatpush1.bf16.msra.mxu0 %v1851
    %2165 = vmatprep.subr.bf16.mxu0 %v1856
    %2166 = vmatpush1.bf16.msra.mxu0 %v1855
    %2167 = vmatprep.subr.bf16.mxu0 %v1860
    %2168 = vmatpush1.bf16.msra.mxu0 %v1859
    %2169 = vmatprep.subr.bf16.mxu0 %v1864
    %2170 = vmatpush1.bf16.msra.mxu0 %v1863
    %2171 = vmatprep.mubr.bf16.mxu0 %v1405
    %2172 = vmatmul.mubr.bf16.gmra.mrb[0].mxu0 %v1404
    %v2173 = vpop.f32.mrb[0].mxu0
    %v2174 = vadd.f32 0.0, %v2173
    %v2175 = vpop.f32.mrb[0].mxu0
    %v2176 = vadd.f32 0.0, %v2175
    %v2177 = vpop.f32.mrb[0].mxu0
    %v2178 = vadd.f32 0.0, %v2177
    %v2179 = vpop.f32.mrb[0].mxu0
    %v2180 = vadd.f32 0.0, %v2179
    %2181 = vmatprep.mubr.bf16.mxu0 %v1408
    %2182 = vmatmul.mubr.bf16.gmra.mrb[0].mxu0 %v1407
    %v2183 = vpop.f32.mrb[0].mxu0
    %v2184 = vadd.f32 0.0, %v2183
    %v2185 = vpop.f32.mrb[0].mxu0
    %v2186 = vadd.f32 0.0, %v2185
    %v2187 = vpop.f32.mrb[0].mxu0
    %v2188 = vadd.f32 0.0, %v2187
    %v2189 = vpop.f32.mrb[0].mxu0
    %v2190 = vadd.f32 0.0, %v2189
    %2191 = vmatprep.mubr.bf16.mxu0 %v1411
    %2192 = vmatmul.mubr.bf16.gmra.mrb[0].mxu0 %v1410
    %v2193 = vpop.f32.mrb[0].mxu0
    %v2194 = vadd.f32 0.0, %v2193
    %v2195 = vpop.f32.mrb[0].mxu0
    %v2196 = vadd.f32 0.0, %v2195
    %v2197 = vpop.f32.mrb[0].mxu0
    %v2198 = vadd.f32 0.0, %v2197
    %v2199 = vpop.f32.mrb[0].mxu0
    %v2200 = vadd.f32 0.0, %v2199
    %2201 = vmatprep.mubr.bf16.mxu0 %v1414
    %2202 = vmatmul.mubr.bf16.gmra.mrb[0].mxu0 %v1413
    %v2203 = vpop.f32.mrb[0].mxu0
    %v2204 = vadd.f32 0.0, %v2203
    %v2205 = vpop.f32.mrb[0].mxu0
    %v2206 = vadd.f32 0.0, %v2205
    %v2207 = vpop.f32.mrb[0].mxu0
    %v2208 = vadd.f32 0.0, %v2207
    %v2209 = vpop.f32.mrb[0].mxu0
    %v2210 = vadd.f32 0.0, %v2209
    %2211 = vdwg.mxu0
    %2212 = vmatprep.subr.bf16.mxu0 %v1868
    %2213 = vmatpush1.bf16.msra.mxu0 %v1867
    %2214 = vmatprep.subr.bf16.mxu0 %v1872
    %2215 = vmatpush1.bf16.msra.mxu0 %v1871
    %2216 = vmatprep.subr.bf16.mxu0 %v1876
    %2217 = vmatpush1.bf16.msra.mxu0 %v1875
    %2218 = vmatprep.subr.bf16.mxu0 %v1880
    %2219 = vmatpush1.bf16.msra.mxu0 %v1879
    %2220 = vmatprep.subr.bf16.mxu0 %v1884
    %2221 = vmatpush1.bf16.msra.mxu0 %v1883
    %2222 = vmatprep.subr.bf16.mxu0 %v1888
    %2223 = vmatpush1.bf16.msra.mxu0 %v1887
    %2224 = vmatprep.subr.bf16.mxu0 %v1892
    %2225 = vmatpush1.bf16.msra.mxu0 %v1891
    %2226 = vmatprep.subr.bf16.mxu0 %v1896
    %2227 = vmatpush1.bf16.msra.mxu0 %v1895
    %2228 = vmatprep.subr.bf16.mxu0 0
    %2229 = vmatpush1.bf16.msra.mxu0 0
    %2230 = vmatprep.subr.bf16.mxu0 0
    %2231 = vmatpush1.bf16.msra.mxu0 0
    %2232 = vmatprep.subr.bf16.mxu0 0
    %2233 = vmatpush1.bf16.msra.mxu0 0
    %2234 = vmatprep.subr.bf16.mxu0 0
    %2235 = vmatpush1.bf16.msra.mxu0 0
    %2236 = vmatprep.subr.bf16.mxu0 0
    %2237 = vmatpush1.bf16.msra.mxu0 0
    %2238 = vmatprep.subr.bf16.mxu0 0
    %2239 = vmatpush1.bf16.msra.mxu0 0
    %2240 = vmatprep.subr.bf16.mxu0 0
    %2241 = vmatpush1.bf16.msra.mxu0 0
    %2242 = vmatprep.subr.bf16.mxu0 0
    %2243 = vmatpush1.bf16.msra.mxu0 0
    %2244 = vmatprep.mubr.bf16.mxu0 0
    %2245 = vmatmul.mubr.bf16.gmra.mrb[0].mxu0 %v1406
    %v2246 = vpop.f32.mrb[0].mxu0
    %v2247 = vadd.f32 %v2174, %v2246
    %v2248 = vpop.f32.mrb[0].mxu0
    %v2249 = vadd.f32 %v2176, %v2248
    %v2250 = vpop.f32.mrb[0].mxu0
    %v2251 = vadd.f32 %v2178, %v2250
    %v2252 = vpop.f32.mrb[0].mxu0
    %v2253 = vadd.f32 %v2180, %v2252
    %2254 = vmatprep.mubr.bf16.mxu0 0
    %2255 = vmatmul.mubr.bf16.gmra.mrb[0].mxu0 %v1409
    %v2256 = vpop.f32.mrb[0].mxu0
    %v2257 = vadd.f32 %v2184, %v2256
    %v2258 = vpop.f32.mrb[0].mxu0
    %v2259 = vadd.f32 %v2186, %v2258
    %v2260 = vpop.f32.mrb[0].mxu0
    %v2261 = vadd.f32 %v2188, %v2260
    %v2262 = vpop.f32.mrb[0].mxu0
    %v2263 = vadd.f32 %v2190, %v2262
    %2264 = vmatprep.mubr.bf16.mxu0 0
    %2265 = vmatmul.mubr.bf16.gmra.mrb[0].mxu0 %v1412
    %v2266 = vpop.f32.mrb[0].mxu0
    %v2267 = vadd.f32 %v2194, %v2266
    %v2268 = vpop.f32.mrb[0].mxu0
    %v2269 = vadd.f32 %v2196, %v2268
    %v2270 = vpop.f32.mrb[0].mxu0
    %v2271 = vadd.f32 %v2198, %v2270
    %v2272 = vpop.f32.mrb[0].mxu0
    %v2273 = vadd.f32 %v2200, %v2272
    %2274 = vmatprep.mubr.bf16.mxu0 0
    %2275 = vmatmul.mubr.bf16.gmra.mrb[0].mxu0 %v1415
    %v2276 = vpop.f32.mrb[0].mxu0
    %v2277 = vadd.f32 %v2204, %v2276
    %v2278 = vpop.f32.mrb[0].mxu0
    %v2279 = vadd.f32 %v2206, %v2278
    %v2280 = vpop.f32.mrb[0].mxu0
    %v2281 = vadd.f32 %v2208, %v2280
    %v2282 = vpop.f32.mrb[0].mxu0
    %v2283 = vadd.f32 %v2210, %v2282
    %2284 = vdwg.mxu0
    %v2381 = vunpack.c.l.b16 %v1308
    %v2382 = vunpack.c.h.b16 %v1308
    %v2383 = vunpack.c.l.b16 %v1309
    %v2384 = vunpack.c.h.b16 %v1309
    %v2385 = vunpack.c.l.b16 %v1310
    %v2386 = vunpack.c.h.b16 %v1310
    %v2387 = vunpack.c.l.b16 %v1311
    %v2388 = vunpack.c.h.b16 %v1311
    %v2389 = vunpack.c.l.b16 %v1312
    %v2390 = vunpack.c.h.b16 %v1312
    %v2391 = vunpack.c.l.b16 %v1313
    %v2392 = vunpack.c.h.b16 %v1313
    %v2393 = vunpack.c.l.b16 %v1314
    %v2394 = vunpack.c.h.b16 %v1314
    %v2395 = vunpack.c.l.b16 %v1315
    %v2396 = vunpack.c.h.b16 %v1315
    %v2397 = vunpack.c.l.b16 %v1316
    %v2398 = vunpack.c.h.b16 %v1316
    %v2399 = vunpack.c.l.b16 %v1317
    %v2400 = vunpack.c.h.b16 %v1317
    %v2401 = vunpack.c.l.b16 %v1318
    %v2402 = vunpack.c.h.b16 %v1318
    %v2403 = vunpack.c.l.b16 %v1319
    %v2404 = vunpack.c.h.b16 %v1319
    %v2405 = vunpack.c.l.b16 %v1320
    %v2406 = vunpack.c.h.b16 %v1320
    %v2407 = vunpack.c.l.b16 %v1321
    %v2408 = vunpack.c.h.b16 %v1321
    %v2409 = vunpack.c.l.b16 %v1322
    %v2410 = vunpack.c.h.b16 %v1322
    %v2411 = vunpack.c.l.b16 %v1323
    %v2412 = vunpack.c.h.b16 %v1323
    %v2413 = vunpack.c.l.b16 %v1324
    %v2414 = vunpack.c.h.b16 %v1324
    %v2415 = vunpack.c.l.b16 %v1325
    %v2416 = vunpack.c.h.b16 %v1325
    %v2417 = vunpack.c.l.b16 %v1326
    %v2418 = vunpack.c.h.b16 %v1326
    %v2419 = vunpack.c.l.b16 %v1327
    %v2420 = vunpack.c.h.b16 %v1327
    %v2421 = vunpack.c.l.b16 %v1328
    %v2422 = vunpack.c.h.b16 %v1328
    %v2423 = vunpack.c.l.b16 %v1329
    %v2424 = vunpack.c.h.b16 %v1329
    %v2425 = vunpack.c.l.b16 %v1330
    %v2426 = vunpack.c.h.b16 %v1330
    %v2427 = vunpack.c.l.b16 %v1331
    %v2428 = vunpack.c.h.b16 %v1331
    %v2429 = vunpack.c.l.b16 %v1332
    %v2430 = vunpack.c.h.b16 %v1332
    %v2431 = vunpack.c.l.b16 %v1333
    %v2432 = vunpack.c.h.b16 %v1333
    %v2433 = vunpack.c.l.b16 %v1334
    %v2434 = vunpack.c.h.b16 %v1334
    %v2435 = vunpack.c.l.b16 %v1335
    %v2436 = vunpack.c.h.b16 %v1335
    %v2437 = vunpack.c.l.b16 %v1336
    %v2438 = vunpack.c.h.b16 %v1336
    %v2439 = vunpack.c.l.b16 %v1337
    %v2440 = vunpack.c.h.b16 %v1337
    %v2441 = vunpack.c.l.b16 %v1338
    %v2442 = vunpack.c.h.b16 %v1338
    %v2443 = vunpack.c.l.b16 %v1339
    %v2444 = vunpack.c.h.b16 %v1339
    %v2445 = vunpack.c.l.b16 %v1340
    %v2446 = vunpack.c.h.b16 %v1340
    %v2447 = vunpack.c.l.b16 %v1341
    %v2448 = vunpack.c.h.b16 %v1341
    %v2449 = vunpack.c.l.b16 %v1342
    %v2450 = vunpack.c.h.b16 %v1342
    %v2451 = vunpack.c.l.b16 %v1343
    %v2452 = vunpack.c.h.b16 %v1343
    %v2453 = vunpack.c.l.b16 %v1344
    %v2454 = vunpack.c.h.b16 %v1344
    %v2455 = vunpack.c.l.b16 %v1345
    %v2456 = vunpack.c.h.b16 %v1345
    %v2457 = vunpack.c.l.b16 %v1346
    %v2458 = vunpack.c.h.b16 %v1346
    %v2459 = vunpack.c.l.b16 %v1347
    %v2460 = vunpack.c.h.b16 %v1347
    %v2461 = vunpack.c.l.b16 %v1348
    %v2462 = vunpack.c.h.b16 %v1348
    %v2463 = vunpack.c.l.b16 %v1349
    %v2464 = vunpack.c.h.b16 %v1349
    %v2465 = vunpack.c.l.b16 %v1350
    %v2466 = vunpack.c.h.b16 %v1350
    %v2467 = vunpack.c.l.b16 %v1351
    %v2468 = vunpack.c.h.b16 %v1351
    %v2469 = vunpack.c.l.b16 %v1352
    %v2470 = vunpack.c.h.b16 %v1352
    %v2471 = vunpack.c.l.b16 %v1353
    %v2472 = vunpack.c.h.b16 %v1353
    %v2473 = vunpack.c.l.b16 %v1354
    %v2474 = vunpack.c.h.b16 %v1354
    %v2475 = vunpack.c.l.b16 %v1355
    %v2476 = vunpack.c.h.b16 %v1355
    %v2477 = vunpack.c.l.b16 %v1356
    %v2478 = vunpack.c.h.b16 %v1356
    %v2479 = vunpack.c.l.b16 %v1357
    %v2480 = vunpack.c.h.b16 %v1357
    %v2481 = vunpack.c.l.b16 %v1358
    %v2482 = vunpack.c.h.b16 %v1358
    %v2483 = vunpack.c.l.b16 %v1359
    %v2484 = vunpack.c.h.b16 %v1359
    %v2485 = vunpack.c.l.b16 %v1360
    %v2486 = vunpack.c.h.b16 %v1360
    %v2487 = vunpack.c.l.b16 %v1361
    %v2488 = vunpack.c.h.b16 %v1361
    %v2489 = vunpack.c.l.b16 %v1362
    %v2490 = vunpack.c.h.b16 %v1362
    %v2491 = vunpack.c.l.b16 %v1363
    %v2492 = vunpack.c.h.b16 %v1363
    %v2493 = vunpack.c.l.b16 %v1364
    %v2494 = vunpack.c.h.b16 %v1364
    %v2495 = vunpack.c.l.b16 %v1365
    %v2496 = vunpack.c.h.b16 %v1365
    %v2497 = vunpack.c.l.b16 %v1366
    %v2498 = vunpack.c.h.b16 %v1366
    %v2499 = vunpack.c.l.b16 %v1367
    %v2500 = vunpack.c.h.b16 %v1367
    %v2501 = vunpack.c.l.b16 %v1368
    %v2502 = vunpack.c.h.b16 %v1368
    %v2503 = vunpack.c.l.b16 %v1369
    %v2504 = vunpack.c.h.b16 %v1369
    %v2505 = vunpack.c.l.b16 %v1370
    %v2506 = vunpack.c.h.b16 %v1370
    %v2507 = vunpack.c.l.b16 %v1371
    %v2508 = vunpack.c.h.b16 %v1371
    %v2509 = vunpack.c.l.b16 %v1372
    %v2510 = vunpack.c.h.b16 %v1372
    %v2511 = vunpack.c.l.b16 %v1373
    %v2512 = vunpack.c.h.b16 %v1373
    %v2513 = vunpack.c.l.b16 %v1374
    %v2514 = vunpack.c.h.b16 %v1374
    %v2515 = vunpack.c.l.b16 %v1375
    %v2516 = vunpack.c.h.b16 %v1375
    %v2517 = vunpack.c.l.b16 %v1376
    %v2518 = vunpack.c.h.b16 %v1376
    %v2519 = vunpack.c.l.b16 %v1377
    %v2520 = vunpack.c.h.b16 %v1377
    %v2521 = vunpack.c.l.b16 %v1378
    %v2522 = vunpack.c.h.b16 %v1378
    %v2523 = vunpack.c.l.b16 %v1379
    %v2524 = vunpack.c.h.b16 %v1379
    %v2525 = vunpack.c.l.b16 %v1380
    %v2526 = vunpack.c.h.b16 %v1380
    %v2527 = vunpack.c.l.b16 %v1381
    %v2528 = vunpack.c.h.b16 %v1381
    %v2529 = vunpack.c.l.b16 %v1382
    %v2530 = vunpack.c.h.b16 %v1382
    %v2531 = vunpack.c.l.b16 %v1383
    %v2532 = vunpack.c.h.b16 %v1383
    %v2533 = vunpack.c.l.b16 %v1384
    %v2534 = vunpack.c.h.b16 %v1384
    %v2535 = vunpack.c.l.b16 %v1385
    %v2536 = vunpack.c.h.b16 %v1385
    %v2537 = vunpack.c.l.b16 %v1386
    %v2538 = vunpack.c.h.b16 %v1386
    %v2539 = vunpack.c.l.b16 %v1387
    %v2540 = vunpack.c.h.b16 %v1387
    %v2541 = vunpack.c.l.b16 %v1388
    %v2542 = vunpack.c.h.b16 %v1388
    %v2543 = vunpack.c.l.b16 %v1389
    %v2544 = vunpack.c.h.b16 %v1389
    %v2545 = vunpack.c.l.b16 %v1390
    %v2546 = vunpack.c.h.b16 %v1390
    %v2547 = vunpack.c.l.b16 %v1391
    %v2548 = vunpack.c.h.b16 %v1391
    %v2549 = vunpack.c.l.b16 %v1392
    %v2550 = vunpack.c.h.b16 %v1392
    %v2551 = vunpack.c.l.b16 %v1393
    %v2552 = vunpack.c.h.b16 %v1393
    %v2553 = vunpack.c.l.b16 %v1394
    %v2554 = vunpack.c.h.b16 %v1394
    %v2555 = vunpack.c.l.b16 %v1395
    %v2556 = vunpack.c.h.b16 %v1395
    %v2557 = vunpack.c.l.b16 %v1396
    %v2558 = vunpack.c.h.b16 %v1396
    %v2559 = vunpack.c.l.b16 %v1397
    %v2560 = vunpack.c.h.b16 %v1397
    %v2561 = vunpack.c.l.b16 %v1398
    %v2562 = vunpack.c.h.b16 %v1398
    %v2563 = vunpack.c.l.b16 %v1399
    %v2564 = vunpack.c.h.b16 %v1399
    %v2565 = vunpack.c.l.b16 %v1400
    %v2566 = vunpack.c.h.b16 %v1400
    %v2567 = vunpack.c.l.b16 %v1401
    %v2568 = vunpack.c.h.b16 %v1401
    %v2569 = vunpack.c.l.b16 %v1402
    %v2570 = vunpack.c.h.b16 %v1402
    %v2571 = vunpack.c.l.b16 %v1403
    %v2572 = vunpack.c.h.b16 %v1403
    %v2573 = vpack.c.b16 %v2385, %v2381
    %v2574 = vpack.c.b16 %v2386, %v2382
    %v2575 = vpack.c.b16 %v2387, %v2383
    %v2576 = vpack.c.b16 %v2388, %v2384
    %v2577 = vpack.c.b16 %v2393, %v2389
    %v2578 = vpack.c.b16 %v2394, %v2390
    %v2579 = vpack.c.b16 %v2395, %v2391
    %v2580 = vpack.c.b16 %v2396, %v2392
    %v2581 = vpack.c.b16 %v2401, %v2397
    %v2582 = vpack.c.b16 %v2402, %v2398
    %v2583 = vpack.c.b16 %v2403, %v2399
    %v2584 = vpack.c.b16 %v2404, %v2400
    %v2585 = vpack.c.b16 %v2409, %v2405
    %v2586 = vpack.c.b16 %v2410, %v2406
    %v2587 = vpack.c.b16 %v2411, %v2407
    %v2588 = vpack.c.b16 %v2412, %v2408
    %v2589 = vpack.c.b16 %v2417, %v2413
    %v2590 = vpack.c.b16 %v2418, %v2414
    %v2591 = vpack.c.b16 %v2419, %v2415
    %v2592 = vpack.c.b16 %v2420, %v2416
    %v2593 = vpack.c.b16 %v2425, %v2421
    %v2594 = vpack.c.b16 %v2426, %v2422
    %v2595 = vpack.c.b16 %v2427, %v2423
    %v2596 = vpack.c.b16 %v2428, %v2424
    %v2597 = vpack.c.b16 %v2433, %v2429
    %v2598 = vpack.c.b16 %v2434, %v2430
    %v2599 = vpack.c.b16 %v2435, %v2431
    %v2600 = vpack.c.b16 %v2436, %v2432
    %v2601 = vpack.c.b16 %v2441, %v2437
    %v2602 = vpack.c.b16 %v2442, %v2438
    %v2603 = vpack.c.b16 %v2443, %v2439
    %v2604 = vpack.c.b16 %v2444, %v2440
    %v2605 = vpack.c.b16 %v2449, %v2445
    %v2606 = vpack.c.b16 %v2450, %v2446
    %v2607 = vpack.c.b16 %v2451, %v2447
    %v2608 = vpack.c.b16 %v2452, %v2448
    %v2609 = vpack.c.b16 %v2457, %v2453
    %v2610 = vpack.c.b16 %v2458, %v2454
    %v2611 = vpack.c.b16 %v2459, %v2455
    %v2612 = vpack.c.b16 %v2460, %v2456
    %v2613 = vpack.c.b16 %v2465, %v2461
    %v2614 = vpack.c.b16 %v2466, %v2462
    %v2615 = vpack.c.b16 %v2467, %v2463
    %v2616 = vpack.c.b16 %v2468, %v2464
    %v2617 = vpack.c.b16 %v2473, %v2469
    %v2618 = vpack.c.b16 %v2474, %v2470
    %v2619 = vpack.c.b16 %v2475, %v2471
    %v2620 = vpack.c.b16 %v2476, %v2472
    %v2621 = vpack.c.b16 %v2481, %v2477
    %v2622 = vpack.c.b16 %v2482, %v2478
    %v2623 = vpack.c.b16 %v2483, %v2479
    %v2624 = vpack.c.b16 %v2484, %v2480
    %v2625 = vpack.c.b16 %v2489, %v2485
    %v2626 = vpack.c.b16 %v2490, %v2486
    %v2627 = vpack.c.b16 %v2491, %v2487
    %v2628 = vpack.c.b16 %v2492, %v2488
    %v2629 = vpack.c.b16 %v2497, %v2493
    %v2630 = vpack.c.b16 %v2498, %v2494
    %v2631 = vpack.c.b16 %v2499, %v2495
    %v2632 = vpack.c.b16 %v2500, %v2496
    %v2633 = vpack.c.b16 %v2505, %v2501
    %v2634 = vpack.c.b16 %v2506, %v2502
    %v2635 = vpack.c.b16 %v2507, %v2503
    %v2636 = vpack.c.b16 %v2508, %v2504
    %v2637 = vpack.c.b16 %v2513, %v2509
    %v2638 = vpack.c.b16 %v2514, %v2510
    %v2639 = vpack.c.b16 %v2515, %v2511
    %v2640 = vpack.c.b16 %v2516, %v2512
    %v2641 = vpack.c.b16 %v2521, %v2517
    %v2642 = vpack.c.b16 %v2522, %v2518
    %v2643 = vpack.c.b16 %v2523, %v2519
    %v2644 = vpack.c.b16 %v2524, %v2520
    %v2645 = vpack.c.b16 %v2529, %v2525
    %v2646 = vpack.c.b16 %v2530, %v2526
    %v2647 = vpack.c.b16 %v2531, %v2527
    %v2648 = vpack.c.b16 %v2532, %v2528
    %v2649 = vpack.c.b16 %v2537, %v2533
    %v2650 = vpack.c.b16 %v2538, %v2534
    %v2651 = vpack.c.b16 %v2539, %v2535
    %v2652 = vpack.c.b16 %v2540, %v2536
    %v2653 = vpack.c.b16 %v2545, %v2541
    %v2654 = vpack.c.b16 %v2546, %v2542
    %v2655 = vpack.c.b16 %v2547, %v2543
    %v2656 = vpack.c.b16 %v2548, %v2544
    %v2657 = vpack.c.b16 %v2553, %v2549
    %v2658 = vpack.c.b16 %v2554, %v2550
    %v2659 = vpack.c.b16 %v2555, %v2551
    %v2660 = vpack.c.b16 %v2556, %v2552
    %v2661 = vpack.c.b16 %v2561, %v2557
    %v2662 = vpack.c.b16 %v2562, %v2558
    %v2663 = vpack.c.b16 %v2563, %v2559
    %v2664 = vpack.c.b16 %v2564, %v2560
    %v2665 = vpack.c.b16 %v2569, %v2565
    %v2666 = vpack.c.b16 %v2570, %v2566
    %v2667 = vpack.c.b16 %v2571, %v2567
    %v2668 = vpack.c.b16 %v2572, %v2568
    %2765 = vmatprep.subr.bf16.mxu0 %v2574
    %2766 = vmatpush1.bf16.msra.mxu0 %v2573
    %2767 = vmatprep.subr.bf16.mxu0 %v2578
    %2768 = vmatpush1.bf16.msra.mxu0 %v2577
    %2769 = vmatprep.subr.bf16.mxu0 %v2582
    %2770 = vmatpush1.bf16.msra.mxu0 %v2581
    %2771 = vmatprep.subr.bf16.mxu0 %v2586
    %2772 = vmatpush1.bf16.msra.mxu0 %v2585
    %2773 = vmatprep.subr.bf16.mxu0 %v2590
    %2774 = vmatpush1.bf16.msra.mxu0 %v2589
    %2775 = vmatprep.subr.bf16.mxu0 %v2594
    %2776 = vmatpush1.bf16.msra.mxu0 %v2593
    %2777 = vmatprep.subr.bf16.mxu0 %v2598
    %2778 = vmatpush1.bf16.msra.mxu0 %v2597
    %2779 = vmatprep.subr.bf16.mxu0 %v2602
    %2780 = vmatpush1.bf16.msra.mxu0 %v2601
    %2781 = vmatprep.subr.bf16.mxu0 %v2606
    %2782 = vmatpush1.bf16.msra.mxu0 %v2605
    %2783 = vmatprep.subr.bf16.mxu0 %v2610
    %2784 = vmatpush1.bf16.msra.mxu0 %v2609
    %2785 = vmatprep.subr.bf16.mxu0 %v2614
    %2786 = vmatpush1.bf16.msra.mxu0 %v2613
    %2787 = vmatprep.subr.bf16.mxu0 %v2618
    %2788 = vmatpush1.bf16.msra.mxu0 %v2617
    %2789 = vmatprep.subr.bf16.mxu0 %v2622
    %2790 = vmatpush1.bf16.msra.mxu0 %v2621
    %2791 = vmatprep.subr.bf16.mxu0 %v2626
    %2792 = vmatpush1.bf16.msra.mxu0 %v2625
    %2793 = vmatprep.subr.bf16.mxu0 %v2630
    %2794 = vmatpush1.bf16.msra.mxu0 %v2629
    %2795 = vmatprep.subr.bf16.mxu0 %v2634
    %2796 = vmatpush1.bf16.msra.mxu0 %v2633
    %2797 = vmatprep.mubr.bf16.mxu0 %v1297
    %2798 = vmatmul.mubr.bf16.gmra.mrb[0].mxu0 %v1296
    %v2799 = vpop.f32.mrb[0].mxu0
    %v2800 = vadd.f32 %v2101, %v2799
    %v2801 = vpop.f32.mrb[0].mxu0
    %v2802 = vadd.f32 %v2103, %v2801
    %v2803 = vpop.f32.mrb[0].mxu0
    %v2804 = vadd.f32 %v2105, %v2803
    %v2805 = vpop.f32.mrb[0].mxu0
    %v2806 = vadd.f32 %v2107, %v2805
    %2807 = vmatprep.mubr.bf16.mxu0 %v1300
    %2808 = vmatmul.mubr.bf16.gmra.mrb[0].mxu0 %v1299
    %v2809 = vpop.f32.mrb[0].mxu0
    %v2810 = vadd.f32 %v2111, %v2809
    %v2811 = vpop.f32.mrb[0].mxu0
    %v2812 = vadd.f32 %v2113, %v2811
    %v2813 = vpop.f32.mrb[0].mxu0
    %v2814 = vadd.f32 %v2115, %v2813
    %v2815 = vpop.f32.mrb[0].mxu0
    %v2816 = vadd.f32 %v2117, %v2815
    %2817 = vmatprep.mubr.bf16.mxu0 %v1303
    %2818 = vmatmul.mubr.bf16.gmra.mrb[0].mxu0 %v1302
    %v2819 = vpop.f32.mrb[0].mxu0
    %v2820 = vadd.f32 %v2121, %v2819
    %v2821 = vpop.f32.mrb[0].mxu0
    %v2822 = vadd.f32 %v2123, %v2821
    %v2823 = vpop.f32.mrb[0].mxu0
    %v2824 = vadd.f32 %v2125, %v2823
    %v2825 = vpop.f32.mrb[0].mxu0
    %v2826 = vadd.f32 %v2127, %v2825
    %2827 = vmatprep.mubr.bf16.mxu0 %v1306
    %2828 = vmatmul.mubr.bf16.gmra.mrb[0].mxu0 %v1305
    %v2829 = vpop.f32.mrb[0].mxu0
    %v2830 = vadd.f32 %v2131, %v2829
    %v2831 = vpop.f32.mrb[0].mxu0
    %v2832 = vadd.f32 %v2133, %v2831
    %v2833 = vpop.f32.mrb[0].mxu0
    %v2834 = vadd.f32 %v2135, %v2833
    %v2835 = vpop.f32.mrb[0].mxu0
    %v2836 = vadd.f32 %v2137, %v2835
    %2837 = vdwg.mxu0
    %2838 = vmatprep.subr.bf16.mxu0 %v2638
    %2839 = vmatpush1.bf16.msra.mxu0 %v2637
    %2840 = vmatprep.subr.bf16.mxu0 %v2642
    %2841 = vmatpush1.bf16.msra.mxu0 %v2641
    %2842 = vmatprep.subr.bf16.mxu0 %v2646
    %2843 = vmatpush1.bf16.msra.mxu0 %v2645
    %2844 = vmatprep.subr.bf16.mxu0 %v2650
    %2845 = vmatpush1.bf16.msra.mxu0 %v2649
    %2846 = vmatprep.subr.bf16.mxu0 %v2654
    %2847 = vmatpush1.bf16.msra.mxu0 %v2653
    %2848 = vmatprep.subr.bf16.mxu0 %v2658
    %2849 = vmatpush1.bf16.msra.mxu0 %v2657
    %2850 = vmatprep.subr.bf16.mxu0 %v2662
    %2851 = vmatpush1.bf16.msra.mxu0 %v2661
    %2852 = vmatprep.subr.bf16.mxu0 %v2666
    %2853 = vmatpush1.bf16.msra.mxu0 %v2665
    %2854 = vmatprep.subr.bf16.mxu0 0
    %2855 = vmatpush1.bf16.msra.mxu0 0
    %2856 = vmatprep.subr.bf16.mxu0 0
    %2857 = vmatpush1.bf16.msra.mxu0 0
    %2858 = vmatprep.subr.bf16.mxu0 0
    %2859 = vmatpush1.bf16.msra.mxu0 0
    %2860 = vmatprep.subr.bf16.mxu0 0
    %2861 = vmatpush1.bf16.msra.mxu0 0
    %2862 = vmatprep.subr.bf16.mxu0 0
    %2863 = vmatpush1.bf16.msra.mxu0 0
    %2864 = vmatprep.subr.bf16.mxu0 0
    %2865 = vmatpush1.bf16.msra.mxu0 0
    %2866 = vmatprep.subr.bf16.mxu0 0
    %2867 = vmatpush1.bf16.msra.mxu0 0
    %2868 = vmatprep.subr.bf16.mxu0 0
    %2869 = vmatpush1.bf16.msra.mxu0 0
    %2870 = vmatprep.mubr.bf16.mxu0 0
    %2871 = vmatmul.mubr.bf16.gmra.mrb[0].mxu0 %v1298
    %v2872 = vpop.f32.mrb[0].mxu0
    %v2873 = vadd.f32 %v2800, %v2872
    %v2874 = vpop.f32.mrb[0].mxu0
    %v2875 = vadd.f32 %v2802, %v2874
    %v2876 = vpop.f32.mrb[0].mxu0
    %v2877 = vadd.f32 %v2804, %v2876
    %v2878 = vpop.f32.mrb[0].mxu0
    %v2879 = vadd.f32 %v2806, %v2878
    %2880 = vmatprep.mubr.bf16.mxu0 0
    %2881 = vmatmul.mubr.bf16.gmra.mrb[0].mxu0 %v1301
    %v2882 = vpop.f32.mrb[0].mxu0
    %v2883 = vadd.f32 %v2810, %v2882
    %v2884 = vpop.f32.mrb[0].mxu0
    %v2885 = vadd.f32 %v2812, %v2884
    %v2886 = vpop.f32.mrb[0].mxu0
    %v2887 = vadd.f32 %v2814, %v2886
    %v2888 = vpop.f32.mrb[0].mxu0
    %v2889 = vadd.f32 %v2816, %v2888
    %2890 = vmatprep.mubr.bf16.mxu0 0
    %2891 = vmatmul.mubr.bf16.gmra.mrb[0].mxu0 %v1304
    %v2892 = vpop.f32.mrb[0].mxu0
    %v2893 = vadd.f32 %v2820, %v2892
    %v2894 = vpop.f32.mrb[0].mxu0
    %v2895 = vadd.f32 %v2822, %v2894
    %v2896 = vpop.f32.mrb[0].mxu0
    %v2897 = vadd.f32 %v2824, %v2896
    %v2898 = vpop.f32.mrb[0].mxu0
    %v2899 = vadd.f32 %v2826, %v2898
    %2900 = vmatprep.mubr.bf16.mxu0 0
    %2901 = vmatmul.mubr.bf16.gmra.mrb[0].mxu0 %v1307
    %v2902 = vpop.f32.mrb[0].mxu0
    %v2903 = vadd.f32 %v2830, %v2902
    %v2904 = vpop.f32.mrb[0].mxu0
    %v2905 = vadd.f32 %v2832, %v2904
    %v2906 = vpop.f32.mrb[0].mxu0
    %v2907 = vadd.f32 %v2834, %v2906
    %v2908 = vpop.f32.mrb[0].mxu0
    %v2909 = vadd.f32 %v2836, %v2908
    %2910 = vdwg.mxu0
    %2911 = vmatprep.subr.bf16.mxu0 %v2576
    %2912 = vmatpush1.bf16.msra.mxu0 %v2575
    %2913 = vmatprep.subr.bf16.mxu0 %v2580
    %2914 = vmatpush1.bf16.msra.mxu0 %v2579
    %2915 = vmatprep.subr.bf16.mxu0 %v2584
    %2916 = vmatpush1.bf16.msra.mxu0 %v2583
    %2917 = vmatprep.subr.bf16.mxu0 %v2588
    %2918 = vmatpush1.bf16.msra.mxu0 %v2587
    %2919 = vmatprep.subr.bf16.mxu0 %v2592
    %2920 = vmatpush1.bf16.msra.mxu0 %v2591
    %2921 = vmatprep.subr.bf16.mxu0 %v2596
    %2922 = vmatpush1.bf16.msra.mxu0 %v2595
    %2923 = vmatprep.subr.bf16.mxu0 %v2600
    %2924 = vmatpush1.bf16.msra.mxu0 %v2599
    %2925 = vmatprep.subr.bf16.mxu0 %v2604
    %2926 = vmatpush1.bf16.msra.mxu0 %v2603
    %2927 = vmatprep.subr.bf16.mxu0 %v2608
    %2928 = vmatpush1.bf16.msra.mxu0 %v2607
    %2929 = vmatprep.subr.bf16.mxu0 %v2612
    %2930 = vmatpush1.bf16.msra.mxu0 %v2611
    %2931 = vmatprep.subr.bf16.mxu0 %v2616
    %2932 = vmatpush1.bf16.msra.mxu0 %v2615
    %2933 = vmatprep.subr.bf16.mxu0 %v2620
    %2934 = vmatpush1.bf16.msra.mxu0 %v2619
    %2935 = vmatprep.subr.bf16.mxu0 %v2624
    %2936 = vmatpush1.bf16.msra.mxu0 %v2623
    %2937 = vmatprep.subr.bf16.mxu0 %v2628
    %2938 = vmatpush1.bf16.msra.mxu0 %v2627
    %2939 = vmatprep.subr.bf16.mxu0 %v2632
    %2940 = vmatpush1.bf16.msra.mxu0 %v2631
    %2941 = vmatprep.subr.bf16.mxu0 %v2636
    %2942 = vmatpush1.bf16.msra.mxu0 %v2635
    %2943 = vmatprep.mubr.bf16.mxu0 %v1297
    %2944 = vmatmul.mubr.bf16.gmra.mrb[0].mxu0 %v1296
    %v2945 = vpop.f32.mrb[0].mxu0
    %v2946 = vadd.f32 %v2247, %v2945
    %v2947 = vpop.f32.mrb[0].mxu0
    %v2948 = vadd.f32 %v2249, %v2947
    %v2949 = vpop.f32.mrb[0].mxu0
    %v2950 = vadd.f32 %v2251, %v2949
    %v2951 = vpop.f32.mrb[0].mxu0
    %v2952 = vadd.f32 %v2253, %v2951
    %2953 = vmatprep.mubr.bf16.mxu0 %v1300
    %2954 = vmatmul.mubr.bf16.gmra.mrb[0].mxu0 %v1299
    %v2955 = vpop.f32.mrb[0].mxu0
    %v2956 = vadd.f32 %v2257, %v2955
    %v2957 = vpop.f32.mrb[0].mxu0
    %v2958 = vadd.f32 %v2259, %v2957
    %v2959 = vpop.f32.mrb[0].mxu0
    %v2960 = vadd.f32 %v2261, %v2959
    %v2961 = vpop.f32.mrb[0].mxu0
    %v2962 = vadd.f32 %v2263, %v2961
    %2963 = vmatprep.mubr.bf16.mxu0 %v1303
    %2964 = vmatmul.mubr.bf16.gmra.mrb[0].mxu0 %v1302
    %v2965 = vpop.f32.mrb[0].mxu0
    %v2966 = vadd.f32 %v2267, %v2965
    %v2967 = vpop.f32.mrb[0].mxu0
    %v2968 = vadd.f32 %v2269, %v2967
    %v2969 = vpop.f32.mrb[0].mxu0
    %v2970 = vadd.f32 %v2271, %v2969
    %v2971 = vpop.f32.mrb[0].mxu0
    %v2972 = vadd.f32 %v2273, %v2971
    %2973 = vmatprep.mubr.bf16.mxu0 %v1306
    %2974 = vmatmul.mubr.bf16.gmra.mrb[0].mxu0 %v1305
    %v2975 = vpop.f32.mrb[0].mxu0
    %v2976 = vadd.f32 %v2277, %v2975
    %v2977 = vpop.f32.mrb[0].mxu0
    %v2978 = vadd.f32 %v2279, %v2977
    %v2979 = vpop.f32.mrb[0].mxu0
    %v2980 = vadd.f32 %v2281, %v2979
    %v2981 = vpop.f32.mrb[0].mxu0
    %v2982 = vadd.f32 %v2283, %v2981
    %2983 = vdwg.mxu0
    %2984 = vmatprep.subr.bf16.mxu0 %v2640
    %2985 = vmatpush1.bf16.msra.mxu0 %v2639
    %2986 = vmatprep.subr.bf16.mxu0 %v2644
    %2987 = vmatpush1.bf16.msra.mxu0 %v2643
    %2988 = vmatprep.subr.bf16.mxu0 %v2648
    %2989 = vmatpush1.bf16.msra.mxu0 %v2647
    %2990 = vmatprep.subr.bf16.mxu0 %v2652
    %2991 = vmatpush1.bf16.msra.mxu0 %v2651
    %2992 = vmatprep.subr.bf16.mxu0 %v2656
    %2993 = vmatpush1.bf16.msra.mxu0 %v2655
    %2994 = vmatprep.subr.bf16.mxu0 %v2660
    %2995 = vmatpush1.bf16.msra.mxu0 %v2659
    %2996 = vmatprep.subr.bf16.mxu0 %v2664
    %2997 = vmatpush1.bf16.msra.mxu0 %v2663
    %2998 = vmatprep.subr.bf16.mxu0 %v2668
    %2999 = vmatpush1.bf16.msra.mxu0 %v2667
    %3000 = vmatprep.subr.bf16.mxu0 0
    %3001 = vmatpush1.bf16.msra.mxu0 0
    %3002 = vmatprep.subr.bf16.mxu0 0
    %3003 = vmatpush1.bf16.msra.mxu0 0
    %3004 = vmatprep.subr.bf16.mxu0 0
    %3005 = vmatpush1.bf16.msra.mxu0 0
    %3006 = vmatprep.subr.bf16.mxu0 0
    %3007 = vmatpush1.bf16.msra.mxu0 0
    %3008 = vmatprep.subr.bf16.mxu0 0
    %3009 = vmatpush1.bf16.msra.mxu0 0
    %3010 = vmatprep.subr.bf16.mxu0 0
    %3011 = vmatpush1.bf16.msra.mxu0 0
    %3012 = vmatprep.subr.bf16.mxu0 0
    %3013 = vmatpush1.bf16.msra.mxu0 0
    %3014 = vmatprep.subr.bf16.mxu0 0
    %3015 = vmatpush1.bf16.msra.mxu0 0
    %3016 = vmatprep.mubr.bf16.mxu0 0
    %3017 = vmatmul.mubr.bf16.gmra.mrb[0].mxu0 %v1298
    %v3018 = vpop.f32.mrb[0].mxu0
    %v3019 = vadd.f32 %v2946, %v3018
    %v3020 = vpop.f32.mrb[0].mxu0
    %v3021 = vadd.f32 %v2948, %v3020
    %v3022 = vpop.f32.mrb[0].mxu0
    %v3023 = vadd.f32 %v2950, %v3022
    %v3024 = vpop.f32.mrb[0].mxu0
    %v3025 = vadd.f32 %v2952, %v3024
    %3026 = vmatprep.mubr.bf16.mxu0 0
    %3027 = vmatmul.mubr.bf16.gmra.mrb[0].mxu0 %v1301
    %v3028 = vpop.f32.mrb[0].mxu0
    %v3029 = vadd.f32 %v2956, %v3028
    %v3030 = vpop.f32.mrb[0].mxu0
    %v3031 = vadd.f32 %v2958, %v3030
    %v3032 = vpop.f32.mrb[0].mxu0
    %v3033 = vadd.f32 %v2960, %v3032
    %v3034 = vpop.f32.mrb[0].mxu0
    %v3035 = vadd.f32 %v2962, %v3034
    %3036 = vmatprep.mubr.bf16.mxu0 0
    %3037 = vmatmul.mubr.bf16.gmra.mrb[0].mxu0 %v1304
    %v3038 = vpop.f32.mrb[0].mxu0
    %v3039 = vadd.f32 %v2966, %v3038
    %v3040 = vpop.f32.mrb[0].mxu0
    %v3041 = vadd.f32 %v2968, %v3040
    %v3042 = vpop.f32.mrb[0].mxu0
    %v3043 = vadd.f32 %v2970, %v3042
    %v3044 = vpop.f32.mrb[0].mxu0
    %v3045 = vadd.f32 %v2972, %v3044
    %3046 = vmatprep.mubr.bf16.mxu0 0
    %3047 = vmatmul.mubr.bf16.gmra.mrb[0].mxu0 %v1307
    %v3048 = vpop.f32.mrb[0].mxu0
    %v3049 = vadd.f32 %v2976, %v3048
    %v3050 = vpop.f32.mrb[0].mxu0
    %v3051 = vadd.f32 %v2978, %v3050
    %v3052 = vpop.f32.mrb[0].mxu0
    %v3053 = vadd.f32 %v2980, %v3052
    %v3054 = vpop.f32.mrb[0].mxu0
    %v3055 = vadd.f32 %v2982, %v3054
    %3056 = vdwg.mxu0
    %v3057 = vpack.c.bf16 %v1287, %v1284
    %v3058 = vpack.c.bf16 %v1288, %v1285
    %v3059 = vpack.c.bf16 %v1289, %v1286
    %s3060 = scalar_lea.vmem [#allocation6], 1536
    %v3061 = vld [vmem:[%s3060] sm:$0xff]
    %v3062 = vld [vmem:[%s3060 + $0x8] sm:$0xff]
    %v3063 = vld [vmem:[%s3060 + $0x10] sm:$0xff]
    %v3064 = vld [vmem:[%s3060 + $0x18] sm:$0xff]
    %v3065 = vld [vmem:[%s3060 + $0x20] sm:$0xff]
    %v3066 = vld [vmem:[%s3060 + $0x28] sm:$0xff]
    %v3067 = vld [vmem:[%s3060 + $0x30] sm:$0xff]
    %v3068 = vld [vmem:[%s3060 + $0x38] sm:$0xff]
    %v3069 = vld [vmem:[%s3060 + $0x40] sm:$0xff]
    %v3070 = vld [vmem:[%s3060 + $0x48] sm:$0xff]
    %v3071 = vld [vmem:[%s3060 + $0x50] sm:$0xff]
    %v3072 = vld [vmem:[%s3060 + $0x58] sm:$0xff]
    %v3073 = vld [vmem:[%s3060 + $0x60] sm:$0xff]
    %v3074 = vld [vmem:[%s3060 + $0x68] sm:$0xff]
    %v3075 = vld [vmem:[%s3060 + $0x70] sm:$0xff]
    %v3076 = vld [vmem:[%s3060 + $0x78] sm:$0xff]
    %v3077 = vld [vmem:[%s3060 + $0x80] sm:$0xff]
    %v3078 = vld [vmem:[%s3060 + $0x88] sm:$0xff]
    %v3079 = vld [vmem:[%s3060 + $0x90] sm:$0xff]
    %v3080 = vld [vmem:[%s3060 + $0x98] sm:$0xff]
    %v3081 = vld [vmem:[%s3060 + $0xa0] sm:$0xff]
    %v3082 = vld [vmem:[%s3060 + $0xa8] sm:$0xff]
    %v3083 = vld [vmem:[%s3060 + $0xb0] sm:$0xff]
    %v3084 = vld [vmem:[%s3060 + $0xb8] sm:$0xff]
    %v3085 = vld [vmem:[%s3060 + $0xc0] sm:$0xff]
    %v3086 = vld [vmem:[%s3060 + $0xc8] sm:$0xff]
    %v3087 = vld [vmem:[%s3060 + $0xd0] sm:$0xff]
    %v3088 = vld [vmem:[%s3060 + $0xd8] sm:$0xff]
    %v3089 = vld [vmem:[%s3060 + $0xe0] sm:$0xff]
    %v3090 = vld [vmem:[%s3060 + $0xe8] sm:$0xff]
    %v3091 = vld [vmem:[%s3060 + $0xf0] sm:$0xff]
    %v3092 = vld [vmem:[%s3060 + $0xf8] sm:$0xff]
    %v3093 = vld [vmem:[%s3060 + $0x100] sm:$0xff]
    %v3094 = vld [vmem:[%s3060 + $0x108] sm:$0xff]
    %v3095 = vld [vmem:[%s3060 + $0x110] sm:$0xff]
    %v3096 = vld [vmem:[%s3060 + $0x118] sm:$0xff]
    %v3097 = vld [vmem:[%s3060 + $0x120] sm:$0xff]
    %v3098 = vld [vmem:[%s3060 + $0x128] sm:$0xff]
    %v3099 = vld [vmem:[%s3060 + $0x130] sm:$0xff]
    %v3100 = vld [vmem:[%s3060 + $0x138] sm:$0xff]
    %v3101 = vld [vmem:[%s3060 + $0x140] sm:$0xff]
    %v3102 = vld [vmem:[%s3060 + $0x148] sm:$0xff]
    %v3103 = vld [vmem:[%s3060 + $0x150] sm:$0xff]
    %v3104 = vld [vmem:[%s3060 + $0x158] sm:$0xff]
    %v3105 = vld [vmem:[%s3060 + $0x160] sm:$0xff]
    %v3106 = vld [vmem:[%s3060 + $0x168] sm:$0xff]
    %v3107 = vld [vmem:[%s3060 + $0x170] sm:$0xff]
    %v3108 = vld [vmem:[%s3060 + $0x178] sm:$0xff]
    %v3109 = vld [vmem:[%s3060 + $0x180] sm:$0xff]
    %v3110 = vld [vmem:[%s3060 + $0x188] sm:$0xff]
    %v3111 = vld [vmem:[%s3060 + $0x190] sm:$0xff]
    %v3112 = vld [vmem:[%s3060 + $0x198] sm:$0xff]
    %v3113 = vld [vmem:[%s3060 + $0x1a0] sm:$0xff]
    %v3114 = vld [vmem:[%s3060 + $0x1a8] sm:$0xff]
    %v3115 = vld [vmem:[%s3060 + $0x1b0] sm:$0xff]
    %v3116 = vld [vmem:[%s3060 + $0x1b8] sm:$0xff]
    %v3117 = vld [vmem:[%s3060 + $0x1c0] sm:$0xff]
    %v3118 = vld [vmem:[%s3060 + $0x1c8] sm:$0xff]
    %v3119 = vld [vmem:[%s3060 + $0x1d0] sm:$0xff]
    %v3120 = vld [vmem:[%s3060 + $0x1d8] sm:$0xff]
    %v3121 = vld [vmem:[%s3060 + $0x1e0] sm:$0xff]
    %v3122 = vld [vmem:[%s3060 + $0x1e8] sm:$0xff]
    %v3123 = vld [vmem:[%s3060 + $0x1f0] sm:$0xff]
    %v3124 = vld [vmem:[%s3060 + $0x1f8] sm:$0xff]
    %v3125 = vld [vmem:[%s3060 + $0x200] sm:$0xff]
    %v3126 = vld [vmem:[%s3060 + $0x208] sm:$0xff]
    %v3127 = vld [vmem:[%s3060 + $0x210] sm:$0xff]
    %v3128 = vld [vmem:[%s3060 + $0x218] sm:$0xff]
    %v3129 = vld [vmem:[%s3060 + $0x220] sm:$0xff]
    %v3130 = vld [vmem:[%s3060 + $0x228] sm:$0xff]
    %v3131 = vld [vmem:[%s3060 + $0x230] sm:$0xff]
    %v3132 = vld [vmem:[%s3060 + $0x238] sm:$0xff]
    %v3133 = vld [vmem:[%s3060 + $0x240] sm:$0xff]
    %v3134 = vld [vmem:[%s3060 + $0x248] sm:$0xff]
    %v3135 = vld [vmem:[%s3060 + $0x250] sm:$0xff]
    %v3136 = vld [vmem:[%s3060 + $0x258] sm:$0xff]
    %v3137 = vld [vmem:[%s3060 + $0x260] sm:$0xff]
    %v3138 = vld [vmem:[%s3060 + $0x268] sm:$0xff]
    %v3139 = vld [vmem:[%s3060 + $0x270] sm:$0xff]
    %v3140 = vld [vmem:[%s3060 + $0x278] sm:$0xff]
    %v3141 = vld [vmem:[%s3060 + $0x280] sm:$0xff]
    %v3142 = vld [vmem:[%s3060 + $0x288] sm:$0xff]
    %v3143 = vld [vmem:[%s3060 + $0x290] sm:$0xff]
    %v3144 = vld [vmem:[%s3060 + $0x298] sm:$0xff]
    %v3145 = vld [vmem:[%s3060 + $0x2a0] sm:$0xff]
    %v3146 = vld [vmem:[%s3060 + $0x2a8] sm:$0xff]
    %v3147 = vld [vmem:[%s3060 + $0x2b0] sm:$0xff]
    %v3148 = vld [vmem:[%s3060 + $0x2b8] sm:$0xff]
    %v3149 = vld [vmem:[%s3060 + $0x2c0] sm:$0xff]
    %v3150 = vld [vmem:[%s3060 + $0x2c8] sm:$0xff]
    %v3151 = vld [vmem:[%s3060 + $0x2d0] sm:$0xff]
    %v3152 = vld [vmem:[%s3060 + $0x2d8] sm:$0xff]
    %v3153 = vld [vmem:[%s3060 + $0x2e0] sm:$0xff]
    %v3154 = vld [vmem:[%s3060 + $0x2e8] sm:$0xff]
    %v3155 = vld [vmem:[%s3060 + $0x2f0] sm:$0xff]
    %v3156 = vld [vmem:[%s3060 + $0x2f8] sm:$0xff]
    %v3253 = vunpack.c.l.b16 %v3061
    %v3254 = vunpack.c.h.b16 %v3061
    %v3255 = vunpack.c.l.b16 %v3062
    %v3256 = vunpack.c.h.b16 %v3062
    %v3257 = vunpack.c.l.b16 %v3063
    %v3258 = vunpack.c.h.b16 %v3063
    %v3259 = vunpack.c.l.b16 %v3064
    %v3260 = vunpack.c.h.b16 %v3064
    %v3261 = vunpack.c.l.b16 %v3065
    %v3262 = vunpack.c.h.b16 %v3065
    %v3263 = vunpack.c.l.b16 %v3066
    %v3264 = vunpack.c.h.b16 %v3066
    %v3265 = vunpack.c.l.b16 %v3067
    %v3266 = vunpack.c.h.b16 %v3067
    %v3267 = vunpack.c.l.b16 %v3068
    %v3268 = vunpack.c.h.b16 %v3068
    %v3269 = vunpack.c.l.b16 %v3069
    %v3270 = vunpack.c.h.b16 %v3069
    %v3271 = vunpack.c.l.b16 %v3070
    %v3272 = vunpack.c.h.b16 %v3070
    %v3273 = vunpack.c.l.b16 %v3071
    %v3274 = vunpack.c.h.b16 %v3071
    %v3275 = vunpack.c.l.b16 %v3072
    %v3276 = vunpack.c.h.b16 %v3072
    %v3277 = vunpack.c.l.b16 %v3073
    %v3278 = vunpack.c.h.b16 %v3073
    %v3279 = vunpack.c.l.b16 %v3074
    %v3280 = vunpack.c.h.b16 %v3074
    %v3281 = vunpack.c.l.b16 %v3075
    %v3282 = vunpack.c.h.b16 %v3075
    %v3283 = vunpack.c.l.b16 %v3076
    %v3284 = vunpack.c.h.b16 %v3076
    %v3285 = vunpack.c.l.b16 %v3077
    %v3286 = vunpack.c.h.b16 %v3077
    %v3287 = vunpack.c.l.b16 %v3078
    %v3288 = vunpack.c.h.b16 %v3078
    %v3289 = vunpack.c.l.b16 %v3079
    %v3290 = vunpack.c.h.b16 %v3079
    %v3291 = vunpack.c.l.b16 %v3080
    %v3292 = vunpack.c.h.b16 %v3080
    %v3293 = vunpack.c.l.b16 %v3081
    %v3294 = vunpack.c.h.b16 %v3081
    %v3295 = vunpack.c.l.b16 %v3082
    %v3296 = vunpack.c.h.b16 %v3082
    %v3297 = vunpack.c.l.b16 %v3083
    %v3298 = vunpack.c.h.b16 %v3083
    %v3299 = vunpack.c.l.b16 %v3084
    %v3300 = vunpack.c.h.b16 %v3084
    %v3301 = vunpack.c.l.b16 %v3085
    %v3302 = vunpack.c.h.b16 %v3085
    %v3303 = vunpack.c.l.b16 %v3086
    %v3304 = vunpack.c.h.b16 %v3086
    %v3305 = vunpack.c.l.b16 %v3087
    %v3306 = vunpack.c.h.b16 %v3087
    %v3307 = vunpack.c.l.b16 %v3088
    %v3308 = vunpack.c.h.b16 %v3088
    %v3309 = vunpack.c.l.b16 %v3089
    %v3310 = vunpack.c.h.b16 %v3089
    %v3311 = vunpack.c.l.b16 %v3090
    %v3312 = vunpack.c.h.b16 %v3090
    %v3313 = vunpack.c.l.b16 %v3091
    %v3314 = vunpack.c.h.b16 %v3091
    %v3315 = vunpack.c.l.b16 %v3092
    %v3316 = vunpack.c.h.b16 %v3092
    %v3317 = vunpack.c.l.b16 %v3093
    %v3318 = vunpack.c.h.b16 %v3093
    %v3319 = vunpack.c.l.b16 %v3094
    %v3320 = vunpack.c.h.b16 %v3094
    %v3321 = vunpack.c.l.b16 %v3095
    %v3322 = vunpack.c.h.b16 %v3095
    %v3323 = vunpack.c.l.b16 %v3096
    %v3324 = vunpack.c.h.b16 %v3096
    %v3325 = vunpack.c.l.b16 %v3097
    %v3326 = vunpack.c.h.b16 %v3097
    %v3327 = vunpack.c.l.b16 %v3098
    %v3328 = vunpack.c.h.b16 %v3098
    %v3329 = vunpack.c.l.b16 %v3099
    %v3330 = vunpack.c.h.b16 %v3099
    %v3331 = vunpack.c.l.b16 %v3100
    %v3332 = vunpack.c.h.b16 %v3100
    %v3333 = vunpack.c.l.b16 %v3101
    %v3334 = vunpack.c.h.b16 %v3101
    %v3335 = vunpack.c.l.b16 %v3102
    %v3336 = vunpack.c.h.b16 %v3102
    %v3337 = vunpack.c.l.b16 %v3103
    %v3338 = vunpack.c.h.b16 %v3103
    %v3339 = vunpack.c.l.b16 %v3104
    %v3340 = vunpack.c.h.b16 %v3104
    %v3341 = vunpack.c.l.b16 %v3105
    %v3342 = vunpack.c.h.b16 %v3105
    %v3343 = vunpack.c.l.b16 %v3106
    %v3344 = vunpack.c.h.b16 %v3106
    %v3345 = vunpack.c.l.b16 %v3107
    %v3346 = vunpack.c.h.b16 %v3107
    %v3347 = vunpack.c.l.b16 %v3108
    %v3348 = vunpack.c.h.b16 %v3108
    %v3349 = vunpack.c.l.b16 %v3109
    %v3350 = vunpack.c.h.b16 %v3109
    %v3351 = vunpack.c.l.b16 %v3110
    %v3352 = vunpack.c.h.b16 %v3110
    %v3353 = vunpack.c.l.b16 %v3111
    %v3354 = vunpack.c.h.b16 %v3111
    %v3355 = vunpack.c.l.b16 %v3112
    %v3356 = vunpack.c.h.b16 %v3112
    %v3357 = vunpack.c.l.b16 %v3113
    %v3358 = vunpack.c.h.b16 %v3113
    %v3359 = vunpack.c.l.b16 %v3114
    %v3360 = vunpack.c.h.b16 %v3114
    %v3361 = vunpack.c.l.b16 %v3115
    %v3362 = vunpack.c.h.b16 %v3115
    %v3363 = vunpack.c.l.b16 %v3116
    %v3364 = vunpack.c.h.b16 %v3116
    %v3365 = vunpack.c.l.b16 %v3117
    %v3366 = vunpack.c.h.b16 %v3117
    %v3367 = vunpack.c.l.b16 %v3118
    %v3368 = vunpack.c.h.b16 %v3118
    %v3369 = vunpack.c.l.b16 %v3119
    %v3370 = vunpack.c.h.b16 %v3119
    %v3371 = vunpack.c.l.b16 %v3120
    %v3372 = vunpack.c.h.b16 %v3120
    %v3373 = vunpack.c.l.b16 %v3121
    %v3374 = vunpack.c.h.b16 %v3121
    %v3375 = vunpack.c.l.b16 %v3122
    %v3376 = vunpack.c.h.b16 %v3122
    %v3377 = vunpack.c.l.b16 %v3123
    %v3378 = vunpack.c.h.b16 %v3123
    %v3379 = vunpack.c.l.b16 %v3124
    %v3380 = vunpack.c.h.b16 %v3124
    %v3381 = vunpack.c.l.b16 %v3125
    %v3382 = vunpack.c.h.b16 %v3125
    %v3383 = vunpack.c.l.b16 %v3126
    %v3384 = vunpack.c.h.b16 %v3126
    %v3385 = vunpack.c.l.b16 %v3127
    %v3386 = vunpack.c.h.b16 %v3127
    %v3387 = vunpack.c.l.b16 %v3128
    %v3388 = vunpack.c.h.b16 %v3128
    %v3389 = vunpack.c.l.b16 %v3129
    %v3390 = vunpack.c.h.b16 %v3129
    %v3391 = vunpack.c.l.b16 %v3130
    %v3392 = vunpack.c.h.b16 %v3130
    %v3393 = vunpack.c.l.b16 %v3131
    %v3394 = vunpack.c.h.b16 %v3131
    %v3395 = vunpack.c.l.b16 %v3132
    %v3396 = vunpack.c.h.b16 %v3132
    %v3397 = vunpack.c.l.b16 %v3133
    %v3398 = vunpack.c.h.b16 %v3133
    %v3399 = vunpack.c.l.b16 %v3134
    %v3400 = vunpack.c.h.b16 %v3134
    %v3401 = vunpack.c.l.b16 %v3135
    %v3402 = vunpack.c.h.b16 %v3135
    %v3403 = vunpack.c.l.b16 %v3136
    %v3404 = vunpack.c.h.b16 %v3136
    %v3405 = vunpack.c.l.b16 %v3137
    %v3406 = vunpack.c.h.b16 %v3137
    %v3407 = vunpack.c.l.b16 %v3138
    %v3408 = vunpack.c.h.b16 %v3138
    %v3409 = vunpack.c.l.b16 %v3139
    %v3410 = vunpack.c.h.b16 %v3139
    %v3411 = vunpack.c.l.b16 %v3140
    %v3412 = vunpack.c.h.b16 %v3140
    %v3413 = vunpack.c.l.b16 %v3141
    %v3414 = vunpack.c.h.b16 %v3141
    %v3415 = vunpack.c.l.b16 %v3142
    %v3416 = vunpack.c.h.b16 %v3142
    %v3417 = vunpack.c.l.b16 %v3143
    %v3418 = vunpack.c.h.b16 %v3143
    %v3419 = vunpack.c.l.b16 %v3144
    %v3420 = vunpack.c.h.b16 %v3144
    %v3421 = vunpack.c.l.b16 %v3145
    %v3422 = vunpack.c.h.b16 %v3145
    %v3423 = vunpack.c.l.b16 %v3146
    %v3424 = vunpack.c.h.b16 %v3146
    %v3425 = vunpack.c.l.b16 %v3147
    %v3426 = vunpack.c.h.b16 %v3147
    %v3427 = vunpack.c.l.b16 %v3148
    %v3428 = vunpack.c.h.b16 %v3148
    %v3429 = vunpack.c.l.b16 %v3149
    %v3430 = vunpack.c.h.b16 %v3149
    %v3431 = vunpack.c.l.b16 %v3150
    %v3432 = vunpack.c.h.b16 %v3150
    %v3433 = vunpack.c.l.b16 %v3151
    %v3434 = vunpack.c.h.b16 %v3151
    %v3435 = vunpack.c.l.b16 %v3152
    %v3436 = vunpack.c.h.b16 %v3152
    %v3437 = vunpack.c.l.b16 %v3153
    %v3438 = vunpack.c.h.b16 %v3153
    %v3439 = vunpack.c.l.b16 %v3154
    %v3440 = vunpack.c.h.b16 %v3154
    %v3441 = vunpack.c.l.b16 %v3155
    %v3442 = vunpack.c.h.b16 %v3155
    %v3443 = vunpack.c.l.b16 %v3156
    %v3444 = vunpack.c.h.b16 %v3156
    %v3445 = vpack.c.b16 %v3257, %v3253
    %v3446 = vpack.c.b16 %v3258, %v3254
    %v3447 = vpack.c.b16 %v3259, %v3255
    %v3448 = vpack.c.b16 %v3260, %v3256
    %v3449 = vpack.c.b16 %v3265, %v3261
    %v3450 = vpack.c.b16 %v3266, %v3262
    %v3451 = vpack.c.b16 %v3267, %v3263
    %v3452 = vpack.c.b16 %v3268, %v3264
    %v3453 = vpack.c.b16 %v3273, %v3269
    %v3454 = vpack.c.b16 %v3274, %v3270
    %v3455 = vpack.c.b16 %v3275, %v3271
    %v3456 = vpack.c.b16 %v3276, %v3272
    %v3457 = vpack.c.b16 %v3281, %v3277
    %v3458 = vpack.c.b16 %v3282, %v3278
    %v3459 = vpack.c.b16 %v3283, %v3279
    %v3460 = vpack.c.b16 %v3284, %v3280
    %v3461 = vpack.c.b16 %v3289, %v3285
    %v3462 = vpack.c.b16 %v3290, %v3286
    %v3463 = vpack.c.b16 %v3291, %v3287
    %v3464 = vpack.c.b16 %v3292, %v3288
    %v3465 = vpack.c.b16 %v3297, %v3293
    %v3466 = vpack.c.b16 %v3298, %v3294
    %v3467 = vpack.c.b16 %v3299, %v3295
    %v3468 = vpack.c.b16 %v3300, %v3296
    %v3469 = vpack.c.b16 %v3305, %v3301
    %v3470 = vpack.c.b16 %v3306, %v3302
    %v3471 = vpack.c.b16 %v3307, %v3303
    %v3472 = vpack.c.b16 %v3308, %v3304
    %v3473 = vpack.c.b16 %v3313, %v3309
    %v3474 = vpack.c.b16 %v3314, %v3310
    %v3475 = vpack.c.b16 %v3315, %v3311
    %v3476 = vpack.c.b16 %v3316, %v3312
    %v3477 = vpack.c.b16 %v3321, %v3317
    %v3478 = vpack.c.b16 %v3322, %v3318
    %v3479 = vpack.c.b16 %v3323, %v3319
    %v3480 = vpack.c.b16 %v3324, %v3320
    %v3481 = vpack.c.b16 %v3329, %v3325
    %v3482 = vpack.c.b16 %v3330, %v3326
    %v3483 = vpack.c.b16 %v3331, %v3327
    %v3484 = vpack.c.b16 %v3332, %v3328
    %v3485 = vpack.c.b16 %v3337, %v3333
    %v3486 = vpack.c.b16 %v3338, %v3334
    %v3487 = vpack.c.b16 %v3339, %v3335
    %v3488 = vpack.c.b16 %v3340, %v3336
    %v3489 = vpack.c.b16 %v3345, %v3341
    %v3490 = vpack.c.b16 %v3346, %v3342
    %v3491 = vpack.c.b16 %v3347, %v3343
    %v3492 = vpack.c.b16 %v3348, %v3344
    %v3493 = vpack.c.b16 %v3353, %v3349
    %v3494 = vpack.c.b16 %v3354, %v3350
    %v3495 = vpack.c.b16 %v3355, %v3351
    %v3496 = vpack.c.b16 %v3356, %v3352
    %v3497 = vpack.c.b16 %v3361, %v3357
    %v3498 = vpack.c.b16 %v3362, %v3358
    %v3499 = vpack.c.b16 %v3363, %v3359
    %v3500 = vpack.c.b16 %v3364, %v3360
    %v3501 = vpack.c.b16 %v3369, %v3365
    %v3502 = vpack.c.b16 %v3370, %v3366
    %v3503 = vpack.c.b16 %v3371, %v3367
    %v3504 = vpack.c.b16 %v3372, %v3368
    %v3505 = vpack.c.b16 %v3377, %v3373
    %v3506 = vpack.c.b16 %v3378, %v3374
    %v3507 = vpack.c.b16 %v3379, %v3375
    %v3508 = vpack.c.b16 %v3380, %v3376
    %v3509 = vpack.c.b16 %v3385, %v3381
    %v3510 = vpack.c.b16 %v3386, %v3382
    %v3511 = vpack.c.b16 %v3387, %v3383
    %v3512 = vpack.c.b16 %v3388, %v3384
    %v3513 = vpack.c.b16 %v3393, %v3389
    %v3514 = vpack.c.b16 %v3394, %v3390
    %v3515 = vpack.c.b16 %v3395, %v3391
    %v3516 = vpack.c.b16 %v3396, %v3392
    %v3517 = vpack.c.b16 %v3401, %v3397
    %v3518 = vpack.c.b16 %v3402, %v3398
    %v3519 = vpack.c.b16 %v3403, %v3399
    %v3520 = vpack.c.b16 %v3404, %v3400
    %v3521 = vpack.c.b16 %v3409, %v3405
    %v3522 = vpack.c.b16 %v3410, %v3406
    %v3523 = vpack.c.b16 %v3411, %v3407
    %v3524 = vpack.c.b16 %v3412, %v3408
    %v3525 = vpack.c.b16 %v3417, %v3413
    %v3526 = vpack.c.b16 %v3418, %v3414
    %v3527 = vpack.c.b16 %v3419, %v3415
    %v3528 = vpack.c.b16 %v3420, %v3416
    %v3529 = vpack.c.b16 %v3425, %v3421
    %v3530 = vpack.c.b16 %v3426, %v3422
    %v3531 = vpack.c.b16 %v3427, %v3423
    %v3532 = vpack.c.b16 %v3428, %v3424
    %v3533 = vpack.c.b16 %v3433, %v3429
    %v3534 = vpack.c.b16 %v3434, %v3430
    %v3535 = vpack.c.b16 %v3435, %v3431
    %v3536 = vpack.c.b16 %v3436, %v3432
    %v3537 = vpack.c.b16 %v3441, %v3437
    %v3538 = vpack.c.b16 %v3442, %v3438
    %v3539 = vpack.c.b16 %v3443, %v3439
    %v3540 = vpack.c.b16 %v3444, %v3440
    %3637 = vmatprep.subr.bf16.mxu0 %v3446
    %3638 = vmatpush1.bf16.msra.mxu0 %v3445
    %3639 = vmatprep.subr.bf16.mxu0 %v3450
    %3640 = vmatpush1.bf16.msra.mxu0 %v3449
    %3641 = vmatprep.subr.bf16.mxu0 %v3454
    %3642 = vmatpush1.bf16.msra.mxu0 %v3453
    %3643 = vmatprep.subr.bf16.mxu0 %v3458
    %3644 = vmatpush1.bf16.msra.mxu0 %v3457
    %3645 = vmatprep.subr.bf16.mxu0 %v3462
    %3646 = vmatpush1.bf16.msra.mxu0 %v3461
    %3647 = vmatprep.subr.bf16.mxu0 %v3466
    %3648 = vmatpush1.bf16.msra.mxu0 %v3465
    %3649 = vmatprep.subr.bf16.mxu0 %v3470
    %3650 = vmatpush1.bf16.msra.mxu0 %v3469
    %3651 = vmatprep.subr.bf16.mxu0 %v3474
    %3652 = vmatpush1.bf16.msra.mxu0 %v3473
    %3653 = vmatprep.subr.bf16.mxu0 %v3478
    %3654 = vmatpush1.bf16.msra.mxu0 %v3477
    %3655 = vmatprep.subr.bf16.mxu0 %v3482
    %3656 = vmatpush1.bf16.msra.mxu0 %v3481
    %3657 = vmatprep.subr.bf16.mxu0 %v3486
    %3658 = vmatpush1.bf16.msra.mxu0 %v3485
    %3659 = vmatprep.subr.bf16.mxu0 %v3490
    %3660 = vmatpush1.bf16.msra.mxu0 %v3489
    %3661 = vmatprep.subr.bf16.mxu0 %v3494
    %3662 = vmatpush1.bf16.msra.mxu0 %v3493
    %3663 = vmatprep.subr.bf16.mxu0 %v3498
    %3664 = vmatpush1.bf16.msra.mxu0 %v3497
    %3665 = vmatprep.subr.bf16.mxu0 %v3502
    %3666 = vmatpush1.bf16.msra.mxu0 %v3501
    %3667 = vmatprep.subr.bf16.mxu0 %v3506
    %3668 = vmatpush1.bf16.msra.mxu0 %v3505
    %3669 = vmatprep.mubr.bf16.mxu0 %v1300
    %3670 = vmatmul.mubr.bf16.gmra.mrb[0].mxu0 %v1299
    %v3671 = vpop.f32.mrb[0].mxu0
    %v3672 = vadd.f32 0.0, %v3671
    %v3673 = vpop.f32.mrb[0].mxu0
    %v3674 = vadd.f32 0.0, %v3673
    %v3675 = vpop.f32.mrb[0].mxu0
    %v3676 = vadd.f32 0.0, %v3675
    %v3677 = vpop.f32.mrb[0].mxu0
    %v3678 = vadd.f32 0.0, %v3677
    %3679 = vmatprep.mubr.bf16.mxu0 %v1303
    %3680 = vmatmul.mubr.bf16.gmra.mrb[0].mxu0 %v1302
    %v3681 = vpop.f32.mrb[0].mxu0
    %v3682 = vadd.f32 0.0, %v3681
    %v3683 = vpop.f32.mrb[0].mxu0
    %v3684 = vadd.f32 0.0, %v3683
    %v3685 = vpop.f32.mrb[0].mxu0
    %v3686 = vadd.f32 0.0, %v3685
    %v3687 = vpop.f32.mrb[0].mxu0
    %v3688 = vadd.f32 0.0, %v3687
    %3689 = vmatprep.mubr.bf16.mxu0 %v1306
    %3690 = vmatmul.mubr.bf16.gmra.mrb[0].mxu0 %v1305
    %v3691 = vpop.f32.mrb[0].mxu0
    %v3692 = vadd.f32 0.0, %v3691
    %v3693 = vpop.f32.mrb[0].mxu0
    %v3694 = vadd.f32 0.0, %v3693
    %v3695 = vpop.f32.mrb[0].mxu0
    %v3696 = vadd.f32 0.0, %v3695
    %v3697 = vpop.f32.mrb[0].mxu0
    %v3698 = vadd.f32 0.0, %v3697
    %3699 = vmatprep.mubr.bf16.mxu0 %v3058
    %3700 = vmatmul.mubr.bf16.gmra.mrb[0].mxu0 %v3057
    %v3701 = vpop.f32.mrb[0].mxu0
    %v3702 = vadd.f32 0.0, %v3701
    %v3703 = vpop.f32.mrb[0].mxu0
    %v3704 = vadd.f32 0.0, %v3703
    %v3705 = vpop.f32.mrb[0].mxu0
    %v3706 = vadd.f32 0.0, %v3705
    %v3707 = vpop.f32.mrb[0].mxu0
    %v3708 = vadd.f32 0.0, %v3707
    %3709 = vdwg.mxu0
    %3710 = vmatprep.subr.bf16.mxu0 %v3510
    %3711 = vmatpush1.bf16.msra.mxu0 %v3509
    %3712 = vmatprep.subr.bf16.mxu0 %v3514
    %3713 = vmatpush1.bf16.msra.mxu0 %v3513
    %3714 = vmatprep.subr.bf16.mxu0 %v3518
    %3715 = vmatpush1.bf16.msra.mxu0 %v3517
    %3716 = vmatprep.subr.bf16.mxu0 %v3522
    %3717 = vmatpush1.bf16.msra.mxu0 %v3521
    %3718 = vmatprep.subr.bf16.mxu0 %v3526
    %3719 = vmatpush1.bf16.msra.mxu0 %v3525
    %3720 = vmatprep.subr.bf16.mxu0 %v3530
    %3721 = vmatpush1.bf16.msra.mxu0 %v3529
    %3722 = vmatprep.subr.bf16.mxu0 %v3534
    %3723 = vmatpush1.bf16.msra.mxu0 %v3533
    %3724 = vmatprep.subr.bf16.mxu0 %v3538
    %3725 = vmatpush1.bf16.msra.mxu0 %v3537
    %3726 = vmatprep.subr.bf16.mxu0 0
    %3727 = vmatpush1.bf16.msra.mxu0 0
    %3728 = vmatprep.subr.bf16.mxu0 0
    %3729 = vmatpush1.bf16.msra.mxu0 0
    %3730 = vmatprep.subr.bf16.mxu0 0
    %3731 = vmatpush1.bf16.msra.mxu0 0
    %3732 = vmatprep.subr.bf16.mxu0 0
    %3733 = vmatpush1.bf16.msra.mxu0 0
    %3734 = vmatprep.subr.bf16.mxu0 0
    %3735 = vmatpush1.bf16.msra.mxu0 0
    %3736 = vmatprep.subr.bf16.mxu0 0
    %3737 = vmatpush1.bf16.msra.mxu0 0
    %3738 = vmatprep.subr.bf16.mxu0 0
    %3739 = vmatpush1.bf16.msra.mxu0 0
    %3740 = vmatprep.subr.bf16.mxu0 0
    %3741 = vmatpush1.bf16.msra.mxu0 0
    %3742 = vmatprep.mubr.bf16.mxu0 0
    %3743 = vmatmul.mubr.bf16.gmra.mrb[0].mxu0 %v1301
    %v3744 = vpop.f32.mrb[0].mxu0
    %v3745 = vadd.f32 %v3672, %v3744
    %v3746 = vpop.f32.mrb[0].mxu0
    %v3747 = vadd.f32 %v3674, %v3746
    %v3748 = vpop.f32.mrb[0].mxu0
    %v3749 = vadd.f32 %v3676, %v3748
    %v3750 = vpop.f32.mrb[0].mxu0
    %v3751 = vadd.f32 %v3678, %v3750
    %3752 = vmatprep.mubr.bf16.mxu0 0
    %3753 = vmatmul.mubr.bf16.gmra.mrb[0].mxu0 %v1304
    %v3754 = vpop.f32.mrb[0].mxu0
    %v3755 = vadd.f32 %v3682, %v3754
    %v3756 = vpop.f32.mrb[0].mxu0
    %v3757 = vadd.f32 %v3684, %v3756
    %v3758 = vpop.f32.mrb[0].mxu0
    %v3759 = vadd.f32 %v3686, %v3758
    %v3760 = vpop.f32.mrb[0].mxu0
    %v3761 = vadd.f32 %v3688, %v3760
    %3762 = vmatprep.mubr.bf16.mxu0 0
    %3763 = vmatmul.mubr.bf16.gmra.mrb[0].mxu0 %v1307
    %v3764 = vpop.f32.mrb[0].mxu0
    %v3765 = vadd.f32 %v3692, %v3764
    %v3766 = vpop.f32.mrb[0].mxu0
    %v3767 = vadd.f32 %v3694, %v3766
    %v3768 = vpop.f32.mrb[0].mxu0
    %v3769 = vadd.f32 %v3696, %v3768
    %v3770 = vpop.f32.mrb[0].mxu0
    %v3771 = vadd.f32 %v3698, %v3770
    %3772 = vmatprep.mubr.bf16.mxu0 0
    %3773 = vmatmul.mubr.bf16.gmra.mrb[0].mxu0 %v3059
    %v3774 = vpop.f32.mrb[0].mxu0
    %v3775 = vadd.f32 %v3702, %v3774
    %v3776 = vpop.f32.mrb[0].mxu0
    %v3777 = vadd.f32 %v3704, %v3776
    %v3778 = vpop.f32.mrb[0].mxu0
    %v3779 = vadd.f32 %v3706, %v3778
    %v3780 = vpop.f32.mrb[0].mxu0
    %v3781 = vadd.f32 %v3708, %v3780
    %3782 = vdwg.mxu0
    %3783 = vmatprep.subr.bf16.mxu0 %v3448
    %3784 = vmatpush1.bf16.msra.mxu0 %v3447
    %3785 = vmatprep.subr.bf16.mxu0 %v3452
    %3786 = vmatpush1.bf16.msra.mxu0 %v3451
    %3787 = vmatprep.subr.bf16.mxu0 %v3456
    %3788 = vmatpush1.bf16.msra.mxu0 %v3455
    %3789 = vmatprep.subr.bf16.mxu0 %v3460
    %3790 = vmatpush1.bf16.msra.mxu0 %v3459
    %3791 = vmatprep.subr.bf16.mxu0 %v3464
    %3792 = vmatpush1.bf16.msra.mxu0 %v3463
    %3793 = vmatprep.subr.bf16.mxu0 %v3468
    %3794 = vmatpush1.bf16.msra.mxu0 %v3467
    %3795 = vmatprep.subr.bf16.mxu0 %v3472
    %3796 = vmatpush1.bf16.msra.mxu0 %v3471
    %3797 = vmatprep.subr.bf16.mxu0 %v3476
    %3798 = vmatpush1.bf16.msra.mxu0 %v3475
    %3799 = vmatprep.subr.bf16.mxu0 %v3480
    %3800 = vmatpush1.bf16.msra.mxu0 %v3479
    %3801 = vmatprep.subr.bf16.mxu0 %v3484
    %3802 = vmatpush1.bf16.msra.mxu0 %v3483
    %3803 = vmatprep.subr.bf16.mxu0 %v3488
    %3804 = vmatpush1.bf16.msra.mxu0 %v3487
    %3805 = vmatprep.subr.bf16.mxu0 %v3492
    %3806 = vmatpush1.bf16.msra.mxu0 %v3491
    %3807 = vmatprep.subr.bf16.mxu0 %v3496
    %3808 = vmatpush1.bf16.msra.mxu0 %v3495
    %3809 = vmatprep.subr.bf16.mxu0 %v3500
    %3810 = vmatpush1.bf16.msra.mxu0 %v3499
    %3811 = vmatprep.subr.bf16.mxu0 %v3504
    %3812 = vmatpush1.bf16.msra.mxu0 %v3503
    %3813 = vmatprep.subr.bf16.mxu0 %v3508
    %3814 = vmatpush1.bf16.msra.mxu0 %v3507
    %3815 = vmatprep.mubr.bf16.mxu0 %v1300
    %3816 = vmatmul.mubr.bf16.gmra.mrb[0].mxu0 %v1299
    %v3817 = vpop.f32.mrb[0].mxu0
    %v3818 = vadd.f32 0.0, %v3817
    %v3819 = vpop.f32.mrb[0].mxu0
    %v3820 = vadd.f32 0.0, %v3819
    %v3821 = vpop.f32.mrb[0].mxu0
    %v3822 = vadd.f32 0.0, %v3821
    %v3823 = vpop.f32.mrb[0].mxu0
    %v3824 = vadd.f32 0.0, %v3823
    %3825 = vmatprep.mubr.bf16.mxu0 %v1303
    %3826 = vmatmul.mubr.bf16.gmra.mrb[0].mxu0 %v1302
    %v3827 = vpop.f32.mrb[0].mxu0
    %v3828 = vadd.f32 0.0, %v3827
    %v3829 = vpop.f32.mrb[0].mxu0
    %v3830 = vadd.f32 0.0, %v3829
    %v3831 = vpop.f32.mrb[0].mxu0
    %v3832 = vadd.f32 0.0, %v3831
    %v3833 = vpop.f32.mrb[0].mxu0
    %v3834 = vadd.f32 0.0, %v3833
    %3835 = vmatprep.mubr.bf16.mxu0 %v1306
    %3836 = vmatmul.mubr.bf16.gmra.mrb[0].mxu0 %v1305
    %v3837 = vpop.f32.mrb[0].mxu0
    %v3838 = vadd.f32 0.0, %v3837
    %v3839 = vpop.f32.mrb[0].mxu0
    %v3840 = vadd.f32 0.0, %v3839
    %v3841 = vpop.f32.mrb[0].mxu0
    %v3842 = vadd.f32 0.0, %v3841
    %v3843 = vpop.f32.mrb[0].mxu0
    %v3844 = vadd.f32 0.0, %v3843
    %3845 = vmatprep.mubr.bf16.mxu0 %v3058
    %3846 = vmatmul.mubr.bf16.gmra.mrb[0].mxu0 %v3057
    %v3847 = vpop.f32.mrb[0].mxu0
    %v3848 = vadd.f32 0.0, %v3847
    %v3849 = vpop.f32.mrb[0].mxu0
    %v3850 = vadd.f32 0.0, %v3849
    %v3851 = vpop.f32.mrb[0].mxu0
    %v3852 = vadd.f32 0.0, %v3851
    %v3853 = vpop.f32.mrb[0].mxu0
    %v3854 = vadd.f32 0.0, %v3853
    %3855 = vdwg.mxu0
    %3856 = vmatprep.subr.bf16.mxu0 %v3512
    %3857 = vmatpush1.bf16.msra.mxu0 %v3511
    %3858 = vmatprep.subr.bf16.mxu0 %v3516
    %3859 = vmatpush1.bf16.msra.mxu0 %v3515
    %3860 = vmatprep.subr.bf16.mxu0 %v3520
    %3861 = vmatpush1.bf16.msra.mxu0 %v3519
    %3862 = vmatprep.subr.bf16.mxu0 %v3524
    %3863 = vmatpush1.bf16.msra.mxu0 %v3523
    %3864 = vmatprep.subr.bf16.mxu0 %v3528
    %3865 = vmatpush1.bf16.msra.mxu0 %v3527
    %3866 = vmatprep.subr.bf16.mxu0 %v3532
    %3867 = vmatpush1.bf16.msra.mxu0 %v3531
    %3868 = vmatprep.subr.bf16.mxu0 %v3536
    %3869 = vmatpush1.bf16.msra.mxu0 %v3535
    %3870 = vmatprep.subr.bf16.mxu0 %v3540
    %3871 = vmatpush1.bf16.msra.mxu0 %v3539
    %3872 = vmatprep.subr.bf16.mxu0 0
    %3873 = vmatpush1.bf16.msra.mxu0 0
    %3874 = vmatprep.subr.bf16.mxu0 0
    %3875 = vmatpush1.bf16.msra.mxu0 0
    %3876 = vmatprep.subr.bf16.mxu0 0
    %3877 = vmatpush1.bf16.msra.mxu0 0
    %3878 = vmatprep.subr.bf16.mxu0 0
    %3879 = vmatpush1.bf16.msra.mxu0 0
    %3880 = vmatprep.subr.bf16.mxu0 0
    %3881 = vmatpush1.bf16.msra.mxu0 0
    %3882 = vmatprep.subr.bf16.mxu0 0
    %3883 = vmatpush1.bf16.msra.mxu0 0
    %3884 = vmatprep.subr.bf16.mxu0 0
    %3885 = vmatpush1.bf16.msra.mxu0 0
    %3886 = vmatprep.subr.bf16.mxu0 0
    %3887 = vmatpush1.bf16.msra.mxu0 0
    %3888 = vmatprep.mubr.bf16.mxu0 0
    %3889 = vmatmul.mubr.bf16.gmra.mrb[0].mxu0 %v1301
    %v3890 = vpop.f32.mrb[0].mxu0
    %v3891 = vadd.f32 %v3818, %v3890
    %v3892 = vpop.f32.mrb[0].mxu0
    %v3893 = vadd.f32 %v3820, %v3892
    %v3894 = vpop.f32.mrb[0].mxu0
    %v3895 = vadd.f32 %v3822, %v3894
    %v3896 = vpop.f32.mrb[0].mxu0
    %v3897 = vadd.f32 %v3824, %v3896
    %3898 = vmatprep.mubr.bf16.mxu0 0
    %3899 = vmatmul.mubr.bf16.gmra.mrb[0].mxu0 %v1304
    %v3900 = vpop.f32.mrb[0].mxu0
    %v3901 = vadd.f32 %v3828, %v3900
    %v3902 = vpop.f32.mrb[0].mxu0
    %v3903 = vadd.f32 %v3830, %v3902
    %v3904 = vpop.f32.mrb[0].mxu0
    %v3905 = vadd.f32 %v3832, %v3904
    %v3906 = vpop.f32.mrb[0].mxu0
    %v3907 = vadd.f32 %v3834, %v3906
    %3908 = vmatprep.mubr.bf16.mxu0 0
    %3909 = vmatmul.mubr.bf16.gmra.mrb[0].mxu0 %v1307
    %v3910 = vpop.f32.mrb[0].mxu0
    %v3911 = vadd.f32 %v3838, %v3910
    %v3912 = vpop.f32.mrb[0].mxu0
    %v3913 = vadd.f32 %v3840, %v3912
    %v3914 = vpop.f32.mrb[0].mxu0
    %v3915 = vadd.f32 %v3842, %v3914
    %v3916 = vpop.f32.mrb[0].mxu0
    %v3917 = vadd.f32 %v3844, %v3916
    %3918 = vmatprep.mubr.bf16.mxu0 0
    %3919 = vmatmul.mubr.bf16.gmra.mrb[0].mxu0 %v3059
    %v3920 = vpop.f32.mrb[0].mxu0
    %v3921 = vadd.f32 %v3848, %v3920
    %v3922 = vpop.f32.mrb[0].mxu0
    %v3923 = vadd.f32 %v3850, %v3922
    %v3924 = vpop.f32.mrb[0].mxu0
    %v3925 = vadd.f32 %v3852, %v3924
    %v3926 = vpop.f32.mrb[0].mxu0
    %v3927 = vadd.f32 %v3854, %v3926
    %3928 = vdwg.mxu0
    %v3929 = vadd.f32 %v2873, %v3745
    %v3930 = vadd.f32 %v2875, %v3747
    %v3931 = vadd.f32 %v3019, %v3891
    %v3932 = vadd.f32 %v3021, %v3893
    %v3933 = vadd.f32 %v2877, %v3749
    %v3934 = vadd.f32 %v2879, %v3751
    %v3935 = vadd.f32 %v3023, %v3895
    %v3936 = vadd.f32 %v3025, %v3897
    %v3937 = vadd.f32 %v2883, %v3755
    %v3938 = vadd.f32 %v2885, %v3757
    %v3939 = vadd.f32 %v3029, %v3901
    %v3940 = vadd.f32 %v3031, %v3903
    %v3941 = vadd.f32 %v2887, %v3759
    %v3942 = vadd.f32 %v2889, %v3761
    %v3943 = vadd.f32 %v3033, %v3905
    %v3944 = vadd.f32 %v3035, %v3907
    %v3945 = vadd.f32 %v2893, %v3765
    %v3946 = vadd.f32 %v2895, %v3767
    %v3947 = vadd.f32 %v3039, %v3911
    %v3948 = vadd.f32 %v3041, %v3913
    %v3949 = vadd.f32 %v2897, %v3769
    %v3950 = vadd.f32 %v2899, %v3771
    %v3951 = vadd.f32 %v3043, %v3915
    %v3952 = vadd.f32 %v3045, %v3917
    %v3953 = vadd.f32 %v2903, %v3775
    %v3954 = vadd.f32 %v2905, %v3777
    %v3955 = vadd.f32 %v3049, %v3921
    %v3956 = vadd.f32 %v3051, %v3923
    %v3957 = vadd.f32 %v2907, %v3779
    %v3958 = vadd.f32 %v2909, %v3781
    %v3959 = vadd.f32 %v3053, %v3925
    %v3960 = vadd.f32 %v3055, %v3927
    %v3961 = vpack.c.bf16 %v1290, %v1287
    %v3962 = vpack.c.bf16 %v1291, %v1288
    %v3963 = vpack.c.bf16 %v1292, %v1289
    %s3964 = scalar_lea.vmem [#allocation6], 2304
    %v3965 = vld [vmem:[%s3964] sm:$0xff]
    %v3966 = vld [vmem:[%s3964 + $0x8] sm:$0xff]
    %v3967 = vld [vmem:[%s3964 + $0x10] sm:$0xff]
    %v3968 = vld [vmem:[%s3964 + $0x18] sm:$0xff]
    %v3969 = vld [vmem:[%s3964 + $0x20] sm:$0xff]
    %v3970 = vld [vmem:[%s3964 + $0x28] sm:$0xff]
    %v3971 = vld [vmem:[%s3964 + $0x30] sm:$0xff]
    %v3972 = vld [vmem:[%s3964 + $0x38] sm:$0xff]
    %v3973 = vld [vmem:[%s3964 + $0x40] sm:$0xff]
    %v3974 = vld [vmem:[%s3964 + $0x48] sm:$0xff]
    %v3975 = vld [vmem:[%s3964 + $0x50] sm:$0xff]
    %v3976 = vld [vmem:[%s3964 + $0x58] sm:$0xff]
    %v3977 = vld [vmem:[%s3964 + $0x60] sm:$0xff]
    %v3978 = vld [vmem:[%s3964 + $0x68] sm:$0xff]
    %v3979 = vld [vmem:[%s3964 + $0x70] sm:$0xff]
    %v3980 = vld [vmem:[%s3964 + $0x78] sm:$0xff]
    %v3981 = vld [vmem:[%s3964 + $0x80] sm:$0xff]
    %v3982 = vld [vmem:[%s3964 + $0x88] sm:$0xff]
    %v3983 = vld [vmem:[%s3964 + $0x90] sm:$0xff]
    %v3984 = vld [vmem:[%s3964 + $0x98] sm:$0xff]
    %v3985 = vld [vmem:[%s3964 + $0xa0] sm:$0xff]
    %v3986 = vld [vmem:[%s3964 + $0xa8] sm:$0xff]
    %v3987 = vld [vmem:[%s3964 + $0xb0] sm:$0xff]
    %v3988 = vld [vmem:[%s3964 + $0xb8] sm:$0xff]
    %v3989 = vld [vmem:[%s3964 + $0xc0] sm:$0xff]
    %v3990 = vld [vmem:[%s3964 + $0xc8] sm:$0xff]
    %v3991 = vld [vmem:[%s3964 + $0xd0] sm:$0xff]
    %v3992 = vld [vmem:[%s3964 + $0xd8] sm:$0xff]
    %v3993 = vld [vmem:[%s3964 + $0xe0] sm:$0xff]
    %v3994 = vld [vmem:[%s3964 + $0xe8] sm:$0xff]
    %v3995 = vld [vmem:[%s3964 + $0xf0] sm:$0xff]
    %v3996 = vld [vmem:[%s3964 + $0xf8] sm:$0xff]
    %v3997 = vld [vmem:[%s3964 + $0x100] sm:$0xff]
    %v3998 = vld [vmem:[%s3964 + $0x108] sm:$0xff]
    %v3999 = vld [vmem:[%s3964 + $0x110] sm:$0xff]
    %v4000 = vld [vmem:[%s3964 + $0x118] sm:$0xff]
    %v4001 = vld [vmem:[%s3964 + $0x120] sm:$0xff]
    %v4002 = vld [vmem:[%s3964 + $0x128] sm:$0xff]
    %v4003 = vld [vmem:[%s3964 + $0x130] sm:$0xff]
    %v4004 = vld [vmem:[%s3964 + $0x138] sm:$0xff]
    %v4005 = vld [vmem:[%s3964 + $0x140] sm:$0xff]
    %v4006 = vld [vmem:[%s3964 + $0x148] sm:$0xff]
    %v4007 = vld [vmem:[%s3964 + $0x150] sm:$0xff]
    %v4008 = vld [vmem:[%s3964 + $0x158] sm:$0xff]
    %v4009 = vld [vmem:[%s3964 + $0x160] sm:$0xff]
    %v4010 = vld [vmem:[%s3964 + $0x168] sm:$0xff]
    %v4011 = vld [vmem:[%s3964 + $0x170] sm:$0xff]
    %v4012 = vld [vmem:[%s3964 + $0x178] sm:$0xff]
    %v4013 = vld [vmem:[%s3964 + $0x180] sm:$0xff]
    %v4014 = vld [vmem:[%s3964 + $0x188] sm:$0xff]
    %v4015 = vld [vmem:[%s3964 + $0x190] sm:$0xff]
    %v4016 = vld [vmem:[%s3964 + $0x198] sm:$0xff]
    %v4017 = vld [vmem:[%s3964 + $0x1a0] sm:$0xff]
    %v4018 = vld [vmem:[%s3964 + $0x1a8] sm:$0xff]
    %v4019 = vld [vmem:[%s3964 + $0x1b0] sm:$0xff]
    %v4020 = vld [vmem:[%s3964 + $0x1b8] sm:$0xff]
    %v4021 = vld [vmem:[%s3964 + $0x1c0] sm:$0xff]
    %v4022 = vld [vmem:[%s3964 + $0x1c8] sm:$0xff]
    %v4023 = vld [vmem:[%s3964 + $0x1d0] sm:$0xff]
    %v4024 = vld [vmem:[%s3964 + $0x1d8] sm:$0xff]
    %v4025 = vld [vmem:[%s3964 + $0x1e0] sm:$0xff]
    %v4026 = vld [vmem:[%s3964 + $0x1e8] sm:$0xff]
    %v4027 = vld [vmem:[%s3964 + $0x1f0] sm:$0xff]
    %v4028 = vld [vmem:[%s3964 + $0x1f8] sm:$0xff]
    %v4029 = vld [vmem:[%s3964 + $0x200] sm:$0xff]
    %v4030 = vld [vmem:[%s3964 + $0x208] sm:$0xff]
    %v4031 = vld [vmem:[%s3964 + $0x210] sm:$0xff]
    %v4032 = vld [vmem:[%s3964 + $0x218] sm:$0xff]
    %v4033 = vld [vmem:[%s3964 + $0x220] sm:$0xff]
    %v4034 = vld [vmem:[%s3964 + $0x228] sm:$0xff]
    %v4035 = vld [vmem:[%s3964 + $0x230] sm:$0xff]
    %v4036 = vld [vmem:[%s3964 + $0x238] sm:$0xff]
    %v4037 = vld [vmem:[%s3964 + $0x240] sm:$0xff]
    %v4038 = vld [vmem:[%s3964 + $0x248] sm:$0xff]
    %v4039 = vld [vmem:[%s3964 + $0x250] sm:$0xff]
    %v4040 = vld [vmem:[%s3964 + $0x258] sm:$0xff]
    %v4041 = vld [vmem:[%s3964 + $0x260] sm:$0xff]
    %v4042 = vld [vmem:[%s3964 + $0x268] sm:$0xff]
    %v4043 = vld [vmem:[%s3964 + $0x270] sm:$0xff]
    %v4044 = vld [vmem:[%s3964 + $0x278] sm:$0xff]
    %v4045 = vld [vmem:[%s3964 + $0x280] sm:$0xff]
    %v4046 = vld [vmem:[%s3964 + $0x288] sm:$0xff]
    %v4047 = vld [vmem:[%s3964 + $0x290] sm:$0xff]
    %v4048 = vld [vmem:[%s3964 + $0x298] sm:$0xff]
    %v4049 = vld [vmem:[%s3964 + $0x2a0] sm:$0xff]
    %v4050 = vld [vmem:[%s3964 + $0x2a8] sm:$0xff]
    %v4051 = vld [vmem:[%s3964 + $0x2b0] sm:$0xff]
    %v4052 = vld [vmem:[%s3964 + $0x2b8] sm:$0xff]
    %v4053 = vld [vmem:[%s3964 + $0x2c0] sm:$0xff]
    %v4054 = vld [vmem:[%s3964 + $0x2c8] sm:$0xff]
    %v4055 = vld [vmem:[%s3964 + $0x2d0] sm:$0xff]
    %v4056 = vld [vmem:[%s3964 + $0x2d8] sm:$0xff]
    %v4057 = vld [vmem:[%s3964 + $0x2e0] sm:$0xff]
    %v4058 = vld [vmem:[%s3964 + $0x2e8] sm:$0xff]
    %v4059 = vld [vmem:[%s3964 + $0x2f0] sm:$0xff]
    %v4060 = vld [vmem:[%s3964 + $0x2f8] sm:$0xff]
    %v4157 = vunpack.c.l.b16 %v3965
    %v4158 = vunpack.c.h.b16 %v3965
    %v4159 = vunpack.c.l.b16 %v3966
    %v4160 = vunpack.c.h.b16 %v3966
    %v4161 = vunpack.c.l.b16 %v3967
    %v4162 = vunpack.c.h.b16 %v3967
    %v4163 = vunpack.c.l.b16 %v3968
    %v4164 = vunpack.c.h.b16 %v3968
    %v4165 = vunpack.c.l.b16 %v3969
    %v4166 = vunpack.c.h.b16 %v3969
    %v4167 = vunpack.c.l.b16 %v3970
    %v4168 = vunpack.c.h.b16 %v3970
    %v4169 = vunpack.c.l.b16 %v3971
    %v4170 = vunpack.c.h.b16 %v3971
    %v4171 = vunpack.c.l.b16 %v3972
    %v4172 = vunpack.c.h.b16 %v3972
    %v4173 = vunpack.c.l.b16 %v3973
    %v4174 = vunpack.c.h.b16 %v3973
    %v4175 = vunpack.c.l.b16 %v3974
    %v4176 = vunpack.c.h.b16 %v3974
    %v4177 = vunpack.c.l.b16 %v3975
    %v4178 = vunpack.c.h.b16 %v3975
    %v4179 = vunpack.c.l.b16 %v3976
    %v4180 = vunpack.c.h.b16 %v3976
    %v4181 = vunpack.c.l.b16 %v3977
    %v4182 = vunpack.c.h.b16 %v3977
    %v4183 = vunpack.c.l.b16 %v3978
    %v4184 = vunpack.c.h.b16 %v3978
    %v4185 = vunpack.c.l.b16 %v3979
    %v4186 = vunpack.c.h.b16 %v3979
    %v4187 = vunpack.c.l.b16 %v3980
    %v4188 = vunpack.c.h.b16 %v3980
    %v4189 = vunpack.c.l.b16 %v3981
    %v4190 = vunpack.c.h.b16 %v3981
    %v4191 = vunpack.c.l.b16 %v3982
    %v4192 = vunpack.c.h.b16 %v3982
    %v4193 = vunpack.c.l.b16 %v3983
    %v4194 = vunpack.c.h.b16 %v3983
    %v4195 = vunpack.c.l.b16 %v3984
    %v4196 = vunpack.c.h.b16 %v3984
    %v4197 = vunpack.c.l.b16 %v3985
    %v4198 = vunpack.c.h.b16 %v3985
    %v4199 = vunpack.c.l.b16 %v3986
    %v4200 = vunpack.c.h.b16 %v3986
    %v4201 = vunpack.c.l.b16 %v3987
    %v4202 = vunpack.c.h.b16 %v3987
    %v4203 = vunpack.c.l.b16 %v3988
    %v4204 = vunpack.c.h.b16 %v3988
    %v4205 = vunpack.c.l.b16 %v3989
    %v4206 = vunpack.c.h.b16 %v3989
    %v4207 = vunpack.c.l.b16 %v3990
    %v4208 = vunpack.c.h.b16 %v3990
    %v4209 = vunpack.c.l.b16 %v3991
    %v4210 = vunpack.c.h.b16 %v3991
    %v4211 = vunpack.c.l.b16 %v3992
    %v4212 = vunpack.c.h.b16 %v3992
    %v4213 = vunpack.c.l.b16 %v3993
    %v4214 = vunpack.c.h.b16 %v3993
    %v4215 = vunpack.c.l.b16 %v3994
    %v4216 = vunpack.c.h.b16 %v3994
    %v4217 = vunpack.c.l.b16 %v3995
    %v4218 = vunpack.c.h.b16 %v3995
    %v4219 = vunpack.c.l.b16 %v3996
    %v4220 = vunpack.c.h.b16 %v3996
    %v4221 = vunpack.c.l.b16 %v3997
    %v4222 = vunpack.c.h.b16 %v3997
    %v4223 = vunpack.c.l.b16 %v3998
    %v4224 = vunpack.c.h.b16 %v3998
    %v4225 = vunpack.c.l.b16 %v3999
    %v4226 = vunpack.c.h.b16 %v3999
    %v4227 = vunpack.c.l.b16 %v4000
    %v4228 = vunpack.c.h.b16 %v4000
    %v4229 = vunpack.c.l.b16 %v4001
    %v4230 = vunpack.c.h.b16 %v4001
    %v4231 = vunpack.c.l.b16 %v4002
    %v4232 = vunpack.c.h.b16 %v4002
    %v4233 = vunpack.c.l.b16 %v4003
    %v4234 = vunpack.c.h.b16 %v4003
    %v4235 = vunpack.c.l.b16 %v4004
    %v4236 = vunpack.c.h.b16 %v4004
    %v4237 = vunpack.c.l.b16 %v4005
    %v4238 = vunpack.c.h.b16 %v4005
    %v4239 = vunpack.c.l.b16 %v4006
    %v4240 = vunpack.c.h.b16 %v4006
    %v4241 = vunpack.c.l.b16 %v4007
    %v4242 = vunpack.c.h.b16 %v4007
    %v4243 = vunpack.c.l.b16 %v4008
    %v4244 = vunpack.c.h.b16 %v4008
    %v4245 = vunpack.c.l.b16 %v4009
    %v4246 = vunpack.c.h.b16 %v4009
    %v4247 = vunpack.c.l.b16 %v4010
    %v4248 = vunpack.c.h.b16 %v4010
    %v4249 = vunpack.c.l.b16 %v4011
    %v4250 = vunpack.c.h.b16 %v4011
    %v4251 = vunpack.c.l.b16 %v4012
    %v4252 = vunpack.c.h.b16 %v4012
    %v4253 = vunpack.c.l.b16 %v4013
    %v4254 = vunpack.c.h.b16 %v4013
    %v4255 = vunpack.c.l.b16 %v4014
    %v4256 = vunpack.c.h.b16 %v4014
    %v4257 = vunpack.c.l.b16 %v4015
    %v4258 = vunpack.c.h.b16 %v4015
    %v4259 = vunpack.c.l.b16 %v4016
    %v4260 = vunpack.c.h.b16 %v4016
    %v4261 = vunpack.c.l.b16 %v4017
    %v4262 = vunpack.c.h.b16 %v4017
    %v4263 = vunpack.c.l.b16 %v4018
    %v4264 = vunpack.c.h.b16 %v4018
    %v4265 = vunpack.c.l.b16 %v4019
    %v4266 = vunpack.c.h.b16 %v4019
    %v4267 = vunpack.c.l.b16 %v4020
    %v4268 = vunpack.c.h.b16 %v4020
    %v4269 = vunpack.c.l.b16 %v4021
    %v4270 = vunpack.c.h.b16 %v4021
    %v4271 = vunpack.c.l.b16 %v4022
    %v4272 = vunpack.c.h.b16 %v4022
    %v4273 = vunpack.c.l.b16 %v4023
    %v4274 = vunpack.c.h.b16 %v4023
    %v4275 = vunpack.c.l.b16 %v4024
    %v4276 = vunpack.c.h.b16 %v4024
    %v4277 = vunpack.c.l.b16 %v4025
    %v4278 = vunpack.c.h.b16 %v4025
    %v4279 = vunpack.c.l.b16 %v4026
    %v4280 = vunpack.c.h.b16 %v4026
    %v4281 = vunpack.c.l.b16 %v4027
    %v4282 = vunpack.c.h.b16 %v4027
    %v4283 = vunpack.c.l.b16 %v4028
    %v4284 = vunpack.c.h.b16 %v4028
    %v4285 = vunpack.c.l.b16 %v4029
    %v4286 = vunpack.c.h.b16 %v4029
    %v4287 = vunpack.c.l.b16 %v4030
    %v4288 = vunpack.c.h.b16 %v4030
    %v4289 = vunpack.c.l.b16 %v4031
    %v4290 = vunpack.c.h.b16 %v4031
    %v4291 = vunpack.c.l.b16 %v4032
    %v4292 = vunpack.c.h.b16 %v4032
    %v4293 = vunpack.c.l.b16 %v4033
    %v4294 = vunpack.c.h.b16 %v4033
    %v4295 = vunpack.c.l.b16 %v4034
    %v4296 = vunpack.c.h.b16 %v4034
    %v4297 = vunpack.c.l.b16 %v4035
    %v4298 = vunpack.c.h.b16 %v4035
    %v4299 = vunpack.c.l.b16 %v4036
    %v4300 = vunpack.c.h.b16 %v4036
    %v4301 = vunpack.c.l.b16 %v4037
    %v4302 = vunpack.c.h.b16 %v4037
    %v4303 = vunpack.c.l.b16 %v4038
    %v4304 = vunpack.c.h.b16 %v4038
    %v4305 = vunpack.c.l.b16 %v4039
    %v4306 = vunpack.c.h.b16 %v4039
    %v4307 = vunpack.c.l.b16 %v4040
    %v4308 = vunpack.c.h.b16 %v4040
    %v4309 = vunpack.c.l.b16 %v4041
    %v4310 = vunpack.c.h.b16 %v4041
    %v4311 = vunpack.c.l.b16 %v4042
    %v4312 = vunpack.c.h.b16 %v4042
    %v4313 = vunpack.c.l.b16 %v4043
    %v4314 = vunpack.c.h.b16 %v4043
    %v4315 = vunpack.c.l.b16 %v4044
    %v4316 = vunpack.c.h.b16 %v4044
    %v4317 = vunpack.c.l.b16 %v4045
    %v4318 = vunpack.c.h.b16 %v4045
    %v4319 = vunpack.c.l.b16 %v4046
    %v4320 = vunpack.c.h.b16 %v4046
    %v4321 = vunpack.c.l.b16 %v4047
    %v4322 = vunpack.c.h.b16 %v4047
    %v4323 = vunpack.c.l.b16 %v4048
    %v4324 = vunpack.c.h.b16 %v4048
    %v4325 = vunpack.c.l.b16 %v4049
    %v4326 = vunpack.c.h.b16 %v4049
    %v4327 = vunpack.c.l.b16 %v4050
    %v4328 = vunpack.c.h.b16 %v4050
    %v4329 = vunpack.c.l.b16 %v4051
    %v4330 = vunpack.c.h.b16 %v4051
    %v4331 = vunpack.c.l.b16 %v4052
    %v4332 = vunpack.c.h.b16 %v4052
    %v4333 = vunpack.c.l.b16 %v4053
    %v4334 = vunpack.c.h.b16 %v4053
    %v4335 = vunpack.c.l.b16 %v4054
    %v4336 = vunpack.c.h.b16 %v4054
    %v4337 = vunpack.c.l.b16 %v4055
    %v4338 = vunpack.c.h.b16 %v4055
    %v4339 = vunpack.c.l.b16 %v4056
    %v4340 = vunpack.c.h.b16 %v4056
    %v4341 = vunpack.c.l.b16 %v4057
    %v4342 = vunpack.c.h.b16 %v4057
    %v4343 = vunpack.c.l.b16 %v4058
    %v4344 = vunpack.c.h.b16 %v4058
    %v4345 = vunpack.c.l.b16 %v4059
    %v4346 = vunpack.c.h.b16 %v4059
    %v4347 = vunpack.c.l.b16 %v4060
    %v4348 = vunpack.c.h.b16 %v4060
    %v4349 = vpack.c.b16 %v4161, %v4157
    %v4350 = vpack.c.b16 %v4162, %v4158
    %v4351 = vpack.c.b16 %v4163, %v4159
    %v4352 = vpack.c.b16 %v4164, %v4160
    %v4353 = vpack.c.b16 %v4169, %v4165
    %v4354 = vpack.c.b16 %v4170, %v4166
    %v4355 = vpack.c.b16 %v4171, %v4167
    %v4356 = vpack.c.b16 %v4172, %v4168
    %v4357 = vpack.c.b16 %v4177, %v4173
    %v4358 = vpack.c.b16 %v4178, %v4174
    %v4359 = vpack.c.b16 %v4179, %v4175
    %v4360 = vpack.c.b16 %v4180, %v4176
    %v4361 = vpack.c.b16 %v4185, %v4181
    %v4362 = vpack.c.b16 %v4186, %v4182
    %v4363 = vpack.c.b16 %v4187, %v4183
    %v4364 = vpack.c.b16 %v4188, %v4184
    %v4365 = vpack.c.b16 %v4193, %v4189
    %v4366 = vpack.c.b16 %v4194, %v4190
    %v4367 = vpack.c.b16 %v4195, %v4191
    %v4368 = vpack.c.b16 %v4196, %v4192
    %v4369 = vpack.c.b16 %v4201, %v4197
    %v4370 = vpack.c.b16 %v4202, %v4198
    %v4371 = vpack.c.b16 %v4203, %v4199
    %v4372 = vpack.c.b16 %v4204, %v4200
    %v4373 = vpack.c.b16 %v4209, %v4205
    %v4374 = vpack.c.b16 %v4210, %v4206
    %v4375 = vpack.c.b16 %v4211, %v4207
    %v4376 = vpack.c.b16 %v4212, %v4208
    %v4377 = vpack.c.b16 %v4217, %v4213
    %v4378 = vpack.c.b16 %v4218, %v4214
    %v4379 = vpack.c.b16 %v4219, %v4215
    %v4380 = vpack.c.b16 %v4220, %v4216
    %v4381 = vpack.c.b16 %v4225, %v4221
    %v4382 = vpack.c.b16 %v4226, %v4222
    %v4383 = vpack.c.b16 %v4227, %v4223
    %v4384 = vpack.c.b16 %v4228, %v4224
    %v4385 = vpack.c.b16 %v4233, %v4229
    %v4386 = vpack.c.b16 %v4234, %v4230
    %v4387 = vpack.c.b16 %v4235, %v4231
    %v4388 = vpack.c.b16 %v4236, %v4232
    %v4389 = vpack.c.b16 %v4241, %v4237
    %v4390 = vpack.c.b16 %v4242, %v4238
    %v4391 = vpack.c.b16 %v4243, %v4239
    %v4392 = vpack.c.b16 %v4244, %v4240
    %v4393 = vpack.c.b16 %v4249, %v4245
    %v4394 = vpack.c.b16 %v4250, %v4246
    %v4395 = vpack.c.b16 %v4251, %v4247
    %v4396 = vpack.c.b16 %v4252, %v4248
    %v4397 = vpack.c.b16 %v4257, %v4253
    %v4398 = vpack.c.b16 %v4258, %v4254
    %v4399 = vpack.c.b16 %v4259, %v4255
    %v4400 = vpack.c.b16 %v4260, %v4256
    %v4401 = vpack.c.b16 %v4265, %v4261
    %v4402 = vpack.c.b16 %v4266, %v4262
    %v4403 = vpack.c.b16 %v4267, %v4263
    %v4404 = vpack.c.b16 %v4268, %v4264
    %v4405 = vpack.c.b16 %v4273, %v4269
    %v4406 = vpack.c.b16 %v4274, %v4270
    %v4407 = vpack.c.b16 %v4275, %v4271
    %v4408 = vpack.c.b16 %v4276, %v4272
    %v4409 = vpack.c.b16 %v4281, %v4277
    %v4410 = vpack.c.b16 %v4282, %v4278
    %v4411 = vpack.c.b16 %v4283, %v4279
    %v4412 = vpack.c.b16 %v4284, %v4280
    %v4413 = vpack.c.b16 %v4289, %v4285
    %v4414 = vpack.c.b16 %v4290, %v4286
    %v4415 = vpack.c.b16 %v4291, %v4287
    %v4416 = vpack.c.b16 %v4292, %v4288
    %v4417 = vpack.c.b16 %v4297, %v4293
    %v4418 = vpack.c.b16 %v4298, %v4294
    %v4419 = vpack.c.b16 %v4299, %v4295
    %v4420 = vpack.c.b16 %v4300, %v4296
    %v4421 = vpack.c.b16 %v4305, %v4301
    %v4422 = vpack.c.b16 %v4306, %v4302
    %v4423 = vpack.c.b16 %v4307, %v4303
    %v4424 = vpack.c.b16 %v4308, %v4304
    %v4425 = vpack.c.b16 %v4313, %v4309
    %v4426 = vpack.c.b16 %v4314, %v4310
    %v4427 = vpack.c.b16 %v4315, %v4311
    %v4428 = vpack.c.b16 %v4316, %v4312
    %v4429 = vpack.c.b16 %v4321, %v4317
    %v4430 = vpack.c.b16 %v4322, %v4318
    %v4431 = vpack.c.b16 %v4323, %v4319
    %v4432 = vpack.c.b16 %v4324, %v4320
    %v4433 = vpack.c.b16 %v4329, %v4325
    %v4434 = vpack.c.b16 %v4330, %v4326
    %v4435 = vpack.c.b16 %v4331, %v4327
    %v4436 = vpack.c.b16 %v4332, %v4328
    %v4437 = vpack.c.b16 %v4337, %v4333
    %v4438 = vpack.c.b16 %v4338, %v4334
    %v4439 = vpack.c.b16 %v4339, %v4335
    %v4440 = vpack.c.b16 %v4340, %v4336
    %v4441 = vpack.c.b16 %v4345, %v4341
    %v4442 = vpack.c.b16 %v4346, %v4342
    %v4443 = vpack.c.b16 %v4347, %v4343
    %v4444 = vpack.c.b16 %v4348, %v4344
    %4541 = vmatprep.subr.bf16.mxu0 %v4350
    %4542 = vmatpush1.bf16.msra.mxu0 %v4349
    %4543 = vmatprep.subr.bf16.mxu0 %v4354
    %4544 = vmatpush1.bf16.msra.mxu0 %v4353
    %4545 = vmatprep.subr.bf16.mxu0 %v4358
    %4546 = vmatpush1.bf16.msra.mxu0 %v4357
    %4547 = vmatprep.subr.bf16.mxu0 %v4362
    %4548 = vmatpush1.bf16.msra.mxu0 %v4361
    %4549 = vmatprep.subr.bf16.mxu0 %v4366
    %4550 = vmatpush1.bf16.msra.mxu0 %v4365
    %4551 = vmatprep.subr.bf16.mxu0 %v4370
    %4552 = vmatpush1.bf16.msra.mxu0 %v4369
    %4553 = vmatprep.subr.bf16.mxu0 %v4374
    %4554 = vmatpush1.bf16.msra.mxu0 %v4373
    %4555 = vmatprep.subr.bf16.mxu0 %v4378
    %4556 = vmatpush1.bf16.msra.mxu0 %v4377
    %4557 = vmatprep.subr.bf16.mxu0 %v4382
    %4558 = vmatpush1.bf16.msra.mxu0 %v4381
    %4559 = vmatprep.subr.bf16.mxu0 %v4386
    %4560 = vmatpush1.bf16.msra.mxu0 %v4385
    %4561 = vmatprep.subr.bf16.mxu0 %v4390
    %4562 = vmatpush1.bf16.msra.mxu0 %v4389
    %4563 = vmatprep.subr.bf16.mxu0 %v4394
    %4564 = vmatpush1.bf16.msra.mxu0 %v4393
    %4565 = vmatprep.subr.bf16.mxu0 %v4398
    %4566 = vmatpush1.bf16.msra.mxu0 %v4397
    %4567 = vmatprep.subr.bf16.mxu0 %v4402
    %4568 = vmatpush1.bf16.msra.mxu0 %v4401
    %4569 = vmatprep.subr.bf16.mxu0 %v4406
    %4570 = vmatpush1.bf16.msra.mxu0 %v4405
    %4571 = vmatprep.subr.bf16.mxu0 %v4410
    %4572 = vmatpush1.bf16.msra.mxu0 %v4409
    %4573 = vmatprep.mubr.bf16.mxu0 %v1408
    %4574 = vmatmul.mubr.bf16.gmra.mrb[0].mxu0 %v1407
    %v4575 = vpop.f32.mrb[0].mxu0
    %v4576 = vadd.f32 0.0, %v4575
    %v4577 = vpop.f32.mrb[0].mxu0
    %v4578 = vadd.f32 0.0, %v4577
    %v4579 = vpop.f32.mrb[0].mxu0
    %v4580 = vadd.f32 0.0, %v4579
    %v4581 = vpop.f32.mrb[0].mxu0
    %v4582 = vadd.f32 0.0, %v4581
    %4583 = vmatprep.mubr.bf16.mxu0 %v1411
    %4584 = vmatmul.mubr.bf16.gmra.mrb[0].mxu0 %v1410
    %v4585 = vpop.f32.mrb[0].mxu0
    %v4586 = vadd.f32 0.0, %v4585
    %v4587 = vpop.f32.mrb[0].mxu0
    %v4588 = vadd.f32 0.0, %v4587
    %v4589 = vpop.f32.mrb[0].mxu0
    %v4590 = vadd.f32 0.0, %v4589
    %v4591 = vpop.f32.mrb[0].mxu0
    %v4592 = vadd.f32 0.0, %v4591
    %4593 = vmatprep.mubr.bf16.mxu0 %v1414
    %4594 = vmatmul.mubr.bf16.gmra.mrb[0].mxu0 %v1413
    %v4595 = vpop.f32.mrb[0].mxu0
    %v4596 = vadd.f32 0.0, %v4595
    %v4597 = vpop.f32.mrb[0].mxu0
    %v4598 = vadd.f32 0.0, %v4597
    %v4599 = vpop.f32.mrb[0].mxu0
    %v4600 = vadd.f32 0.0, %v4599
    %v4601 = vpop.f32.mrb[0].mxu0
    %v4602 = vadd.f32 0.0, %v4601
    %4603 = vmatprep.mubr.bf16.mxu0 %v3962
    %4604 = vmatmul.mubr.bf16.gmra.mrb[0].mxu0 %v3961
    %v4605 = vpop.f32.mrb[0].mxu0
    %v4606 = vadd.f32 0.0, %v4605
    %v4607 = vpop.f32.mrb[0].mxu0
    %v4608 = vadd.f32 0.0, %v4607
    %v4609 = vpop.f32.mrb[0].mxu0
    %v4610 = vadd.f32 0.0, %v4609
    %v4611 = vpop.f32.mrb[0].mxu0
    %v4612 = vadd.f32 0.0, %v4611
    %4613 = vdwg.mxu0
    %4614 = vmatprep.subr.bf16.mxu0 %v4414
    %4615 = vmatpush1.bf16.msra.mxu0 %v4413
    %4616 = vmatprep.subr.bf16.mxu0 %v4418
    %4617 = vmatpush1.bf16.msra.mxu0 %v4417
    %4618 = vmatprep.subr.bf16.mxu0 %v4422
    %4619 = vmatpush1.bf16.msra.mxu0 %v4421
    %4620 = vmatprep.subr.bf16.mxu0 %v4426
    %4621 = vmatpush1.bf16.msra.mxu0 %v4425
    %4622 = vmatprep.subr.bf16.mxu0 %v4430
    %4623 = vmatpush1.bf16.msra.mxu0 %v4429
    %4624 = vmatprep.subr.bf16.mxu0 %v4434
    %4625 = vmatpush1.bf16.msra.mxu0 %v4433
    %4626 = vmatprep.subr.bf16.mxu0 %v4438
    %4627 = vmatpush1.bf16.msra.mxu0 %v4437
    %4628 = vmatprep.subr.bf16.mxu0 %v4442
    %4629 = vmatpush1.bf16.msra.mxu0 %v4441
    %4630 = vmatprep.subr.bf16.mxu0 0
    %4631 = vmatpush1.bf16.msra.mxu0 0
    %4632 = vmatprep.subr.bf16.mxu0 0
    %4633 = vmatpush1.bf16.msra.mxu0 0
    %4634 = vmatprep.subr.bf16.mxu0 0
    %4635 = vmatpush1.bf16.msra.mxu0 0
    %4636 = vmatprep.subr.bf16.mxu0 0
    %4637 = vmatpush1.bf16.msra.mxu0 0
    %4638 = vmatprep.subr.bf16.mxu0 0
    %4639 = vmatpush1.bf16.msra.mxu0 0
    %4640 = vmatprep.subr.bf16.mxu0 0
    %4641 = vmatpush1.bf16.msra.mxu0 0
    %4642 = vmatprep.subr.bf16.mxu0 0
    %4643 = vmatpush1.bf16.msra.mxu0 0
    %4644 = vmatprep.subr.bf16.mxu0 0
    %4645 = vmatpush1.bf16.msra.mxu0 0
    %4646 = vmatprep.mubr.bf16.mxu0 0
    %4647 = vmatmul.mubr.bf16.gmra.mrb[0].mxu0 %v1409
    %v4648 = vpop.f32.mrb[0].mxu0
    %v4649 = vadd.f32 %v4576, %v4648
    %v4650 = vpop.f32.mrb[0].mxu0
    %v4651 = vadd.f32 %v4578, %v4650
    %v4652 = vpop.f32.mrb[0].mxu0
    %v4653 = vadd.f32 %v4580, %v4652
    %v4654 = vpop.f32.mrb[0].mxu0
    %v4655 = vadd.f32 %v4582, %v4654
    %4656 = vmatprep.mubr.bf16.mxu0 0
    %4657 = vmatmul.mubr.bf16.gmra.mrb[0].mxu0 %v1412
    %v4658 = vpop.f32.mrb[0].mxu0
    %v4659 = vadd.f32 %v4586, %v4658
    %v4660 = vpop.f32.mrb[0].mxu0
    %v4661 = vadd.f32 %v4588, %v4660
    %v4662 = vpop.f32.mrb[0].mxu0
    %v4663 = vadd.f32 %v4590, %v4662
    %v4664 = vpop.f32.mrb[0].mxu0
    %v4665 = vadd.f32 %v4592, %v4664
    %4666 = vmatprep.mubr.bf16.mxu0 0
    %4667 = vmatmul.mubr.bf16.gmra.mrb[0].mxu0 %v1415
    %v4668 = vpop.f32.mrb[0].mxu0
    %v4669 = vadd.f32 %v4596, %v4668
    %v4670 = vpop.f32.mrb[0].mxu0
    %v4671 = vadd.f32 %v4598, %v4670
    %v4672 = vpop.f32.mrb[0].mxu0
    %v4673 = vadd.f32 %v4600, %v4672
    %v4674 = vpop.f32.mrb[0].mxu0
    %v4675 = vadd.f32 %v4602, %v4674
    %4676 = vmatprep.mubr.bf16.mxu0 0
    %4677 = vmatmul.mubr.bf16.gmra.mrb[0].mxu0 %v3963
    %v4678 = vpop.f32.mrb[0].mxu0
    %v4679 = vadd.f32 %v4606, %v4678
    %v4680 = vpop.f32.mrb[0].mxu0
    %v4681 = vadd.f32 %v4608, %v4680
    %v4682 = vpop.f32.mrb[0].mxu0
    %v4683 = vadd.f32 %v4610, %v4682
    %v4684 = vpop.f32.mrb[0].mxu0
    %v4685 = vadd.f32 %v4612, %v4684
    %4686 = vdwg.mxu0
    %4687 = vmatprep.subr.bf16.mxu0 %v4352
    %4688 = vmatpush1.bf16.msra.mxu0 %v4351
    %4689 = vmatprep.subr.bf16.mxu0 %v4356
    %4690 = vmatpush1.bf16.msra.mxu0 %v4355
    %4691 = vmatprep.subr.bf16.mxu0 %v4360
    %4692 = vmatpush1.bf16.msra.mxu0 %v4359
    %4693 = vmatprep.subr.bf16.mxu0 %v4364
    %4694 = vmatpush1.bf16.msra.mxu0 %v4363
    %4695 = vmatprep.subr.bf16.mxu0 %v4368
    %4696 = vmatpush1.bf16.msra.mxu0 %v4367
    %4697 = vmatprep.subr.bf16.mxu0 %v4372
    %4698 = vmatpush1.bf16.msra.mxu0 %v4371
    %4699 = vmatprep.subr.bf16.mxu0 %v4376
    %4700 = vmatpush1.bf16.msra.mxu0 %v4375
    %4701 = vmatprep.subr.bf16.mxu0 %v4380
    %4702 = vmatpush1.bf16.msra.mxu0 %v4379
    %4703 = vmatprep.subr.bf16.mxu0 %v4384
    %4704 = vmatpush1.bf16.msra.mxu0 %v4383
    %4705 = vmatprep.subr.bf16.mxu0 %v4388
    %4706 = vmatpush1.bf16.msra.mxu0 %v4387
    %4707 = vmatprep.subr.bf16.mxu0 %v4392
    %4708 = vmatpush1.bf16.msra.mxu0 %v4391
    %4709 = vmatprep.subr.bf16.mxu0 %v4396
    %4710 = vmatpush1.bf16.msra.mxu0 %v4395
    %4711 = vmatprep.subr.bf16.mxu0 %v4400
    %4712 = vmatpush1.bf16.msra.mxu0 %v4399
    %4713 = vmatprep.subr.bf16.mxu0 %v4404
    %4714 = vmatpush1.bf16.msra.mxu0 %v4403
    %4715 = vmatprep.subr.bf16.mxu0 %v4408
    %4716 = vmatpush1.bf16.msra.mxu0 %v4407
    %4717 = vmatprep.subr.bf16.mxu0 %v4412
    %4718 = vmatpush1.bf16.msra.mxu0 %v4411
    %4719 = vmatprep.mubr.bf16.mxu0 %v1408
    %4720 = vmatmul.mubr.bf16.gmra.mrb[0].mxu0 %v1407
    %v4721 = vpop.f32.mrb[0].mxu0
    %v4722 = vadd.f32 0.0, %v4721
    %v4723 = vpop.f32.mrb[0].mxu0
    %v4724 = vadd.f32 0.0, %v4723
    %v4725 = vpop.f32.mrb[0].mxu0
    %v4726 = vadd.f32 0.0, %v4725
    %v4727 = vpop.f32.mrb[0].mxu0
    %v4728 = vadd.f32 0.0, %v4727
    %4729 = vmatprep.mubr.bf16.mxu0 %v1411
    %4730 = vmatmul.mubr.bf16.gmra.mrb[0].mxu0 %v1410
    %v4731 = vpop.f32.mrb[0].mxu0
    %v4732 = vadd.f32 0.0, %v4731
    %v4733 = vpop.f32.mrb[0].mxu0
    %v4734 = vadd.f32 0.0, %v4733
    %v4735 = vpop.f32.mrb[0].mxu0
    %v4736 = vadd.f32 0.0, %v4735
    %v4737 = vpop.f32.mrb[0].mxu0
    %v4738 = vadd.f32 0.0, %v4737
    %4739 = vmatprep.mubr.bf16.mxu0 %v1414
    %4740 = vmatmul.mubr.bf16.gmra.mrb[0].mxu0 %v1413
    %v4741 = vpop.f32.mrb[0].mxu0
    %v4742 = vadd.f32 0.0, %v4741
    %v4743 = vpop.f32.mrb[0].mxu0
    %v4744 = vadd.f32 0.0, %v4743
    %v4745 = vpop.f32.mrb[0].mxu0
    %v4746 = vadd.f32 0.0, %v4745
    %v4747 = vpop.f32.mrb[0].mxu0
    %v4748 = vadd.f32 0.0, %v4747
    %4749 = vmatprep.mubr.bf16.mxu0 %v3962
    %4750 = vmatmul.mubr.bf16.gmra.mrb[0].mxu0 %v3961
    %v4751 = vpop.f32.mrb[0].mxu0
    %v4752 = vadd.f32 0.0, %v4751
    %v4753 = vpop.f32.mrb[0].mxu0
    %v4754 = vadd.f32 0.0, %v4753
    %v4755 = vpop.f32.mrb[0].mxu0
    %v4756 = vadd.f32 0.0, %v4755
    %v4757 = vpop.f32.mrb[0].mxu0
    %v4758 = vadd.f32 0.0, %v4757
    %4759 = vdwg.mxu0
    %4760 = vmatprep.subr.bf16.mxu0 %v4416
    %4761 = vmatpush1.bf16.msra.mxu0 %v4415
    %4762 = vmatprep.subr.bf16.mxu0 %v4420
    %4763 = vmatpush1.bf16.msra.mxu0 %v4419
    %4764 = vmatprep.subr.bf16.mxu0 %v4424
    %4765 = vmatpush1.bf16.msra.mxu0 %v4423
    %4766 = vmatprep.subr.bf16.mxu0 %v4428
    %4767 = vmatpush1.bf16.msra.mxu0 %v4427
    %4768 = vmatprep.subr.bf16.mxu0 %v4432
    %4769 = vmatpush1.bf16.msra.mxu0 %v4431
    %4770 = vmatprep.subr.bf16.mxu0 %v4436
    %4771 = vmatpush1.bf16.msra.mxu0 %v4435
    %4772 = vmatprep.subr.bf16.mxu0 %v4440
    %4773 = vmatpush1.bf16.msra.mxu0 %v4439
    %4774 = vmatprep.subr.bf16.mxu0 %v4444
    %4775 = vmatpush1.bf16.msra.mxu0 %v4443
    %4776 = vmatprep.subr.bf16.mxu0 0
    %4777 = vmatpush1.bf16.msra.mxu0 0
    %4778 = vmatprep.subr.bf16.mxu0 0
    %4779 = vmatpush1.bf16.msra.mxu0 0
    %4780 = vmatprep.subr.bf16.mxu0 0
    %4781 = vmatpush1.bf16.msra.mxu0 0
    %4782 = vmatprep.subr.bf16.mxu0 0
    %4783 = vmatpush1.bf16.msra.mxu0 0
    %4784 = vmatprep.subr.bf16.mxu0 0
    %4785 = vmatpush1.bf16.msra.mxu0 0
    %4786 = vmatprep.subr.bf16.mxu0 0
    %4787 = vmatpush1.bf16.msra.mxu0 0
    %4788 = vmatprep.subr.bf16.mxu0 0
    %4789 = vmatpush1.bf16.msra.mxu0 0
    %4790 = vmatprep.subr.bf16.mxu0 0
    %4791 = vmatpush1.bf16.msra.mxu0 0
    %4792 = vmatprep.mubr.bf16.mxu0 0
    %4793 = vmatmul.mubr.bf16.gmra.mrb[0].mxu0 %v1409
    %v4794 = vpop.f32.mrb[0].mxu0
    %v4795 = vadd.f32 %v4722, %v4794
    %v4796 = vpop.f32.mrb[0].mxu0
    %v4797 = vadd.f32 %v4724, %v4796
    %v4798 = vpop.f32.mrb[0].mxu0
    %v4799 = vadd.f32 %v4726, %v4798
    %v4800 = vpop.f32.mrb[0].mxu0
    %v4801 = vadd.f32 %v4728, %v4800
    %4802 = vmatprep.mubr.bf16.mxu0 0
    %4803 = vmatmul.mubr.bf16.gmra.mrb[0].mxu0 %v1412
    %v4804 = vpop.f32.mrb[0].mxu0
    %v4805 = vadd.f32 %v4732, %v4804
    %v4806 = vpop.f32.mrb[0].mxu0
    %v4807 = vadd.f32 %v4734, %v4806
    %v4808 = vpop.f32.mrb[0].mxu0
    %v4809 = vadd.f32 %v4736, %v4808
    %v4810 = vpop.f32.mrb[0].mxu0
    %v4811 = vadd.f32 %v4738, %v4810
    %4812 = vmatprep.mubr.bf16.mxu0 0
    %4813 = vmatmul.mubr.bf16.gmra.mrb[0].mxu0 %v1415
    %v4814 = vpop.f32.mrb[0].mxu0
    %v4815 = vadd.f32 %v4742, %v4814
    %v4816 = vpop.f32.mrb[0].mxu0
    %v4817 = vadd.f32 %v4744, %v4816
    %v4818 = vpop.f32.mrb[0].mxu0
    %v4819 = vadd.f32 %v4746, %v4818
    %v4820 = vpop.f32.mrb[0].mxu0
    %v4821 = vadd.f32 %v4748, %v4820
    %4822 = vmatprep.mubr.bf16.mxu0 0
    %4823 = vmatmul.mubr.bf16.gmra.mrb[0].mxu0 %v3963
    %v4824 = vpop.f32.mrb[0].mxu0
    %v4825 = vadd.f32 %v4752, %v4824
    %v4826 = vpop.f32.mrb[0].mxu0
    %v4827 = vadd.f32 %v4754, %v4826
    %v4828 = vpop.f32.mrb[0].mxu0
    %v4829 = vadd.f32 %v4756, %v4828
    %v4830 = vpop.f32.mrb[0].mxu0
    %v4831 = vadd.f32 %v4758, %v4830
    %4832 = vdwg.mxu0
    %v4833 = vadd.f32 %v3929, %v4649
    %v4834 = vadd.f32 %v3930, %v4651
    %v4835 = vadd.f32 %v3931, %v4795
    %v4836 = vadd.f32 %v3932, %v4797
    %v4837 = vadd.f32 %v3933, %v4653
    %v4838 = vadd.f32 %v3934, %v4655
    %v4839 = vadd.f32 %v3935, %v4799
    %v4840 = vadd.f32 %v3936, %v4801
    %v4841 = vadd.f32 %v3937, %v4659
    %v4842 = vadd.f32 %v3938, %v4661
    %v4843 = vadd.f32 %v3939, %v4805
    %v4844 = vadd.f32 %v3940, %v4807
    %v4845 = vadd.f32 %v3941, %v4663
    %v4846 = vadd.f32 %v3942, %v4665
    %v4847 = vadd.f32 %v3943, %v4809
    %v4848 = vadd.f32 %v3944, %v4811
    %v4849 = vadd.f32 %v3945, %v4669
    %v4850 = vadd.f32 %v3946, %v4671
    %v4851 = vadd.f32 %v3947, %v4815
    %v4852 = vadd.f32 %v3948, %v4817
    %v4853 = vadd.f32 %v3949, %v4673
    %v4854 = vadd.f32 %v3950, %v4675
    %v4855 = vadd.f32 %v3951, %v4819
    %v4856 = vadd.f32 %v3952, %v4821
    %v4857 = vadd.f32 %v3953, %v4679
    %v4858 = vadd.f32 %v3954, %v4681
    %v4859 = vadd.f32 %v3955, %v4825
    %v4860 = vadd.f32 %v3956, %v4827
    %v4861 = vadd.f32 %v3957, %v4683
    %v4862 = vadd.f32 %v3958, %v4685
    %v4863 = vadd.f32 %v3959, %v4829
    %v4864 = vadd.f32 %v3960, %v4831
    %v4865 = vpack.c.bf16 %v1293, %v1290
    %v4866 = vpack.c.bf16 %v1294, %v1291
    %v4867 = vpack.c.bf16 %v1295, %v1292
    %s4868 = scalar_lea.vmem [#allocation6], 3072
    %v4869 = vld [vmem:[%s4868] sm:$0xff]
    %v4870 = vld [vmem:[%s4868 + $0x8] sm:$0xff]
    %v4871 = vld [vmem:[%s4868 + $0x10] sm:$0xff]
    %v4872 = vld [vmem:[%s4868 + $0x18] sm:$0xff]
    %v4873 = vld [vmem:[%s4868 + $0x20] sm:$0xff]
    %v4874 = vld [vmem:[%s4868 + $0x28] sm:$0xff]
    %v4875 = vld [vmem:[%s4868 + $0x30] sm:$0xff]
    %v4876 = vld [vmem:[%s4868 + $0x38] sm:$0xff]
    %v4877 = vld [vmem:[%s4868 + $0x40] sm:$0xff]
    %v4878 = vld [vmem:[%s4868 + $0x48] sm:$0xff]
    %v4879 = vld [vmem:[%s4868 + $0x50] sm:$0xff]
    %v4880 = vld [vmem:[%s4868 + $0x58] sm:$0xff]
    %v4881 = vld [vmem:[%s4868 + $0x60] sm:$0xff]
    %v4882 = vld [vmem:[%s4868 + $0x68] sm:$0xff]
    %v4883 = vld [vmem:[%s4868 + $0x70] sm:$0xff]
    %v4884 = vld [vmem:[%s4868 + $0x78] sm:$0xff]
    %v4885 = vld [vmem:[%s4868 + $0x80] sm:$0xff]
    %v4886 = vld [vmem:[%s4868 + $0x88] sm:$0xff]
    %v4887 = vld [vmem:[%s4868 + $0x90] sm:$0xff]
    %v4888 = vld [vmem:[%s4868 + $0x98] sm:$0xff]
    %v4889 = vld [vmem:[%s4868 + $0xa0] sm:$0xff]
    %v4890 = vld [vmem:[%s4868 + $0xa8] sm:$0xff]
    %v4891 = vld [vmem:[%s4868 + $0xb0] sm:$0xff]
    %v4892 = vld [vmem:[%s4868 + $0xb8] sm:$0xff]
    %v4893 = vld [vmem:[%s4868 + $0xc0] sm:$0xff]
    %v4894 = vld [vmem:[%s4868 + $0xc8] sm:$0xff]
    %v4895 = vld [vmem:[%s4868 + $0xd0] sm:$0xff]
    %v4896 = vld [vmem:[%s4868 + $0xd8] sm:$0xff]
    %v4897 = vld [vmem:[%s4868 + $0xe0] sm:$0xff]
    %v4898 = vld [vmem:[%s4868 + $0xe8] sm:$0xff]
    %v4899 = vld [vmem:[%s4868 + $0xf0] sm:$0xff]
    %v4900 = vld [vmem:[%s4868 + $0xf8] sm:$0xff]
    %v4901 = vld [vmem:[%s4868 + $0x100] sm:$0xff]
    %v4902 = vld [vmem:[%s4868 + $0x108] sm:$0xff]
    %v4903 = vld [vmem:[%s4868 + $0x110] sm:$0xff]
    %v4904 = vld [vmem:[%s4868 + $0x118] sm:$0xff]
    %v4905 = vld [vmem:[%s4868 + $0x120] sm:$0xff]
    %v4906 = vld [vmem:[%s4868 + $0x128] sm:$0xff]
    %v4907 = vld [vmem:[%s4868 + $0x130] sm:$0xff]
    %v4908 = vld [vmem:[%s4868 + $0x138] sm:$0xff]
    %v4909 = vld [vmem:[%s4868 + $0x140] sm:$0xff]
    %v4910 = vld [vmem:[%s4868 + $0x148] sm:$0xff]
    %v4911 = vld [vmem:[%s4868 + $0x150] sm:$0xff]
    %v4912 = vld [vmem:[%s4868 + $0x158] sm:$0xff]
    %v4913 = vld [vmem:[%s4868 + $0x160] sm:$0xff]
    %v4914 = vld [vmem:[%s4868 + $0x168] sm:$0xff]
    %v4915 = vld [vmem:[%s4868 + $0x170] sm:$0xff]
    %v4916 = vld [vmem:[%s4868 + $0x178] sm:$0xff]
    %v4917 = vld [vmem:[%s4868 + $0x180] sm:$0xff]
    %v4918 = vld [vmem:[%s4868 + $0x188] sm:$0xff]
    %v4919 = vld [vmem:[%s4868 + $0x190] sm:$0xff]
    %v4920 = vld [vmem:[%s4868 + $0x198] sm:$0xff]
    %v4921 = vld [vmem:[%s4868 + $0x1a0] sm:$0xff]
    %v4922 = vld [vmem:[%s4868 + $0x1a8] sm:$0xff]
    %v4923 = vld [vmem:[%s4868 + $0x1b0] sm:$0xff]
    %v4924 = vld [vmem:[%s4868 + $0x1b8] sm:$0xff]
    %v4925 = vld [vmem:[%s4868 + $0x1c0] sm:$0xff]
    %v4926 = vld [vmem:[%s4868 + $0x1c8] sm:$0xff]
    %v4927 = vld [vmem:[%s4868 + $0x1d0] sm:$0xff]
    %v4928 = vld [vmem:[%s4868 + $0x1d8] sm:$0xff]
    %v4929 = vld [vmem:[%s4868 + $0x1e0] sm:$0xff]
    %v4930 = vld [vmem:[%s4868 + $0x1e8] sm:$0xff]
    %v4931 = vld [vmem:[%s4868 + $0x1f0] sm:$0xff]
    %v4932 = vld [vmem:[%s4868 + $0x1f8] sm:$0xff]
    %v4933 = vld [vmem:[%s4868 + $0x200] sm:$0xff]
    %v4934 = vld [vmem:[%s4868 + $0x208] sm:$0xff]
    %v4935 = vld [vmem:[%s4868 + $0x210] sm:$0xff]
    %v4936 = vld [vmem:[%s4868 + $0x218] sm:$0xff]
    %v4937 = vld [vmem:[%s4868 + $0x220] sm:$0xff]
    %v4938 = vld [vmem:[%s4868 + $0x228] sm:$0xff]
    %v4939 = vld [vmem:[%s4868 + $0x230] sm:$0xff]
    %v4940 = vld [vmem:[%s4868 + $0x238] sm:$0xff]
    %v4941 = vld [vmem:[%s4868 + $0x240] sm:$0xff]
    %v4942 = vld [vmem:[%s4868 + $0x248] sm:$0xff]
    %v4943 = vld [vmem:[%s4868 + $0x250] sm:$0xff]
    %v4944 = vld [vmem:[%s4868 + $0x258] sm:$0xff]
    %v4945 = vld [vmem:[%s4868 + $0x260] sm:$0xff]
    %v4946 = vld [vmem:[%s4868 + $0x268] sm:$0xff]
    %v4947 = vld [vmem:[%s4868 + $0x270] sm:$0xff]
    %v4948 = vld [vmem:[%s4868 + $0x278] sm:$0xff]
    %v4949 = vld [vmem:[%s4868 + $0x280] sm:$0xff]
    %v4950 = vld [vmem:[%s4868 + $0x288] sm:$0xff]
    %v4951 = vld [vmem:[%s4868 + $0x290] sm:$0xff]
    %v4952 = vld [vmem:[%s4868 + $0x298] sm:$0xff]
    %v4953 = vld [vmem:[%s4868 + $0x2a0] sm:$0xff]
    %v4954 = vld [vmem:[%s4868 + $0x2a8] sm:$0xff]
    %v4955 = vld [vmem:[%s4868 + $0x2b0] sm:$0xff]
    %v4956 = vld [vmem:[%s4868 + $0x2b8] sm:$0xff]
    %v4957 = vld [vmem:[%s4868 + $0x2c0] sm:$0xff]
    %v4958 = vld [vmem:[%s4868 + $0x2c8] sm:$0xff]
    %v4959 = vld [vmem:[%s4868 + $0x2d0] sm:$0xff]
    %v4960 = vld [vmem:[%s4868 + $0x2d8] sm:$0xff]
    %v4961 = vld [vmem:[%s4868 + $0x2e0] sm:$0xff]
    %v4962 = vld [vmem:[%s4868 + $0x2e8] sm:$0xff]
    %v4963 = vld [vmem:[%s4868 + $0x2f0] sm:$0xff]
    %v4964 = vld [vmem:[%s4868 + $0x2f8] sm:$0xff]
    %v5061 = vunpack.c.l.b16 %v4869
    %v5062 = vunpack.c.h.b16 %v4869
    %v5063 = vunpack.c.l.b16 %v4870
    %v5064 = vunpack.c.h.b16 %v4870
    %v5065 = vunpack.c.l.b16 %v4871
    %v5066 = vunpack.c.h.b16 %v4871
    %v5067 = vunpack.c.l.b16 %v4872
    %v5068 = vunpack.c.h.b16 %v4872
    %v5069 = vunpack.c.l.b16 %v4873
    %v5070 = vunpack.c.h.b16 %v4873
    %v5071 = vunpack.c.l.b16 %v4874
    %v5072 = vunpack.c.h.b16 %v4874
    %v5073 = vunpack.c.l.b16 %v4875
    %v5074 = vunpack.c.h.b16 %v4875
    %v5075 = vunpack.c.l.b16 %v4876
    %v5076 = vunpack.c.h.b16 %v4876
    %v5077 = vunpack.c.l.b16 %v4877
    %v5078 = vunpack.c.h.b16 %v4877
    %v5079 = vunpack.c.l.b16 %v4878
    %v5080 = vunpack.c.h.b16 %v4878
    %v5081 = vunpack.c.l.b16 %v4879
    %v5082 = vunpack.c.h.b16 %v4879
    %v5083 = vunpack.c.l.b16 %v4880
    %v5084 = vunpack.c.h.b16 %v4880
    %v5085 = vunpack.c.l.b16 %v4881
    %v5086 = vunpack.c.h.b16 %v4881
    %v5087 = vunpack.c.l.b16 %v4882
    %v5088 = vunpack.c.h.b16 %v4882
    %v5089 = vunpack.c.l.b16 %v4883
    %v5090 = vunpack.c.h.b16 %v4883
    %v5091 = vunpack.c.l.b16 %v4884
    %v5092 = vunpack.c.h.b16 %v4884
    %v5093 = vunpack.c.l.b16 %v4885
    %v5094 = vunpack.c.h.b16 %v4885
    %v5095 = vunpack.c.l.b16 %v4886
    %v5096 = vunpack.c.h.b16 %v4886
    %v5097 = vunpack.c.l.b16 %v4887
    %v5098 = vunpack.c.h.b16 %v4887
    %v5099 = vunpack.c.l.b16 %v4888
    %v5100 = vunpack.c.h.b16 %v4888
    %v5101 = vunpack.c.l.b16 %v4889
    %v5102 = vunpack.c.h.b16 %v4889
    %v5103 = vunpack.c.l.b16 %v4890
    %v5104 = vunpack.c.h.b16 %v4890
    %v5105 = vunpack.c.l.b16 %v4891
    %v5106 = vunpack.c.h.b16 %v4891
    %v5107 = vunpack.c.l.b16 %v4892
    %v5108 = vunpack.c.h.b16 %v4892
    %v5109 = vunpack.c.l.b16 %v4893
    %v5110 = vunpack.c.h.b16 %v4893
    %v5111 = vunpack.c.l.b16 %v4894
    %v5112 = vunpack.c.h.b16 %v4894
    %v5113 = vunpack.c.l.b16 %v4895
    %v5114 = vunpack.c.h.b16 %v4895
    %v5115 = vunpack.c.l.b16 %v4896
    %v5116 = vunpack.c.h.b16 %v4896
    %v5117 = vunpack.c.l.b16 %v4897
    %v5118 = vunpack.c.h.b16 %v4897
    %v5119 = vunpack.c.l.b16 %v4898
    %v5120 = vunpack.c.h.b16 %v4898
    %v5121 = vunpack.c.l.b16 %v4899
    %v5122 = vunpack.c.h.b16 %v4899
    %v5123 = vunpack.c.l.b16 %v4900
    %v5124 = vunpack.c.h.b16 %v4900
    %v5125 = vunpack.c.l.b16 %v4901
    %v5126 = vunpack.c.h.b16 %v4901
    %v5127 = vunpack.c.l.b16 %v4902
    %v5128 = vunpack.c.h.b16 %v4902
    %v5129 = vunpack.c.l.b16 %v4903
    %v5130 = vunpack.c.h.b16 %v4903
    %v5131 = vunpack.c.l.b16 %v4904
    %v5132 = vunpack.c.h.b16 %v4904
    %v5133 = vunpack.c.l.b16 %v4905
    %v5134 = vunpack.c.h.b16 %v4905
    %v5135 = vunpack.c.l.b16 %v4906
    %v5136 = vunpack.c.h.b16 %v4906
    %v5137 = vunpack.c.l.b16 %v4907
    %v5138 = vunpack.c.h.b16 %v4907
    %v5139 = vunpack.c.l.b16 %v4908
    %v5140 = vunpack.c.h.b16 %v4908
    %v5141 = vunpack.c.l.b16 %v4909
    %v5142 = vunpack.c.h.b16 %v4909
    %v5143 = vunpack.c.l.b16 %v4910
    %v5144 = vunpack.c.h.b16 %v4910
    %v5145 = vunpack.c.l.b16 %v4911
    %v5146 = vunpack.c.h.b16 %v4911
    %v5147 = vunpack.c.l.b16 %v4912
    %v5148 = vunpack.c.h.b16 %v4912
    %v5149 = vunpack.c.l.b16 %v4913
    %v5150 = vunpack.c.h.b16 %v4913
    %v5151 = vunpack.c.l.b16 %v4914
    %v5152 = vunpack.c.h.b16 %v4914
    %v5153 = vunpack.c.l.b16 %v4915
    %v5154 = vunpack.c.h.b16 %v4915
    %v5155 = vunpack.c.l.b16 %v4916
    %v5156 = vunpack.c.h.b16 %v4916
    %v5157 = vunpack.c.l.b16 %v4917
    %v5158 = vunpack.c.h.b16 %v4917
    %v5159 = vunpack.c.l.b16 %v4918
    %v5160 = vunpack.c.h.b16 %v4918
    %v5161 = vunpack.c.l.b16 %v4919
    %v5162 = vunpack.c.h.b16 %v4919
    %v5163 = vunpack.c.l.b16 %v4920
    %v5164 = vunpack.c.h.b16 %v4920
    %v5165 = vunpack.c.l.b16 %v4921
    %v5166 = vunpack.c.h.b16 %v4921
    %v5167 = vunpack.c.l.b16 %v4922
    %v5168 = vunpack.c.h.b16 %v4922
    %v5169 = vunpack.c.l.b16 %v4923
    %v5170 = vunpack.c.h.b16 %v4923
    %v5171 = vunpack.c.l.b16 %v4924
    %v5172 = vunpack.c.h.b16 %v4924
    %v5173 = vunpack.c.l.b16 %v4925
    %v5174 = vunpack.c.h.b16 %v4925
    %v5175 = vunpack.c.l.b16 %v4926
    %v5176 = vunpack.c.h.b16 %v4926
    %v5177 = vunpack.c.l.b16 %v4927
    %v5178 = vunpack.c.h.b16 %v4927
    %v5179 = vunpack.c.l.b16 %v4928
    %v5180 = vunpack.c.h.b16 %v4928
    %v5181 = vunpack.c.l.b16 %v4929
    %v5182 = vunpack.c.h.b16 %v4929
    %v5183 = vunpack.c.l.b16 %v4930
    %v5184 = vunpack.c.h.b16 %v4930
    %v5185 = vunpack.c.l.b16 %v4931
    %v5186 = vunpack.c.h.b16 %v4931
    %v5187 = vunpack.c.l.b16 %v4932
    %v5188 = vunpack.c.h.b16 %v4932
    %v5189 = vunpack.c.l.b16 %v4933
    %v5190 = vunpack.c.h.b16 %v4933
    %v5191 = vunpack.c.l.b16 %v4934
    %v5192 = vunpack.c.h.b16 %v4934
    %v5193 = vunpack.c.l.b16 %v4935
    %v5194 = vunpack.c.h.b16 %v4935
    %v5195 = vunpack.c.l.b16 %v4936
    %v5196 = vunpack.c.h.b16 %v4936
    %v5197 = vunpack.c.l.b16 %v4937
    %v5198 = vunpack.c.h.b16 %v4937
    %v5199 = vunpack.c.l.b16 %v4938
    %v5200 = vunpack.c.h.b16 %v4938
    %v5201 = vunpack.c.l.b16 %v4939
    %v5202 = vunpack.c.h.b16 %v4939
    %v5203 = vunpack.c.l.b16 %v4940
    %v5204 = vunpack.c.h.b16 %v4940
    %v5205 = vunpack.c.l.b16 %v4941
    %v5206 = vunpack.c.h.b16 %v4941
    %v5207 = vunpack.c.l.b16 %v4942
    %v5208 = vunpack.c.h.b16 %v4942
    %v5209 = vunpack.c.l.b16 %v4943
    %v5210 = vunpack.c.h.b16 %v4943
    %v5211 = vunpack.c.l.b16 %v4944
    %v5212 = vunpack.c.h.b16 %v4944
    %v5213 = vunpack.c.l.b16 %v4945
    %v5214 = vunpack.c.h.b16 %v4945
    %v5215 = vunpack.c.l.b16 %v4946
    %v5216 = vunpack.c.h.b16 %v4946
    %v5217 = vunpack.c.l.b16 %v4947
    %v5218 = vunpack.c.h.b16 %v4947
    %v5219 = vunpack.c.l.b16 %v4948
    %v5220 = vunpack.c.h.b16 %v4948
    %v5221 = vunpack.c.l.b16 %v4949
    %v5222 = vunpack.c.h.b16 %v4949
    %v5223 = vunpack.c.l.b16 %v4950
    %v5224 = vunpack.c.h.b16 %v4950
    %v5225 = vunpack.c.l.b16 %v4951
    %v5226 = vunpack.c.h.b16 %v4951
    %v5227 = vunpack.c.l.b16 %v4952
    %v5228 = vunpack.c.h.b16 %v4952
    %v5229 = vunpack.c.l.b16 %v4953
    %v5230 = vunpack.c.h.b16 %v4953
    %v5231 = vunpack.c.l.b16 %v4954
    %v5232 = vunpack.c.h.b16 %v4954
    %v5233 = vunpack.c.l.b16 %v4955
    %v5234 = vunpack.c.h.b16 %v4955
    %v5235 = vunpack.c.l.b16 %v4956
    %v5236 = vunpack.c.h.b16 %v4956
    %v5237 = vunpack.c.l.b16 %v4957
    %v5238 = vunpack.c.h.b16 %v4957
    %v5239 = vunpack.c.l.b16 %v4958
    %v5240 = vunpack.c.h.b16 %v4958
    %v5241 = vunpack.c.l.b16 %v4959
    %v5242 = vunpack.c.h.b16 %v4959
    %v5243 = vunpack.c.l.b16 %v4960
    %v5244 = vunpack.c.h.b16 %v4960
    %v5245 = vunpack.c.l.b16 %v4961
    %v5246 = vunpack.c.h.b16 %v4961
    %v5247 = vunpack.c.l.b16 %v4962
    %v5248 = vunpack.c.h.b16 %v4962
    %v5249 = vunpack.c.l.b16 %v4963
    %v5250 = vunpack.c.h.b16 %v4963
    %v5251 = vunpack.c.l.b16 %v4964
    %v5252 = vunpack.c.h.b16 %v4964
    %v5253 = vpack.c.b16 %v5065, %v5061
    %v5254 = vpack.c.b16 %v5066, %v5062
    %v5255 = vpack.c.b16 %v5067, %v5063
    %v5256 = vpack.c.b16 %v5068, %v5064
    %v5257 = vpack.c.b16 %v5073, %v5069
    %v5258 = vpack.c.b16 %v5074, %v5070
    %v5259 = vpack.c.b16 %v5075, %v5071
    %v5260 = vpack.c.b16 %v5076, %v5072
    %v5261 = vpack.c.b16 %v5081, %v5077
    %v5262 = vpack.c.b16 %v5082, %v5078
    %v5263 = vpack.c.b16 %v5083, %v5079
    %v5264 = vpack.c.b16 %v5084, %v5080
    %v5265 = vpack.c.b16 %v5089, %v5085
    %v5266 = vpack.c.b16 %v5090, %v5086
    %v5267 = vpack.c.b16 %v5091, %v5087
    %v5268 = vpack.c.b16 %v5092, %v5088
    %v5269 = vpack.c.b16 %v5097, %v5093
    %v5270 = vpack.c.b16 %v5098, %v5094
    %v5271 = vpack.c.b16 %v5099, %v5095
    %v5272 = vpack.c.b16 %v5100, %v5096
    %v5273 = vpack.c.b16 %v5105, %v5101
    %v5274 = vpack.c.b16 %v5106, %v5102
    %v5275 = vpack.c.b16 %v5107, %v5103
    %v5276 = vpack.c.b16 %v5108, %v5104
    %v5277 = vpack.c.b16 %v5113, %v5109
    %v5278 = vpack.c.b16 %v5114, %v5110
    %v5279 = vpack.c.b16 %v5115, %v5111
    %v5280 = vpack.c.b16 %v5116, %v5112
    %v5281 = vpack.c.b16 %v5121, %v5117
    %v5282 = vpack.c.b16 %v5122, %v5118
    %v5283 = vpack.c.b16 %v5123, %v5119
    %v5284 = vpack.c.b16 %v5124, %v5120
    %v5285 = vpack.c.b16 %v5129, %v5125
    %v5286 = vpack.c.b16 %v5130, %v5126
    %v5287 = vpack.c.b16 %v5131, %v5127
    %v5288 = vpack.c.b16 %v5132, %v5128
    %v5289 = vpack.c.b16 %v5137, %v5133
    %v5290 = vpack.c.b16 %v5138, %v5134
    %v5291 = vpack.c.b16 %v5139, %v5135
    %v5292 = vpack.c.b16 %v5140, %v5136
    %v5293 = vpack.c.b16 %v5145, %v5141
    %v5294 = vpack.c.b16 %v5146, %v5142
    %v5295 = vpack.c.b16 %v5147, %v5143
    %v5296 = vpack.c.b16 %v5148, %v5144
    %v5297 = vpack.c.b16 %v5153, %v5149
    %v5298 = vpack.c.b16 %v5154, %v5150
    %v5299 = vpack.c.b16 %v5155, %v5151
    %v5300 = vpack.c.b16 %v5156, %v5152
    %v5301 = vpack.c.b16 %v5161, %v5157
    %v5302 = vpack.c.b16 %v5162, %v5158
    %v5303 = vpack.c.b16 %v5163, %v5159
    %v5304 = vpack.c.b16 %v5164, %v5160
    %v5305 = vpack.c.b16 %v5169, %v5165
    %v5306 = vpack.c.b16 %v5170, %v5166
    %v5307 = vpack.c.b16 %v5171, %v5167
    %v5308 = vpack.c.b16 %v5172, %v5168
    %v5309 = vpack.c.b16 %v5177, %v5173
    %v5310 = vpack.c.b16 %v5178, %v5174
    %v5311 = vpack.c.b16 %v5179, %v5175
    %v5312 = vpack.c.b16 %v5180, %v5176
    %v5313 = vpack.c.b16 %v5185, %v5181
    %v5314 = vpack.c.b16 %v5186, %v5182
    %v5315 = vpack.c.b16 %v5187, %v5183
    %v5316 = vpack.c.b16 %v5188, %v5184
    %v5317 = vpack.c.b16 %v5193, %v5189
    %v5318 = vpack.c.b16 %v5194, %v5190
    %v5319 = vpack.c.b16 %v5195, %v5191
    %v5320 = vpack.c.b16 %v5196, %v5192
    %v5321 = vpack.c.b16 %v5201, %v5197
    %v5322 = vpack.c.b16 %v5202, %v5198
    %v5323 = vpack.c.b16 %v5203, %v5199
    %v5324 = vpack.c.b16 %v5204, %v5200
    %v5325 = vpack.c.b16 %v5209, %v5205
    %v5326 = vpack.c.b16 %v5210, %v5206
    %v5327 = vpack.c.b16 %v5211, %v5207
    %v5328 = vpack.c.b16 %v5212, %v5208
    %v5329 = vpack.c.b16 %v5217, %v5213
    %v5330 = vpack.c.b16 %v5218, %v5214
    %v5331 = vpack.c.b16 %v5219, %v5215
    %v5332 = vpack.c.b16 %v5220, %v5216
    %v5333 = vpack.c.b16 %v5225, %v5221
    %v5334 = vpack.c.b16 %v5226, %v5222
    %v5335 = vpack.c.b16 %v5227, %v5223
    %v5336 = vpack.c.b16 %v5228, %v5224
    %v5337 = vpack.c.b16 %v5233, %v5229
    %v5338 = vpack.c.b16 %v5234, %v5230
    %v5339 = vpack.c.b16 %v5235, %v5231
    %v5340 = vpack.c.b16 %v5236, %v5232
    %v5341 = vpack.c.b16 %v5241, %v5237
    %v5342 = vpack.c.b16 %v5242, %v5238
    %v5343 = vpack.c.b16 %v5243, %v5239
    %v5344 = vpack.c.b16 %v5244, %v5240
    %v5345 = vpack.c.b16 %v5249, %v5245
    %v5346 = vpack.c.b16 %v5250, %v5246
    %v5347 = vpack.c.b16 %v5251, %v5247
    %v5348 = vpack.c.b16 %v5252, %v5248
    %5445 = vmatprep.subr.bf16.mxu0 %v5254
    %5446 = vmatpush1.bf16.msra.mxu0 %v5253
    %5447 = vmatprep.subr.bf16.mxu0 %v5258
    %5448 = vmatpush1.bf16.msra.mxu0 %v5257
    %5449 = vmatprep.subr.bf16.mxu0 %v5262
    %5450 = vmatpush1.bf16.msra.mxu0 %v5261
    %5451 = vmatprep.subr.bf16.mxu0 %v5266
    %5452 = vmatpush1.bf16.msra.mxu0 %v5265
    %5453 = vmatprep.subr.bf16.mxu0 %v5270
    %5454 = vmatpush1.bf16.msra.mxu0 %v5269
    %5455 = vmatprep.subr.bf16.mxu0 %v5274
    %5456 = vmatpush1.bf16.msra.mxu0 %v5273
    %5457 = vmatprep.subr.bf16.mxu0 %v5278
    %5458 = vmatpush1.bf16.msra.mxu0 %v5277
    %5459 = vmatprep.subr.bf16.mxu0 %v5282
    %5460 = vmatpush1.bf16.msra.mxu0 %v5281
    %5461 = vmatprep.subr.bf16.mxu0 %v5286
    %5462 = vmatpush1.bf16.msra.mxu0 %v5285
    %5463 = vmatprep.subr.bf16.mxu0 %v5290
    %5464 = vmatpush1.bf16.msra.mxu0 %v5289
    %5465 = vmatprep.subr.bf16.mxu0 %v5294
    %5466 = vmatpush1.bf16.msra.mxu0 %v5293
    %5467 = vmatprep.subr.bf16.mxu0 %v5298
    %5468 = vmatpush1.bf16.msra.mxu0 %v5297
    %5469 = vmatprep.subr.bf16.mxu0 %v5302
    %5470 = vmatpush1.bf16.msra.mxu0 %v5301
    %5471 = vmatprep.subr.bf16.mxu0 %v5306
    %5472 = vmatpush1.bf16.msra.mxu0 %v5305
    %5473 = vmatprep.subr.bf16.mxu0 %v5310
    %5474 = vmatpush1.bf16.msra.mxu0 %v5309
    %5475 = vmatprep.subr.bf16.mxu0 %v5314
    %5476 = vmatpush1.bf16.msra.mxu0 %v5313
    %5477 = vmatprep.mubr.bf16.mxu0 %v1303
    %5478 = vmatmul.mubr.bf16.gmra.mrb[0].mxu0 %v1302
    %v5479 = vpop.f32.mrb[0].mxu0
    %v5480 = vadd.f32 0.0, %v5479
    %v5481 = vpop.f32.mrb[0].mxu0
    %v5482 = vadd.f32 0.0, %v5481
    %v5483 = vpop.f32.mrb[0].mxu0
    %v5484 = vadd.f32 0.0, %v5483
    %v5485 = vpop.f32.mrb[0].mxu0
    %v5486 = vadd.f32 0.0, %v5485
    %5487 = vmatprep.mubr.bf16.mxu0 %v1306
    %5488 = vmatmul.mubr.bf16.gmra.mrb[0].mxu0 %v1305
    %v5489 = vpop.f32.mrb[0].mxu0
    %v5490 = vadd.f32 0.0, %v5489
    %v5491 = vpop.f32.mrb[0].mxu0
    %v5492 = vadd.f32 0.0, %v5491
    %v5493 = vpop.f32.mrb[0].mxu0
    %v5494 = vadd.f32 0.0, %v5493
    %v5495 = vpop.f32.mrb[0].mxu0
    %v5496 = vadd.f32 0.0, %v5495
    %5497 = vmatprep.mubr.bf16.mxu0 %v3058
    %5498 = vmatmul.mubr.bf16.gmra.mrb[0].mxu0 %v3057
    %v5499 = vpop.f32.mrb[0].mxu0
    %v5500 = vadd.f32 0.0, %v5499
    %v5501 = vpop.f32.mrb[0].mxu0
    %v5502 = vadd.f32 0.0, %v5501
    %v5503 = vpop.f32.mrb[0].mxu0
    %v5504 = vadd.f32 0.0, %v5503
    %v5505 = vpop.f32.mrb[0].mxu0
    %v5506 = vadd.f32 0.0, %v5505
    %5507 = vmatprep.mubr.bf16.mxu0 %v4866
    %5508 = vmatmul.mubr.bf16.gmra.mrb[0].mxu0 %v4865
    %v5509 = vpop.f32.mrb[0].mxu0
    %v5510 = vadd.f32 0.0, %v5509
    %v5511 = vpop.f32.mrb[0].mxu0
    %v5512 = vadd.f32 0.0, %v5511
    %v5513 = vpop.f32.mrb[0].mxu0
    %v5514 = vadd.f32 0.0, %v5513
    %v5515 = vpop.f32.mrb[0].mxu0
    %v5516 = vadd.f32 0.0, %v5515
    %5517 = vdwg.mxu0
    %5518 = vmatprep.subr.bf16.mxu0 %v5318
    %5519 = vmatpush1.bf16.msra.mxu0 %v5317
    %5520 = vmatprep.subr.bf16.mxu0 %v5322
    %5521 = vmatpush1.bf16.msra.mxu0 %v5321
    %5522 = vmatprep.subr.bf16.mxu0 %v5326
    %5523 = vmatpush1.bf16.msra.mxu0 %v5325
    %5524 = vmatprep.subr.bf16.mxu0 %v5330
    %5525 = vmatpush1.bf16.msra.mxu0 %v5329
    %5526 = vmatprep.subr.bf16.mxu0 %v5334
    %5527 = vmatpush1.bf16.msra.mxu0 %v5333
    %5528 = vmatprep.subr.bf16.mxu0 %v5338
    %5529 = vmatpush1.bf16.msra.mxu0 %v5337
    %5530 = vmatprep.subr.bf16.mxu0 %v5342
    %5531 = vmatpush1.bf16.msra.mxu0 %v5341
    %5532 = vmatprep.subr.bf16.mxu0 %v5346
    %5533 = vmatpush1.bf16.msra.mxu0 %v5345
    %5534 = vmatprep.subr.bf16.mxu0 0
    %5535 = vmatpush1.bf16.msra.mxu0 0
    %5536 = vmatprep.subr.bf16.mxu0 0
    %5537 = vmatpush1.bf16.msra.mxu0 0
    %5538 = vmatprep.subr.bf16.mxu0 0
    %5539 = vmatpush1.bf16.msra.mxu0 0
    %5540 = vmatprep.subr.bf16.mxu0 0
    %5541 = vmatpush1.bf16.msra.mxu0 0
    %5542 = vmatprep.subr.bf16.mxu0 0
    %5543 = vmatpush1.bf16.msra.mxu0 0
    %5544 = vmatprep.subr.bf16.mxu0 0
    %5545 = vmatpush1.bf16.msra.mxu0 0
    %5546 = vmatprep.subr.bf16.mxu0 0
    %5547 = vmatpush1.bf16.msra.mxu0 0
    %5548 = vmatprep.subr.bf16.mxu0 0
    %5549 = vmatpush1.bf16.msra.mxu0 0
    %5550 = vmatprep.mubr.bf16.mxu0 0
    %5551 = vmatmul.mubr.bf16.gmra.mrb[0].mxu0 %v1304
    %v5552 = vpop.f32.mrb[0].mxu0
    %v5553 = vadd.f32 %v5480, %v5552
    %v5554 = vpop.f32.mrb[0].mxu0
    %v5555 = vadd.f32 %v5482, %v5554
    %v5556 = vpop.f32.mrb[0].mxu0
    %v5557 = vadd.f32 %v5484, %v5556
    %v5558 = vpop.f32.mrb[0].mxu0
    %v5559 = vadd.f32 %v5486, %v5558
    %5560 = vmatprep.mubr.bf16.mxu0 0
    %5561 = vmatmul.mubr.bf16.gmra.mrb[0].mxu0 %v1307
    %v5562 = vpop.f32.mrb[0].mxu0
    %v5563 = vadd.f32 %v5490, %v5562
    %v5564 = vpop.f32.mrb[0].mxu0
    %v5565 = vadd.f32 %v5492, %v5564
    %v5566 = vpop.f32.mrb[0].mxu0
    %v5567 = vadd.f32 %v5494, %v5566
    %v5568 = vpop.f32.mrb[0].mxu0
    %v5569 = vadd.f32 %v5496, %v5568
    %5570 = vmatprep.mubr.bf16.mxu0 0
    %5571 = vmatmul.mubr.bf16.gmra.mrb[0].mxu0 %v3059
    %v5572 = vpop.f32.mrb[0].mxu0
    %v5573 = vadd.f32 %v5500, %v5572
    %v5574 = vpop.f32.mrb[0].mxu0
    %v5575 = vadd.f32 %v5502, %v5574
    %v5576 = vpop.f32.mrb[0].mxu0
    %v5577 = vadd.f32 %v5504, %v5576
    %v5578 = vpop.f32.mrb[0].mxu0
    %v5579 = vadd.f32 %v5506, %v5578
    %5580 = vmatprep.mubr.bf16.mxu0 0
    %5581 = vmatmul.mubr.bf16.gmra.mrb[0].mxu0 %v4867
    %v5582 = vpop.f32.mrb[0].mxu0
    %v5583 = vadd.f32 %v5510, %v5582
    %v5584 = vpop.f32.mrb[0].mxu0
    %v5585 = vadd.f32 %v5512, %v5584
    %v5586 = vpop.f32.mrb[0].mxu0
    %v5587 = vadd.f32 %v5514, %v5586
    %v5588 = vpop.f32.mrb[0].mxu0
    %v5589 = vadd.f32 %v5516, %v5588
    %5590 = vdwg.mxu0
    %5591 = vmatprep.subr.bf16.mxu0 %v5256
    %5592 = vmatpush1.bf16.msra.mxu0 %v5255
    %5593 = vmatprep.subr.bf16.mxu0 %v5260
    %5594 = vmatpush1.bf16.msra.mxu0 %v5259
    %5595 = vmatprep.subr.bf16.mxu0 %v5264
    %5596 = vmatpush1.bf16.msra.mxu0 %v5263
    %5597 = vmatprep.subr.bf16.mxu0 %v5268
    %5598 = vmatpush1.bf16.msra.mxu0 %v5267
    %5599 = vmatprep.subr.bf16.mxu0 %v5272
    %5600 = vmatpush1.bf16.msra.mxu0 %v5271
    %5601 = vmatprep.subr.bf16.mxu0 %v5276
    %5602 = vmatpush1.bf16.msra.mxu0 %v5275
    %5603 = vmatprep.subr.bf16.mxu0 %v5280
    %5604 = vmatpush1.bf16.msra.mxu0 %v5279
    %5605 = vmatprep.subr.bf16.mxu0 %v5284
    %5606 = vmatpush1.bf16.msra.mxu0 %v5283
    %5607 = vmatprep.subr.bf16.mxu0 %v5288
    %5608 = vmatpush1.bf16.msra.mxu0 %v5287
    %5609 = vmatprep.subr.bf16.mxu0 %v5292
    %5610 = vmatpush1.bf16.msra.mxu0 %v5291
    %5611 = vmatprep.subr.bf16.mxu0 %v5296
    %5612 = vmatpush1.bf16.msra.mxu0 %v5295
    %5613 = vmatprep.subr.bf16.mxu0 %v5300
    %5614 = vmatpush1.bf16.msra.mxu0 %v5299
    %5615 = vmatprep.subr.bf16.mxu0 %v5304
    %5616 = vmatpush1.bf16.msra.mxu0 %v5303
    %5617 = vmatprep.subr.bf16.mxu0 %v5308
    %5618 = vmatpush1.bf16.msra.mxu0 %v5307
    %5619 = vmatprep.subr.bf16.mxu0 %v5312
    %5620 = vmatpush1.bf16.msra.mxu0 %v5311
    %5621 = vmatprep.subr.bf16.mxu0 %v5316
    %5622 = vmatpush1.bf16.msra.mxu0 %v5315
    %5623 = vmatprep.mubr.bf16.mxu0 %v1303
    %5624 = vmatmul.mubr.bf16.gmra.mrb[0].mxu0 %v1302
    %v5625 = vpop.f32.mrb[0].mxu0
    %v5626 = vadd.f32 0.0, %v5625
    %v5627 = vpop.f32.mrb[0].mxu0
    %v5628 = vadd.f32 0.0, %v5627
    %v5629 = vpop.f32.mrb[0].mxu0
    %v5630 = vadd.f32 0.0, %v5629
    %v5631 = vpop.f32.mrb[0].mxu0
    %v5632 = vadd.f32 0.0, %v5631
    %5633 = vmatprep.mubr.bf16.mxu0 %v1306
    %5634 = vmatmul.mubr.bf16.gmra.mrb[0].mxu0 %v1305
    %v5635 = vpop.f32.mrb[0].mxu0
    %v5636 = vadd.f32 0.0, %v5635
    %v5637 = vpop.f32.mrb[0].mxu0
    %v5638 = vadd.f32 0.0, %v5637
    %v5639 = vpop.f32.mrb[0].mxu0
    %v5640 = vadd.f32 0.0, %v5639
    %v5641 = vpop.f32.mrb[0].mxu0
    %v5642 = vadd.f32 0.0, %v5641
    %5643 = vmatprep.mubr.bf16.mxu0 %v3058
    %5644 = vmatmul.mubr.bf16.gmra.mrb[0].mxu0 %v3057
    %v5645 = vpop.f32.mrb[0].mxu0
    %v5646 = vadd.f32 0.0, %v5645
    %v5647 = vpop.f32.mrb[0].mxu0
    %v5648 = vadd.f32 0.0, %v5647
    %v5649 = vpop.f32.mrb[0].mxu0
    %v5650 = vadd.f32 0.0, %v5649
    %v5651 = vpop.f32.mrb[0].mxu0
    %v5652 = vadd.f32 0.0, %v5651
    %5653 = vmatprep.mubr.bf16.mxu0 %v4866
    %5654 = vmatmul.mubr.bf16.gmra.mrb[0].mxu0 %v4865
    %v5655 = vpop.f32.mrb[0].mxu0
    %v5656 = vadd.f32 0.0, %v5655
    %v5657 = vpop.f32.mrb[0].mxu0
    %v5658 = vadd.f32 0.0, %v5657
    %v5659 = vpop.f32.mrb[0].mxu0
    %v5660 = vadd.f32 0.0, %v5659
    %v5661 = vpop.f32.mrb[0].mxu0
    %v5662 = vadd.f32 0.0, %v5661
    %5663 = vdwg.mxu0
    %5664 = vmatprep.subr.bf16.mxu0 %v5320
    %5665 = vmatpush1.bf16.msra.mxu0 %v5319
    %5666 = vmatprep.subr.bf16.mxu0 %v5324
    %5667 = vmatpush1.bf16.msra.mxu0 %v5323
    %5668 = vmatprep.subr.bf16.mxu0 %v5328
    %5669 = vmatpush1.bf16.msra.mxu0 %v5327
    %5670 = vmatprep.subr.bf16.mxu0 %v5332
    %5671 = vmatpush1.bf16.msra.mxu0 %v5331
    %5672 = vmatprep.subr.bf16.mxu0 %v5336
    %5673 = vmatpush1.bf16.msra.mxu0 %v5335
    %5674 = vmatprep.subr.bf16.mxu0 %v5340
    %5675 = vmatpush1.bf16.msra.mxu0 %v5339
    %5676 = vmatprep.subr.bf16.mxu0 %v5344
    %5677 = vmatpush1.bf16.msra.mxu0 %v5343
    %5678 = vmatprep.subr.bf16.mxu0 %v5348
    %5679 = vmatpush1.bf16.msra.mxu0 %v5347
    %5680 = vmatprep.subr.bf16.mxu0 0
    %5681 = vmatpush1.bf16.msra.mxu0 0
    %5682 = vmatprep.subr.bf16.mxu0 0
    %5683 = vmatpush1.bf16.msra.mxu0 0
    %5684 = vmatprep.subr.bf16.mxu0 0
    %5685 = vmatpush1.bf16.msra.mxu0 0
    %5686 = vmatprep.subr.bf16.mxu0 0
    %5687 = vmatpush1.bf16.msra.mxu0 0
    %5688 = vmatprep.subr.bf16.mxu0 0
    %5689 = vmatpush1.bf16.msra.mxu0 0
    %5690 = vmatprep.subr.bf16.mxu0 0
    %5691 = vmatpush1.bf16.msra.mxu0 0
    %5692 = vmatprep.subr.bf16.mxu0 0
    %5693 = vmatpush1.bf16.msra.mxu0 0
    %5694 = vmatprep.subr.bf16.mxu0 0
    %5695 = vmatpush1.bf16.msra.mxu0 0
    %5696 = vmatprep.mubr.bf16.mxu0 0
    %5697 = vmatmul.mubr.bf16.gmra.mrb[0].mxu0 %v1304
    %v5698 = vpop.f32.mrb[0].mxu0
    %v5699 = vadd.f32 %v5626, %v5698
    %v5700 = vpop.f32.mrb[0].mxu0
    %v5701 = vadd.f32 %v5628, %v5700
    %v5702 = vpop.f32.mrb[0].mxu0
    %v5703 = vadd.f32 %v5630, %v5702
    %v5704 = vpop.f32.mrb[0].mxu0
    %v5705 = vadd.f32 %v5632, %v5704
    %5706 = vmatprep.mubr.bf16.mxu0 0
    %5707 = vmatmul.mubr.bf16.gmra.mrb[0].mxu0 %v1307
    %v5708 = vpop.f32.mrb[0].mxu0
    %v5709 = vadd.f32 %v5636, %v5708
    %v5710 = vpop.f32.mrb[0].mxu0
    %v5711 = vadd.f32 %v5638, %v5710
    %v5712 = vpop.f32.mrb[0].mxu0
    %v5713 = vadd.f32 %v5640, %v5712
    %v5714 = vpop.f32.mrb[0].mxu0
    %v5715 = vadd.f32 %v5642, %v5714
    %5716 = vmatprep.mubr.bf16.mxu0 0
    %5717 = vmatmul.mubr.bf16.gmra.mrb[0].mxu0 %v3059
    %v5718 = vpop.f32.mrb[0].mxu0
    %v5719 = vadd.f32 %v5646, %v5718
    %v5720 = vpop.f32.mrb[0].mxu0
    %v5721 = vadd.f32 %v5648, %v5720
    %v5722 = vpop.f32.mrb[0].mxu0
    %v5723 = vadd.f32 %v5650, %v5722
    %v5724 = vpop.f32.mrb[0].mxu0
    %v5725 = vadd.f32 %v5652, %v5724
    %5726 = vmatprep.mubr.bf16.mxu0 0
    %5727 = vmatmul.mubr.bf16.gmra.mrb[0].mxu0 %v4867
    %v5728 = vpop.f32.mrb[0].mxu0
    %v5729 = vadd.f32 %v5656, %v5728
    %v5730 = vpop.f32.mrb[0].mxu0
    %v5731 = vadd.f32 %v5658, %v5730
    %v5732 = vpop.f32.mrb[0].mxu0
    %v5733 = vadd.f32 %v5660, %v5732
    %v5734 = vpop.f32.mrb[0].mxu0
    %v5735 = vadd.f32 %v5662, %v5734
    %5736 = vdwg.mxu0
    %v5737 = vadd.f32 %v4833, %v5553
    %v5738 = vadd.f32 %v4834, %v5555
    %v5739 = vadd.f32 %v4835, %v5699
    %v5740 = vadd.f32 %v4836, %v5701
    %v5741 = vadd.f32 %v4837, %v5557
    %v5742 = vadd.f32 %v4838, %v5559
    %v5743 = vadd.f32 %v4839, %v5703
    %v5744 = vadd.f32 %v4840, %v5705
    %v5745 = vadd.f32 %v4841, %v5563
    %v5746 = vadd.f32 %v4842, %v5565
    %v5747 = vadd.f32 %v4843, %v5709
    %v5748 = vadd.f32 %v4844, %v5711
    %v5749 = vadd.f32 %v4845, %v5567
    %v5750 = vadd.f32 %v4846, %v5569
    %v5751 = vadd.f32 %v4847, %v5713
    %v5752 = vadd.f32 %v4848, %v5715
    %v5753 = vadd.f32 %v4849, %v5573
    %v5754 = vadd.f32 %v4850, %v5575
    %v5755 = vadd.f32 %v4851, %v5719
    %v5756 = vadd.f32 %v4852, %v5721
    %v5757 = vadd.f32 %v4853, %v5577
    %v5758 = vadd.f32 %v4854, %v5579
    %v5759 = vadd.f32 %v4855, %v5723
    %v5760 = vadd.f32 %v4856, %v5725
    %v5761 = vadd.f32 %v4857, %v5583
    %v5762 = vadd.f32 %v4858, %v5585
    %v5763 = vadd.f32 %v4859, %v5729
    %v5764 = vadd.f32 %v4860, %v5731
    %v5765 = vadd.f32 %v4861, %v5587
    %v5766 = vadd.f32 %v4862, %v5589
    %v5767 = vadd.f32 %v4863, %v5733
    %v5768 = vadd.f32 %v4864, %v5735
    %v5769 = vmax.f32 %v5737, %v5741
    %v5770 = vmax.f32 %v5738, %v5742
    %v5771 = vmax.f32 %v5739, %v5743
    %v5772 = vmax.f32 %v5740, %v5744
    %v5773 = vmax.f32 %v5769, %v5771
    %v5774 = vmax.f32 %v5770, %v5772
    %v5775 = vld [vmem:[#allocation7] sm:$0x3]
    %v5777 = vlaneseq
    %v5778 = vshrl.u32 %v5777, 7
    %v5779 = vsub.s32 0, %v5778
    %v5780 = vrot.slane %v5775, %v5779
    %v5781 = vlaneseq
    %v5782 = vshrl.u32 %v5781, 7
    %v5783 = vsub.s32 1, %v5782
    %v5784 = vrot.slane %v5775, %v5783
    %v5787 = vadd.f32 %v5773, %v5780
    %v5788 = vadd.f32 %v5774, %v5784
    %v5789 = vmax.f32 %v5787, 0.0
    %v5790 = vmax.f32 %v5788, 0.0
    %v5791 = vmax.f32 %v5745, %v5749
    %v5792 = vmax.f32 %v5746, %v5750
    %v5793 = vmax.f32 %v5747, %v5751
    %v5794 = vmax.f32 %v5748, %v5752
    %v5795 = vmax.f32 %v5791, %v5793
    %v5796 = vmax.f32 %v5792, %v5794
    %v5797 = vadd.f32 %v5795, %v5780
    %v5798 = vadd.f32 %v5796, %v5784
    %v5799 = vmax.f32 %v5797, 0.0
    %v5800 = vmax.f32 %v5798, 0.0
    %v5801 = vmax.f32 %v5753, %v5757
    %v5802 = vmax.f32 %v5754, %v5758
    %v5803 = vmax.f32 %v5755, %v5759
    %v5804 = vmax.f32 %v5756, %v5760
    %v5805 = vmax.f32 %v5801, %v5803
    %v5806 = vmax.f32 %v5802, %v5804
    %v5807 = vadd.f32 %v5805, %v5780
    %v5808 = vadd.f32 %v5806, %v5784
    %v5809 = vmax.f32 %v5807, 0.0
    %v5810 = vmax.f32 %v5808, 0.0
    %v5811 = vmax.f32 %v5761, %v5765
    %v5812 = vmax.f32 %v5762, %v5766
    %v5813 = vmax.f32 %v5763, %v5767
    %v5814 = vmax.f32 %v5764, %v5768
    %v5815 = vmax.f32 %v5811, %v5813
    %v5816 = vmax.f32 %v5812, %v5814
    %v5817 = vadd.f32 %v5815, %v5780
    %v5818 = vadd.f32 %v5816, %v5784
    %v5819 = vmax.f32 %v5817, 0.0
    %v5820 = vmax.f32 %v5818, 0.0
    %v5821 = vpack.c.bf16 %v5789, %v5789
    %v5822 = vpack.c.bf16 %v5790, %v5790
    %v5823 = vpack.c.bf16 %v5799, %v5799
    %v5824 = vpack.c.bf16 %v5800, %v5800
    %v5825 = vpack.c.bf16 %v5809, %v5809
    %v5826 = vpack.c.bf16 %v5810, %v5810
    %v5827 = vpack.c.bf16 %v5819, %v5819
    %v5828 = vpack.c.bf16 %v5820, %v5820
    %v5829 = vld [vmem:[#allocation9] sm:$0xf]
    %v5830 = vld [vmem:[#allocation9 + $0x4] sm:$0xf]
    %v5831 = vld [vmem:[#allocation9 + $0x8] sm:$0xf]
    %v5832 = vld [vmem:[#allocation9 + $0xc] sm:$0xf]
    %v5833 = vld [vmem:[#allocation9 + $0x10] sm:$0xf]
    %v5834 = vld [vmem:[#allocation9 + $0x14] sm:$0xf]
    %v5835 = vld [vmem:[#allocation9 + $0x18] sm:$0xf]
    %v5836 = vld [vmem:[#allocation9 + $0x1c] sm:$0xf]
    %v5837 = vld [vmem:[#allocation9 + $0x20] sm:$0xf]
    %v5838 = vld [vmem:[#allocation9 + $0x24] sm:$0xf]
    %v5839 = vld [vmem:[#allocation9 + $0x28] sm:$0xf]
    %v5840 = vld [vmem:[#allocation9 + $0x2c] sm:$0xf]
    %v5841 = vld [vmem:[#allocation9 + $0x30] sm:$0xf]
    %v5842 = vld [vmem:[#allocation9 + $0x34] sm:$0xf]
    %v5843 = vld [vmem:[#allocation9 + $0x38] sm:$0xf]
    %v5844 = vld [vmem:[#allocation9 + $0x3c] sm:$0xf]
    %v5845 = vld [vmem:[#allocation9 + $0x40] sm:$0xf]
    %v5846 = vld [vmem:[#allocation9 + $0x44] sm:$0xf]
    %v5847 = vld [vmem:[#allocation9 + $0x48] sm:$0xf]
    %v5848 = vld [vmem:[#allocation9 + $0x4c] sm:$0xf]
    %v5849 = vld [vmem:[#allocation9 + $0x50] sm:$0xf]
    %v5850 = vld [vmem:[#allocation9 + $0x54] sm:$0xf]
    %v5851 = vld [vmem:[#allocation9 + $0x58] sm:$0xf]
    %v5852 = vld [vmem:[#allocation9 + $0x5c] sm:$0xf]
    %v5853 = vld [vmem:[#allocation9 + $0x60] sm:$0xf]
    %v5854 = vld [vmem:[#allocation9 + $0x64] sm:$0xf]
    %v5855 = vld [vmem:[#allocation9 + $0x68] sm:$0xf]
    %v5856 = vld [vmem:[#allocation9 + $0x6c] sm:$0xf]
    %v5857 = vld [vmem:[#allocation9 + $0x70] sm:$0xf]
    %v5858 = vld [vmem:[#allocation9 + $0x74] sm:$0xf]
    %v5859 = vld [vmem:[#allocation9 + $0x78] sm:$0xf]
    %v5860 = vld [vmem:[#allocation9 + $0x7c] sm:$0xf]
    %v5861 = vld [vmem:[#allocation9 + $0x80] sm:$0xf]
    %v5862 = vld [vmem:[#allocation9 + $0x84] sm:$0xf]
    %v5863 = vld [vmem:[#allocation9 + $0x88] sm:$0xf]
    %v5864 = vld [vmem:[#allocation9 + $0x8c] sm:$0xf]
    %v5865 = vld [vmem:[#allocation9 + $0x90] sm:$0xf]
    %v5866 = vld [vmem:[#allocation9 + $0x94] sm:$0xf]
    %v5867 = vld [vmem:[#allocation9 + $0x98] sm:$0xf]
    %v5868 = vld [vmem:[#allocation9 + $0x9c] sm:$0xf]
    %v5869 = vld [vmem:[#allocation9 + $0xa0] sm:$0xf]
    %v5870 = vld [vmem:[#allocation9 + $0xa4] sm:$0xf]
    %v5871 = vld [vmem:[#allocation9 + $0xa8] sm:$0xf]
    %v5872 = vld [vmem:[#allocation9 + $0xac] sm:$0xf]
    %v5873 = vld [vmem:[#allocation9 + $0xb0] sm:$0xf]
    %v5874 = vld [vmem:[#allocation9 + $0xb4] sm:$0xf]
    %v5875 = vld [vmem:[#allocation9 + $0xb8] sm:$0xf]
    %v5876 = vld [vmem:[#allocation9 + $0xbc] sm:$0xf]
    %v5877 = vld [vmem:[#allocation9 + $0xc0] sm:$0xf]
    %v5878 = vld [vmem:[#allocation9 + $0xc4] sm:$0xf]
    %v5879 = vld [vmem:[#allocation9 + $0xc8] sm:$0xf]
    %v5880 = vld [vmem:[#allocation9 + $0xcc] sm:$0xf]
    %v5881 = vld [vmem:[#allocation9 + $0xd0] sm:$0xf]
    %v5882 = vld [vmem:[#allocation9 + $0xd4] sm:$0xf]
    %v5883 = vld [vmem:[#allocation9 + $0xd8] sm:$0xf]
    %v5884 = vld [vmem:[#allocation9 + $0xdc] sm:$0xf]
    %v5885 = vld [vmem:[#allocation9 + $0xe0] sm:$0xf]
    %v5886 = vld [vmem:[#allocation9 + $0xe4] sm:$0xf]
    %v5887 = vld [vmem:[#allocation9 + $0xe8] sm:$0xf]
    %v5888 = vld [vmem:[#allocation9 + $0xec] sm:$0xf]
    %v5889 = vld [vmem:[#allocation9 + $0xf0] sm:$0xf]
    %v5890 = vld [vmem:[#allocation9 + $0xf4] sm:$0xf]
    %v5891 = vld [vmem:[#allocation9 + $0xf8] sm:$0xf]
    %v5892 = vld [vmem:[#allocation9 + $0xfc] sm:$0xf]
    %v5893 = vld [vmem:[#allocation9 + $0x100] sm:$0xf]
    %v5894 = vld [vmem:[#allocation9 + $0x104] sm:$0xf]
    %v5895 = vld [vmem:[#allocation9 + $0x108] sm:$0xf]
    %v5896 = vld [vmem:[#allocation9 + $0x10c] sm:$0xf]
    %v5897 = vld [vmem:[#allocation9 + $0x110] sm:$0xf]
    %v5898 = vld [vmem:[#allocation9 + $0x114] sm:$0xf]
    %v5899 = vld [vmem:[#allocation9 + $0x118] sm:$0xf]
    %v5900 = vld [vmem:[#allocation9 + $0x11c] sm:$0xf]
    %v5901 = vld [vmem:[#allocation9 + $0x120] sm:$0xf]
    %v5902 = vld [vmem:[#allocation9 + $0x124] sm:$0xf]
    %v5903 = vld [vmem:[#allocation9 + $0x128] sm:$0xf]
    %v5904 = vld [vmem:[#allocation9 + $0x12c] sm:$0xf]
    %v5905 = vld [vmem:[#allocation9 + $0x130] sm:$0xf]
    %v5906 = vld [vmem:[#allocation9 + $0x134] sm:$0xf]
    %v5907 = vld [vmem:[#allocation9 + $0x138] sm:$0xf]
    %v5908 = vld [vmem:[#allocation9 + $0x13c] sm:$0xf]
    %v5909 = vld [vmem:[#allocation9 + $0x140] sm:$0xf]
    %v5910 = vld [vmem:[#allocation9 + $0x144] sm:$0xf]
    %v5911 = vld [vmem:[#allocation9 + $0x148] sm:$0xf]
    %v5912 = vld [vmem:[#allocation9 + $0x14c] sm:$0xf]
    %v5913 = vld [vmem:[#allocation9 + $0x150] sm:$0xf]
    %v5914 = vld [vmem:[#allocation9 + $0x154] sm:$0xf]
    %v5915 = vld [vmem:[#allocation9 + $0x158] sm:$0xf]
    %v5916 = vld [vmem:[#allocation9 + $0x15c] sm:$0xf]
    %v5917 = vld [vmem:[#allocation9 + $0x160] sm:$0xf]
    %v5918 = vld [vmem:[#allocation9 + $0x164] sm:$0xf]
    %v5919 = vld [vmem:[#allocation9 + $0x168] sm:$0xf]
    %v5920 = vld [vmem:[#allocation9 + $0x16c] sm:$0xf]
    %v5921 = vld [vmem:[#allocation9 + $0x170] sm:$0xf]
    %v5922 = vld [vmem:[#allocation9 + $0x174] sm:$0xf]
    %v5923 = vld [vmem:[#allocation9 + $0x178] sm:$0xf]
    %v5924 = vld [vmem:[#allocation9 + $0x17c] sm:$0xf]
    %v5925 = vld [vmem:[#allocation9 + $0x180] sm:$0xf]
    %v5926 = vld [vmem:[#allocation9 + $0x184] sm:$0xf]
    %v5927 = vld [vmem:[#allocation9 + $0x188] sm:$0xf]
    %v5928 = vld [vmem:[#allocation9 + $0x18c] sm:$0xf]
    %v5929 = vld [vmem:[#allocation9 + $0x190] sm:$0xf]
    %v5930 = vld [vmem:[#allocation9 + $0x194] sm:$0xf]
    %v5931 = vld [vmem:[#allocation9 + $0x198] sm:$0xf]
    %v5932 = vld [vmem:[#allocation9 + $0x19c] sm:$0xf]
    %v5933 = vld [vmem:[#allocation9 + $0x1a0] sm:$0xf]
    %v5934 = vld [vmem:[#allocation9 + $0x1a4] sm:$0xf]
    %v5935 = vld [vmem:[#allocation9 + $0x1a8] sm:$0xf]
    %v5936 = vld [vmem:[#allocation9 + $0x1ac] sm:$0xf]
    %v5937 = vld [vmem:[#allocation9 + $0x1b0] sm:$0xf]
    %v5938 = vld [vmem:[#allocation9 + $0x1b4] sm:$0xf]
    %v5939 = vld [vmem:[#allocation9 + $0x1b8] sm:$0xf]
    %v5940 = vld [vmem:[#allocation9 + $0x1bc] sm:$0xf]
    %v5941 = vld [vmem:[#allocation9 + $0x1c0] sm:$0xf]
    %v5942 = vld [vmem:[#allocation9 + $0x1c4] sm:$0xf]
    %v5943 = vld [vmem:[#allocation9 + $0x1c8] sm:$0xf]
    %v5944 = vld [vmem:[#allocation9 + $0x1cc] sm:$0xf]
    %v5945 = vld [vmem:[#allocation9 + $0x1d0] sm:$0xf]
    %v5946 = vld [vmem:[#allocation9 + $0x1d4] sm:$0xf]
    %v5947 = vld [vmem:[#allocation9 + $0x1d8] sm:$0xf]
    %v5948 = vld [vmem:[#allocation9 + $0x1dc] sm:$0xf]
    %v5949 = vld [vmem:[#allocation9 + $0x1e0] sm:$0xf]
    %v5950 = vld [vmem:[#allocation9 + $0x1e4] sm:$0xf]
    %v5951 = vld [vmem:[#allocation9 + $0x1e8] sm:$0xf]
    %v5952 = vld [vmem:[#allocation9 + $0x1ec] sm:$0xf]
    %v5953 = vld [vmem:[#allocation9 + $0x1f0] sm:$0xf]
    %v5954 = vld [vmem:[#allocation9 + $0x1f4] sm:$0xf]
    %v5955 = vld [vmem:[#allocation9 + $0x1f8] sm:$0xf]
    %v5956 = vld [vmem:[#allocation9 + $0x1fc] sm:$0xf]
    %v5957 = vld [vmem:[#allocation10] sm:$0x1]
    %v5959 = vlaneseq
    %v5960 = vshrl.u32 %v5959, 7
    %v5961 = vsub.s32 0, %v5960
    %v5962 = vrot.slane %v5957, %v5961
    %v6092 = vunpack.c.l.b16 %v5829
    %v6093 = vunpack.c.l.b16 %v5830
    %v6094 = vunpack.c.l.b16 %v5831
    %v6095 = vunpack.c.l.b16 %v5832
    %v6096 = vunpack.c.l.b16 %v5833
    %v6097 = vunpack.c.l.b16 %v5834
    %v6098 = vunpack.c.l.b16 %v5835
    %v6099 = vunpack.c.l.b16 %v5836
    %v6100 = vunpack.c.l.b16 %v5837
    %v6101 = vunpack.c.l.b16 %v5838
    %v6102 = vunpack.c.l.b16 %v5839
    %v6103 = vunpack.c.l.b16 %v5840
    %v6104 = vunpack.c.l.b16 %v5841
    %v6105 = vunpack.c.l.b16 %v5842
    %v6106 = vunpack.c.l.b16 %v5843
    %v6107 = vunpack.c.l.b16 %v5844
    %v6108 = vunpack.c.l.b16 %v5845
    %v6109 = vunpack.c.l.b16 %v5846
    %v6110 = vunpack.c.l.b16 %v5847
    %v6111 = vunpack.c.l.b16 %v5848
    %v6112 = vunpack.c.l.b16 %v5849
    %v6113 = vunpack.c.l.b16 %v5850
    %v6114 = vunpack.c.l.b16 %v5851
    %v6115 = vunpack.c.l.b16 %v5852
    %v6116 = vunpack.c.l.b16 %v5853
    %v6117 = vunpack.c.l.b16 %v5854
    %v6118 = vunpack.c.l.b16 %v5855
    %v6119 = vunpack.c.l.b16 %v5856
    %v6120 = vunpack.c.l.b16 %v5857
    %v6121 = vunpack.c.l.b16 %v5858
    %v6122 = vunpack.c.l.b16 %v5859
    %v6123 = vunpack.c.l.b16 %v5860
    %v6124 = vunpack.c.l.b16 %v5861
    %v6125 = vunpack.c.l.b16 %v5862
    %v6126 = vunpack.c.l.b16 %v5863
    %v6127 = vunpack.c.l.b16 %v5864
    %v6128 = vunpack.c.l.b16 %v5865
    %v6129 = vunpack.c.l.b16 %v5866
    %v6130 = vunpack.c.l.b16 %v5867
    %v6131 = vunpack.c.l.b16 %v5868
    %v6132 = vunpack.c.l.b16 %v5869
    %v6133 = vunpack.c.l.b16 %v5870
    %v6134 = vunpack.c.l.b16 %v5871
    %v6135 = vunpack.c.l.b16 %v5872
    %v6136 = vunpack.c.l.b16 %v5873
    %v6137 = vunpack.c.l.b16 %v5874
    %v6138 = vunpack.c.l.b16 %v5875
    %v6139 = vunpack.c.l.b16 %v5876
    %v6140 = vunpack.c.l.b16 %v5877
    %v6141 = vunpack.c.l.b16 %v5878
    %v6142 = vunpack.c.l.b16 %v5879
    %v6143 = vunpack.c.l.b16 %v5880
    %v6144 = vunpack.c.l.b16 %v5881
    %v6145 = vunpack.c.l.b16 %v5882
    %v6146 = vunpack.c.l.b16 %v5883
    %v6147 = vunpack.c.l.b16 %v5884
    %v6148 = vunpack.c.l.b16 %v5885
    %v6149 = vunpack.c.l.b16 %v5886
    %v6150 = vunpack.c.l.b16 %v5887
    %v6151 = vunpack.c.l.b16 %v5888
    %v6152 = vunpack.c.l.b16 %v5889
    %v6153 = vunpack.c.l.b16 %v5890
    %v6154 = vunpack.c.l.b16 %v5891
    %v6155 = vunpack.c.l.b16 %v5892
    %v6156 = vunpack.c.l.b16 %v5893
    %v6157 = vunpack.c.l.b16 %v5894
    %v6158 = vunpack.c.l.b16 %v5895
    %v6159 = vunpack.c.l.b16 %v5896
    %v6160 = vunpack.c.l.b16 %v5897
    %v6161 = vunpack.c.l.b16 %v5898
    %v6162 = vunpack.c.l.b16 %v5899
    %v6163 = vunpack.c.l.b16 %v5900
    %v6164 = vunpack.c.l.b16 %v5901
    %v6165 = vunpack.c.l.b16 %v5902
    %v6166 = vunpack.c.l.b16 %v5903
    %v6167 = vunpack.c.l.b16 %v5904
    %v6168 = vunpack.c.l.b16 %v5905
    %v6169 = vunpack.c.l.b16 %v5906
    %v6170 = vunpack.c.l.b16 %v5907
    %v6171 = vunpack.c.l.b16 %v5908
    %v6172 = vunpack.c.l.b16 %v5909
    %v6173 = vunpack.c.l.b16 %v5910
    %v6174 = vunpack.c.l.b16 %v5911
    %v6175 = vunpack.c.l.b16 %v5912
    %v6176 = vunpack.c.l.b16 %v5913
    %v6177 = vunpack.c.l.b16 %v5914
    %v6178 = vunpack.c.l.b16 %v5915
    %v6179 = vunpack.c.l.b16 %v5916
    %v6180 = vunpack.c.l.b16 %v5917
    %v6181 = vunpack.c.l.b16 %v5918
    %v6182 = vunpack.c.l.b16 %v5919
    %v6183 = vunpack.c.l.b16 %v5920
    %v6184 = vunpack.c.l.b16 %v5921
    %v6185 = vunpack.c.l.b16 %v5922
    %v6186 = vunpack.c.l.b16 %v5923
    %v6187 = vunpack.c.l.b16 %v5924
    %v6188 = vunpack.c.l.b16 %v5925
    %v6189 = vunpack.c.l.b16 %v5926
    %v6190 = vunpack.c.l.b16 %v5927
    %v6191 = vunpack.c.l.b16 %v5928
    %v6192 = vunpack.c.l.b16 %v5929
    %v6193 = vunpack.c.l.b16 %v5930
    %v6194 = vunpack.c.l.b16 %v5931
    %v6195 = vunpack.c.l.b16 %v5932
    %v6196 = vunpack.c.l.b16 %v5933
    %v6197 = vunpack.c.l.b16 %v5934
    %v6198 = vunpack.c.l.b16 %v5935
    %v6199 = vunpack.c.l.b16 %v5936
    %v6200 = vunpack.c.l.b16 %v5937
    %v6201 = vunpack.c.l.b16 %v5938
    %v6202 = vunpack.c.l.b16 %v5939
    %v6203 = vunpack.c.l.b16 %v5940
    %v6204 = vunpack.c.l.b16 %v5941
    %v6205 = vunpack.c.l.b16 %v5942
    %v6206 = vunpack.c.l.b16 %v5943
    %v6207 = vunpack.c.l.b16 %v5944
    %v6208 = vunpack.c.l.b16 %v5945
    %v6209 = vunpack.c.l.b16 %v5946
    %v6210 = vunpack.c.l.b16 %v5947
    %v6211 = vunpack.c.l.b16 %v5948
    %v6212 = vunpack.c.l.b16 %v5949
    %v6213 = vunpack.c.l.b16 %v5950
    %v6214 = vunpack.c.l.b16 %v5951
    %v6215 = vunpack.c.l.b16 %v5952
    %v6216 = vunpack.c.l.b16 %v5953
    %v6217 = vunpack.c.l.b16 %v5954
    %v6218 = vunpack.c.l.b16 %v5955
    %v6219 = vunpack.c.l.b16 %v5956
    %v6220 = vpack.c.b16 %v6093, %v6092
    %v6221 = vpack.c.b16 %v6095, %v6094
    %v6222 = vpack.c.b16 %v6097, %v6096
    %v6223 = vpack.c.b16 %v6099, %v6098
    %v6224 = vpack.c.b16 %v6101, %v6100
    %v6225 = vpack.c.b16 %v6103, %v6102
    %v6226 = vpack.c.b16 %v6105, %v6104
    %v6227 = vpack.c.b16 %v6107, %v6106
    %v6228 = vpack.c.b16 %v6109, %v6108
    %v6229 = vpack.c.b16 %v6111, %v6110
    %v6230 = vpack.c.b16 %v6113, %v6112
    %v6231 = vpack.c.b16 %v6115, %v6114
    %v6232 = vpack.c.b16 %v6117, %v6116
    %v6233 = vpack.c.b16 %v6119, %v6118
    %v6234 = vpack.c.b16 %v6121, %v6120
    %v6235 = vpack.c.b16 %v6123, %v6122
    %v6236 = vpack.c.b16 %v6125, %v6124
    %v6237 = vpack.c.b16 %v6127, %v6126
    %v6238 = vpack.c.b16 %v6129, %v6128
    %v6239 = vpack.c.b16 %v6131, %v6130
    %v6240 = vpack.c.b16 %v6133, %v6132
    %v6241 = vpack.c.b16 %v6135, %v6134
    %v6242 = vpack.c.b16 %v6137, %v6136
    %v6243 = vpack.c.b16 %v6139, %v6138
    %v6244 = vpack.c.b16 %v6141, %v6140
    %v6245 = vpack.c.b16 %v6143, %v6142
    %v6246 = vpack.c.b16 %v6145, %v6144
    %v6247 = vpack.c.b16 %v6147, %v6146
    %v6248 = vpack.c.b16 %v6149, %v6148
    %v6249 = vpack.c.b16 %v6151, %v6150
    %v6250 = vpack.c.b16 %v6153, %v6152
    %v6251 = vpack.c.b16 %v6155, %v6154
    %v6252 = vpack.c.b16 %v6157, %v6156
    %v6253 = vpack.c.b16 %v6159, %v6158
    %v6254 = vpack.c.b16 %v6161, %v6160
    %v6255 = vpack.c.b16 %v6163, %v6162
    %v6256 = vpack.c.b16 %v6165, %v6164
    %v6257 = vpack.c.b16 %v6167, %v6166
    %v6258 = vpack.c.b16 %v6169, %v6168
    %v6259 = vpack.c.b16 %v6171, %v6170
    %v6260 = vpack.c.b16 %v6173, %v6172
    %v6261 = vpack.c.b16 %v6175, %v6174
    %v6262 = vpack.c.b16 %v6177, %v6176
    %v6263 = vpack.c.b16 %v6179, %v6178
    %v6264 = vpack.c.b16 %v6181, %v6180
    %v6265 = vpack.c.b16 %v6183, %v6182
    %v6266 = vpack.c.b16 %v6185, %v6184
    %v6267 = vpack.c.b16 %v6187, %v6186
    %v6268 = vpack.c.b16 %v6189, %v6188
    %v6269 = vpack.c.b16 %v6191, %v6190
    %v6270 = vpack.c.b16 %v6193, %v6192
    %v6271 = vpack.c.b16 %v6195, %v6194
    %v6272 = vpack.c.b16 %v6197, %v6196
    %v6273 = vpack.c.b16 %v6199, %v6198
    %v6274 = vpack.c.b16 %v6201, %v6200
    %v6275 = vpack.c.b16 %v6203, %v6202
    %v6276 = vpack.c.b16 %v6205, %v6204
    %v6277 = vpack.c.b16 %v6207, %v6206
    %v6278 = vpack.c.b16 %v6209, %v6208
    %v6279 = vpack.c.b16 %v6211, %v6210
    %v6280 = vpack.c.b16 %v6213, %v6212
    %v6281 = vpack.c.b16 %v6215, %v6214
    %v6282 = vpack.c.b16 %v6217, %v6216
    %v6283 = vpack.c.b16 %v6219, %v6218
    %6348 = vmatprep.subr.bf16.mxu0 0
    %6349 = vmatpush1.bf16.msra.mxu0 %v6220
    %6350 = vmatprep.subr.bf16.mxu0 0
    %6351 = vmatpush1.bf16.msra.mxu0 %v6221
    %6352 = vmatprep.subr.bf16.mxu0 0
    %6353 = vmatpush1.bf16.msra.mxu0 %v6222
    %6354 = vmatprep.subr.bf16.mxu0 0
    %6355 = vmatpush1.bf16.msra.mxu0 %v6223
    %6356 = vmatprep.subr.bf16.mxu0 0
    %6357 = vmatpush1.bf16.msra.mxu0 %v6224
    %6358 = vmatprep.subr.bf16.mxu0 0
    %6359 = vmatpush1.bf16.msra.mxu0 %v6225
    %6360 = vmatprep.subr.bf16.mxu0 0
    %6361 = vmatpush1.bf16.msra.mxu0 %v6226
    %6362 = vmatprep.subr.bf16.mxu0 0
    %6363 = vmatpush1.bf16.msra.mxu0 %v6227
    %6364 = vmatprep.subr.bf16.mxu0 0
    %6365 = vmatpush1.bf16.msra.mxu0 %v6228
    %6366 = vmatprep.subr.bf16.mxu0 0
    %6367 = vmatpush1.bf16.msra.mxu0 %v6229
    %6368 = vmatprep.subr.bf16.mxu0 0
    %6369 = vmatpush1.bf16.msra.mxu0 %v6230
    %6370 = vmatprep.subr.bf16.mxu0 0
    %6371 = vmatpush1.bf16.msra.mxu0 %v6231
    %6372 = vmatprep.subr.bf16.mxu0 0
    %6373 = vmatpush1.bf16.msra.mxu0 %v6232
    %6374 = vmatprep.subr.bf16.mxu0 0
    %6375 = vmatpush1.bf16.msra.mxu0 %v6233
    %6376 = vmatprep.subr.bf16.mxu0 0
    %6377 = vmatpush1.bf16.msra.mxu0 %v6234
    %6378 = vmatprep.subr.bf16.mxu0 0
    %6379 = vmatpush1.bf16.msra.mxu0 %v6235
    %6380 = vmatprep.mubr.bf16.mxu0 %v5822
    %6381 = vmatmul.mubr.bf16.gmra.mrb[0].mxu0 %v5821
    %v6382 = vpop.f32.mrb[0].mxu0
    %v6383 = vadd.f32 %v5962, %v6382
    %v6384 = vpop.f32.mrb[0].mxu0
    %v6385 = vpop.f32.mrb[0].mxu0
    %v6386 = vpop.f32.mrb[0].mxu0
    %6387 = vdwg.mxu0
    %6388 = vmatprep.subr.bf16.mxu0 0
    %6389 = vmatpush1.bf16.msra.mxu0 %v6236
    %6390 = vmatprep.subr.bf16.mxu0 0
    %6391 = vmatpush1.bf16.msra.mxu0 %v6237
    %6392 = vmatprep.subr.bf16.mxu0 0
    %6393 = vmatpush1.bf16.msra.mxu0 %v6238
    %6394 = vmatprep.subr.bf16.mxu0 0
    %6395 = vmatpush1.bf16.msra.mxu0 %v6239
    %6396 = vmatprep.subr.bf16.mxu0 0
    %6397 = vmatpush1.bf16.msra.mxu0 %v6240
    %6398 = vmatprep.subr.bf16.mxu0 0
    %6399 = vmatpush1.bf16.msra.mxu0 %v6241
    %6400 = vmatprep.subr.bf16.mxu0 0
    %6401 = vmatpush1.bf16.msra.mxu0 %v6242
    %6402 = vmatprep.subr.bf16.mxu0 0
    %6403 = vmatpush1.bf16.msra.mxu0 %v6243
    %6404 = vmatprep.subr.bf16.mxu0 0
    %6405 = vmatpush1.bf16.msra.mxu0 %v6244
    %6406 = vmatprep.subr.bf16.mxu0 0
    %6407 = vmatpush1.bf16.msra.mxu0 %v6245
    %6408 = vmatprep.subr.bf16.mxu0 0
    %6409 = vmatpush1.bf16.msra.mxu0 %v6246
    %6410 = vmatprep.subr.bf16.mxu0 0
    %6411 = vmatpush1.bf16.msra.mxu0 %v6247
    %6412 = vmatprep.subr.bf16.mxu0 0
    %6413 = vmatpush1.bf16.msra.mxu0 %v6248
    %6414 = vmatprep.subr.bf16.mxu0 0
    %6415 = vmatpush1.bf16.msra.mxu0 %v6249
    %6416 = vmatprep.subr.bf16.mxu0 0
    %6417 = vmatpush1.bf16.msra.mxu0 %v6250
    %6418 = vmatprep.subr.bf16.mxu0 0
    %6419 = vmatpush1.bf16.msra.mxu0 %v6251
    %6420 = vmatprep.mubr.bf16.mxu0 %v5824
    %6421 = vmatmul.mubr.bf16.gmra.mrb[0].mxu0 %v5823
    %v6422 = vpop.f32.mrb[0].mxu0
    %v6423 = vadd.f32 %v6383, %v6422
    %v6424 = vpop.f32.mrb[0].mxu0
    %v6425 = vpop.f32.mrb[0].mxu0
    %v6426 = vpop.f32.mrb[0].mxu0
    %6427 = vdwg.mxu0
    %6428 = vmatprep.subr.bf16.mxu0 0
    %6429 = vmatpush1.bf16.msra.mxu0 %v6252
    %6430 = vmatprep.subr.bf16.mxu0 0
    %6431 = vmatpush1.bf16.msra.mxu0 %v6253
    %6432 = vmatprep.subr.bf16.mxu0 0
    %6433 = vmatpush1.bf16.msra.mxu0 %v6254
    %6434 = vmatprep.subr.bf16.mxu0 0
    %6435 = vmatpush1.bf16.msra.mxu0 %v6255
    %6436 = vmatprep.subr.bf16.mxu0 0
    %6437 = vmatpush1.bf16.msra.mxu0 %v6256
    %6438 = vmatprep.subr.bf16.mxu0 0
    %6439 = vmatpush1.bf16.msra.mxu0 %v6257
    %6440 = vmatprep.subr.bf16.mxu0 0
    %6441 = vmatpush1.bf16.msra.mxu0 %v6258
    %6442 = vmatprep.subr.bf16.mxu0 0
    %6443 = vmatpush1.bf16.msra.mxu0 %v6259
    %6444 = vmatprep.subr.bf16.mxu0 0
    %6445 = vmatpush1.bf16.msra.mxu0 %v6260
    %6446 = vmatprep.subr.bf16.mxu0 0
    %6447 = vmatpush1.bf16.msra.mxu0 %v6261
    %6448 = vmatprep.subr.bf16.mxu0 0
    %6449 = vmatpush1.bf16.msra.mxu0 %v6262
    %6450 = vmatprep.subr.bf16.mxu0 0
    %6451 = vmatpush1.bf16.msra.mxu0 %v6263
    %6452 = vmatprep.subr.bf16.mxu0 0
    %6453 = vmatpush1.bf16.msra.mxu0 %v6264
    %6454 = vmatprep.subr.bf16.mxu0 0
    %6455 = vmatpush1.bf16.msra.mxu0 %v6265
    %6456 = vmatprep.subr.bf16.mxu0 0
    %6457 = vmatpush1.bf16.msra.mxu0 %v6266
    %6458 = vmatprep.subr.bf16.mxu0 0
    %6459 = vmatpush1.bf16.msra.mxu0 %v6267
    %6460 = vmatprep.mubr.bf16.mxu0 %v5826
    %6461 = vmatmul.mubr.bf16.gmra.mrb[0].mxu0 %v5825
    %v6462 = vpop.f32.mrb[0].mxu0
    %v6463 = vadd.f32 %v6423, %v6462
    %v6464 = vpop.f32.mrb[0].mxu0
    %v6465 = vpop.f32.mrb[0].mxu0
    %v6466 = vpop.f32.mrb[0].mxu0
    %6467 = vdwg.mxu0
    %6468 = vmatprep.subr.bf16.mxu0 0
    %6469 = vmatpush1.bf16.msra.mxu0 %v6268
    %6470 = vmatprep.subr.bf16.mxu0 0
    %6471 = vmatpush1.bf16.msra.mxu0 %v6269
    %6472 = vmatprep.subr.bf16.mxu0 0
    %6473 = vmatpush1.bf16.msra.mxu0 %v6270
    %6474 = vmatprep.subr.bf16.mxu0 0
    %6475 = vmatpush1.bf16.msra.mxu0 %v6271
    %6476 = vmatprep.subr.bf16.mxu0 0
    %6477 = vmatpush1.bf16.msra.mxu0 %v6272
    %6478 = vmatprep.subr.bf16.mxu0 0
    %6479 = vmatpush1.bf16.msra.mxu0 %v6273
    %6480 = vmatprep.subr.bf16.mxu0 0
    %6481 = vmatpush1.bf16.msra.mxu0 %v6274
    %6482 = vmatprep.subr.bf16.mxu0 0
    %6483 = vmatpush1.bf16.msra.mxu0 %v6275
    %6484 = vmatprep.subr.bf16.mxu0 0
    %6485 = vmatpush1.bf16.msra.mxu0 %v6276
    %6486 = vmatprep.subr.bf16.mxu0 0
    %6487 = vmatpush1.bf16.msra.mxu0 %v6277
    %6488 = vmatprep.subr.bf16.mxu0 0
    %6489 = vmatpush1.bf16.msra.mxu0 %v6278
    %6490 = vmatprep.subr.bf16.mxu0 0
    %6491 = vmatpush1.bf16.msra.mxu0 %v6279
    %6492 = vmatprep.subr.bf16.mxu0 0
    %6493 = vmatpush1.bf16.msra.mxu0 %v6280
    %6494 = vmatprep.subr.bf16.mxu0 0
    %6495 = vmatpush1.bf16.msra.mxu0 %v6281
    %6496 = vmatprep.subr.bf16.mxu0 0
    %6497 = vmatpush1.bf16.msra.mxu0 %v6282
    %6498 = vmatprep.subr.bf16.mxu0 0
    %6499 = vmatpush1.bf16.msra.mxu0 %v6283
    %6500 = vmatprep.mubr.bf16.mxu0 %v5828
    %6501 = vmatmul.mubr.bf16.gmra.mrb[0].mxu0 %v5827
    %v6502 = vpop.f32.mrb[0].mxu0
    %v6503 = vadd.f32 %v6463, %v6502
    %v6504 = vpop.f32.mrb[0].mxu0
    %v6505 = vpop.f32.mrb[0].mxu0
    %v6506 = vpop.f32.mrb[0].mxu0
    %6507 = vdwg.mxu0
    %v6508 = vmax.f32 %v6503, 0.0
    %v6509 = vpack.c.bf16 %v6508, %v6508
    %v6510 = vld [vmem:[#allocation12] sm:$0xf]
    %v6511 = vld [vmem:[#allocation12 + $0x4] sm:$0xf]
    %v6512 = vld [vmem:[#allocation12 + $0x8] sm:$0xf]
    %v6513 = vld [vmem:[#allocation12 + $0xc] sm:$0xf]
    %v6514 = vld [vmem:[#allocation12 + $0x10] sm:$0xf]
    %v6515 = vld [vmem:[#allocation12 + $0x14] sm:$0xf]
    %v6516 = vld [vmem:[#allocation12 + $0x18] sm:$0xf]
    %v6517 = vld [vmem:[#allocation12 + $0x1c] sm:$0xf]
    %v6518 = vld [vmem:[#allocation12 + $0x20] sm:$0xf]
    %v6519 = vld [vmem:[#allocation12 + $0x24] sm:$0xf]
    %v6520 = vld [vmem:[#allocation12 + $0x28] sm:$0xf]
    %v6521 = vld [vmem:[#allocation12 + $0x2c] sm:$0xf]
    %v6522 = vld [vmem:[#allocation12 + $0x30] sm:$0xf]
    %v6523 = vld [vmem:[#allocation12 + $0x34] sm:$0xf]
    %v6524 = vld [vmem:[#allocation12 + $0x38] sm:$0xf]
    %v6525 = vld [vmem:[#allocation12 + $0x3c] sm:$0xf]
    %v6526 = vld [vmem:[#allocation13] sm:$0x1]
    %v6528 = vlaneseq
    %v6529 = vshrl.u32 %v6528, 7
    %v6530 = vsub.s32 0, %v6529
    %v6531 = vrot.slane %v6526, %v6530
    %v6549 = vunpack.c.l.b16 %v6510
    %v6550 = vunpack.c.l.b16 %v6511
    %v6551 = vunpack.c.l.b16 %v6512
    %v6552 = vunpack.c.l.b16 %v6513
    %v6553 = vunpack.c.l.b16 %v6514
    %v6554 = vunpack.c.l.b16 %v6515
    %v6555 = vunpack.c.l.b16 %v6516
    %v6556 = vunpack.c.l.b16 %v6517
    %v6557 = vunpack.c.l.b16 %v6518
    %v6558 = vunpack.c.l.b16 %v6519
    %v6559 = vunpack.c.l.b16 %v6520
    %v6560 = vunpack.c.l.b16 %v6521
    %v6561 = vunpack.c.l.b16 %v6522
    %v6562 = vunpack.c.l.b16 %v6523
    %v6563 = vunpack.c.l.b16 %v6524
    %v6564 = vunpack.c.l.b16 %v6525
    %v6565 = vpack.c.b16 %v6550, %v6549
    %v6566 = vpack.c.b16 %v6552, %v6551
    %v6567 = vpack.c.b16 %v6554, %v6553
    %v6568 = vpack.c.b16 %v6556, %v6555
    %v6569 = vpack.c.b16 %v6558, %v6557
    %v6570 = vpack.c.b16 %v6560, %v6559
    %v6571 = vpack.c.b16 %v6562, %v6561
    %v6572 = vpack.c.b16 %v6564, %v6563
    %6581 = vmatprep.subr.bf16.mxu0 0
    %6582 = vmatpush1.bf16.msra.mxu0 %v6565
    %6583 = vmatprep.subr.bf16.mxu0 0
    %6584 = vmatpush1.bf16.msra.mxu0 %v6566
    %6585 = vmatprep.subr.bf16.mxu0 0
    %6586 = vmatpush1.bf16.msra.mxu0 %v6567
    %6587 = vmatprep.subr.bf16.mxu0 0
    %6588 = vmatpush1.bf16.msra.mxu0 %v6568
    %6589 = vmatprep.subr.bf16.mxu0 0
    %6590 = vmatpush1.bf16.msra.mxu0 %v6569
    %6591 = vmatprep.subr.bf16.mxu0 0
    %6592 = vmatpush1.bf16.msra.mxu0 %v6570
    %6593 = vmatprep.subr.bf16.mxu0 0
    %6594 = vmatpush1.bf16.msra.mxu0 %v6571
    %6595 = vmatprep.subr.bf16.mxu0 0
    %6596 = vmatpush1.bf16.msra.mxu0 %v6572
    %6597 = vmatprep.subr.bf16.mxu0 0
    %6598 = vmatpush1.bf16.msra.mxu0 0
    %6599 = vmatprep.subr.bf16.mxu0 0
    %6600 = vmatpush1.bf16.msra.mxu0 0
    %6601 = vmatprep.subr.bf16.mxu0 0
    %6602 = vmatpush1.bf16.msra.mxu0 0
    %6603 = vmatprep.subr.bf16.mxu0 0
    %6604 = vmatpush1.bf16.msra.mxu0 0
    %6605 = vmatprep.subr.bf16.mxu0 0
    %6606 = vmatpush1.bf16.msra.mxu0 0
    %6607 = vmatprep.subr.bf16.mxu0 0
    %6608 = vmatpush1.bf16.msra.mxu0 0
    %6609 = vmatprep.subr.bf16.mxu0 0
    %6610 = vmatpush1.bf16.msra.mxu0 0
    %6611 = vmatprep.subr.bf16.mxu0 0
    %6612 = vmatpush1.bf16.msra.mxu0 0
    %6613 = vmatprep.mubr.bf16.mxu0 0
    %6614 = vmatmul.mubr.bf16.gmra.mrb[0].mxu0 %v6509
    %v6615 = vpop.f32.mrb[0].mxu0
    %v6616 = vadd.f32 %v6531, %v6615
    %v6617 = vpop.f32.mrb[0].mxu0
    %v6618 = vpop.f32.mrb[0].mxu0
    %v6619 = vpop.f32.mrb[0].mxu0
    %6620 = vdwg.mxu0
    %v6621 = vmax.f32 %v6616, 0.0
    %6622 = vst [vmem:[%s9] sm:$0xff] %v6621
    // Predicated region
    $region70: #{cnn_net1_forward.1} parent=1 // pred_check
      _
    $region71: #{cnn_net1_forward.1} parent=1 // pred_check_branch
      %6624 = sbr.rel (0) target = $region73
    $region72: #{cnn_net1_forward.1} parent=1 // pred_region
      _
    $region73: #{cnn_net1_forward.1} parent=1 // pred_fallthru
      _
    // Predicated region
    $region74: #{cnn_net1_forward.1} parent=1 // pred_check
      _
    $region75: #{cnn_net1_forward.1} parent=1 // pred_check_branch
      %6626 = sbr.rel (0) target = $region77
    $region76: #{cnn_net1_forward.1} parent=1 // pred_region
      _
    $region77: #{cnn_net1_forward.1} parent=1 // pred_fallthru
      _
    %6627 = vsyncpa [#allocation3], 1
    %6628 = vsyncpa [#allocation5], 1
    %6629 = vsyncpa [#allocation8], 1
    %6630 = vsyncpa [#allocation11], 1
    %6631 = vsyncpa [#allocation14], 1

</llo_original>
